<compile_context>
chip_gen: v6e
topology: v6e:2x2x1
jax: 0.10.0
libtpu: 0.0.40
codegen_flags: <defaults>
</compile_context>

<pallas_src>
import functools

import jax
import jax.numpy as jnp
from jax.experimental import pallas as pl
from jax.experimental.pallas import tpu as pltpu


def _round_up(n, m):
    return ((n + m - 1) // m) * m


def _device_kind():
    try:
        return jax.devices()[0].device_kind.lower()
    except Exception:
        return ""


def _num_tensorcores():
    # v7x has 2 TensorCores per chip; v5e / v6e have 1.
    return 2 if "v7" in _device_kind() else 1


def _has_bf16_eup():
    # bf16 EUP/VPU exists on v6e / v7x; default to the safe f32 path elsewhere.
    kind = _device_kind()
    return ("v6" in kind) or ("v7" in kind)


def make_mlp_kernel(use_bf16_sigmoid):
    def mlp_kernel(x_ref, w1_ref, b1_ref, w2_ref, b2_ref, o_ref):
        # In-kernel f32 -> bf16 cast of the activation tile (VPU has slack;
        # this avoids materializing a padded bf16 copy of x in HBM).
        x = x_ref[...].astype(jnp.bfloat16)
        # linear1: (tile_b, D_in)[bf16] @ (D_in, H_p)[bf16] -> f32 acc (MXU).
        h = jnp.dot(x, w1_ref[...], preferred_element_type=jnp.float32)
        z = h + b1_ref[...]
        if use_bf16_sigmoid:
            # v6e/v7x: bf16 exp on the EUP + approximate reciprocal (EUP vrcp),
            # keeping the divide off the VPU.
            e = jnp.exp(-z.astype(jnp.bfloat16))
            s = pl.reciprocal(e.astype(jnp.float32) + 1.0, approx=True)
        else:
            # v5e: no bf16 EUP; do the logistic in f32.
            s = jax.nn.sigmoid(z)
        # linear2: (tile_b, H_p)[bf16] @ (H_p, D_out_p)[bf16] -> f32 acc (MXU).
        y = jnp.dot(s.astype(w2_ref.dtype), w2_ref[...],
                    preferred_element_type=jnp.float32)
        o_ref[...] = (y + b2_ref[...]).astype(o_ref.dtype)

    return mlp_kernel


def prepare_params(w1, b1, w2, b2):
    """One-time parameter prep: pad feature dims to 128 lanes, cast to bf16.

    w1: (D_in, H), b1: (1, H), w2: (H, D_out), b2: (1, D_out), all f32.
    Zero-padded hidden columns yield sigmoid(0)=0.5 but multiply the zero rows
    of w2_p, so the forward output is unchanged.
    """
    D_in, H = w1.shape
    D_out = w2.shape[1]
    H_p = _round_up(H, 128)
    D_out_p = _round_up(D_out, 128)

    w1_p = jnp.zeros((D_in, H_p), jnp.bfloat16).at[:, :H].set(
        w1.astype(jnp.bfloat16))
    b1_p = jnp.zeros((1, H_p), jnp.float32).at[:, :H].set(b1.astype(jnp.float32))
    w2_p = jnp.zeros((H_p, D_out_p), jnp.bfloat16).at[:H, :D_out].set(
        w2.astype(jnp.bfloat16))
    b2_p = jnp.zeros((1, D_out_p), jnp.float32).at[:, :D_out].set(
        b2.astype(jnp.float32))
    return (w1_p, b1_p, w2_p, b2_p), D_out


def net_forward(x, params, d_out, *, tile_b=None, use_bf16_sigmoid=None):
    """x: (B, D_in) f32 (unpadded); params from prepare_params."""
    w1_p, b1_p, w2_p, b2_p = params
    B, D_in = x.shape
    H_p = w1_p.shape[1]
    D_out_p = w2_p.shape[1]

    if use_bf16_sigmoid is None:
        use_bf16_sigmoid = _has_bf16_eup()

    # Chip-aware batch tiling.
    num_tc = _num_tensorcores()
    B8 = _round_up(B, 8)
    if tile_b is None:
        if num_tc >= 2 and B8 >= 16:
            # v7x: >=2 grid steps so both TensorCores get work, each as big
            # as possible.
            tile_b = _round_up(pl.cdiv(B8, num_tc), 8)
        else:
            # v5e/v6e (single TC): one big step amortizes per-step overhead.
            tile_b = B8
        tile_b = min(tile_b, 2048)  # keep double-buffered VMEM footprint small
    tile_b = _round_up(max(int(tile_b), 8), 8)

    B_pad = _round_up(B, tile_b)
    x_in = x.astype(jnp.float32)
    if B_pad != B:
        x_in = jnp.zeros((B_pad, D_in), jnp.float32).at[:B].set(x_in)

    grid = (B_pad // tile_b,)
    out_p = pl.pallas_call(
        make_mlp_kernel(use_bf16_sigmoid),
        out_shape=jax.ShapeDtypeStruct((B_pad, D_out_p), jnp.float32),
        grid=grid,
        in_specs=[
            # x: tiled over the batch grid, feature dim = full array dim (784).
            pl.BlockSpec((tile_b, D_in), lambda i: (i, 0)),
            # weights/biases: resident across all batch tiles (DMA'd once).
            pl.BlockSpec((D_in, H_p), lambda i: (0, 0)),
            pl.BlockSpec((1, H_p), lambda i: (0, 0)),
            pl.BlockSpec((H_p, D_out_p), lambda i: (0, 0)),
            pl.BlockSpec((1, D_out_p), lambda i: (0, 0)),
        ],
        out_specs=pl.BlockSpec((tile_b, D_out_p), lambda i: (i, 0)),
        compiler_params=pltpu.CompilerParams(
            # Batch tiles are independent -> shard across v7x's 2 TensorCores.
            dimension_semantics=("parallel",),
        ),
    )(x_in, w1_p, b1_p, w2_p, b2_p)

    # Drop batch / output-feature padding.
    return out_p[:B, :d_out]


def init_linear_params(key, fan_in, fan_out):
    # PyTorch nn.Linear default init: U(-1/sqrt(fan_in), +1/sqrt(fan_in)).
    kw, kb = jax.random.split(key)
    bound = 1.0 / jnp.sqrt(float(fan_in))
    # Stored as (fan_in, fan_out) so the kernel does x @ W directly (== x @ W_pt.T).
    w = jax.random.uniform(kw, (fan_in, fan_out), jnp.float32, -bound, bound)
    b = jax.random.uniform(kb, (1, fan_out), jnp.float32, -bound, bound)
    return w, b


if __name__ == "__main__":
    # MNIST-like shapes implied by the module: 784 -> H -> 10, with enough
    # batch to exercise the batch grid (2 parallel steps on v7x, 1 big step
    # on v5e/v6e).
    B, D_in, H, D_out = 512, 784, 128, 10

    key = jax.random.PRNGKey(0)
    kx, k1, k2 = jax.random.split(key, 3)

    x = jax.random.normal(kx, (B, D_in), jnp.float32)
    w1, b1 = init_linear_params(k1, D_in, H)
    w2, b2 = init_linear_params(k2, H, D_out)

    # One-time parameter prep (pad + bf16 cast hoisted out of the forward).
    params, d_out = prepare_params(w1, b1, w2, b2)

    out = net_forward(x, params, d_out)
    jax.block_until_ready(out)

    assert out.shape == (B, D_out)

    # Check vs a bf16-matmul-matched pure-JAX reference (same casts as the
    # kernel; tolerance covers the bf16-exp sigmoid path on v6e/v7x).
    xb, w1b, w2b = (a.astype(jnp.bfloat16) for a in (x, w1, w2))
    h_ref = jax.nn.sigmoid(
        jnp.dot(xb, w1b, preferred_element_type=jnp.float32) + b1)
    ref_bf16 = jnp.dot(h_ref.astype(jnp.bfloat16), w2b,
                       preferred_element_type=jnp.float32) + b2
    assert jnp.allclose(out, ref_bf16, atol=2e-2, rtol=2e-2)

    # Loose sanity check vs the full-f32 PyTorch-convention math.
    ref_f32 = jax.nn.sigmoid(x @ w1 + b1) @ w2 + b2
    assert jnp.allclose(out, ref_f32, atol=5e-2, rtol=5e-2)

    print("KERNEL_OK")
</pallas_src>

<mosaic_0001>
module attributes {stable_mosaic.version = 11 : i64} {
  func.func @mlp_kernel(%arg0: i32, %arg1: memref<512x784xf32, #tpu.memory_space<vmem>>, %arg2: memref<784x128xbf16, #tpu.memory_space<vmem>>, %arg3: memref<1x128xf32, #tpu.memory_space<vmem>>, %arg4: memref<128x128xbf16, #tpu.memory_space<vmem>>, %arg5: memref<1x128xf32, #tpu.memory_space<vmem>>, %arg6: memref<512x128xf32, #tpu.memory_space<vmem>>) attributes {dimension_semantics = [#tpu.dimension_semantics<parallel>], iteration_bounds = array<i64: 1>, scalar_prefetch = 0 : i64, scratch_operands = 0 : i64, tpu.core_type = #tpu.core_type<tc>, window_params = [{transform_indices = @transform_0, window_bounds = array<i64: 512, 784>}, {pipeline_mode = #tpu.pipeline_mode<synchronous>, transform_indices = @transform_1, window_bounds = array<i64: 784, 128>}, {pipeline_mode = #tpu.pipeline_mode<synchronous>, transform_indices = @transform_2, window_bounds = array<i64: 1, 128>}, {pipeline_mode = #tpu.pipeline_mode<synchronous>, transform_indices = @transform_3, window_bounds = array<i64: 128, 128>}, {pipeline_mode = #tpu.pipeline_mode<synchronous>, transform_indices = @transform_4, window_bounds = array<i64: 1, 128>}, {transform_indices = @transform_5, window_bounds = array<i64: 512, 128>}]} {
    %c0 = arith.constant 0 : index
    %c0_0 = arith.constant 0 : index
    %0 = vector.load %arg1[%c0, %c0_0] : memref<512x784xf32, #tpu.memory_space<vmem>>, vector<512x784xf32>
    %1 = arith.truncf %0 : vector<512x784xf32> to vector<512x784xbf16>
    %c0_1 = arith.constant 0 : index
    %c0_2 = arith.constant 0 : index
    %2 = vector.load %arg2[%c0_1, %c0_2] : memref<784x128xbf16, #tpu.memory_space<vmem>>, vector<784x128xbf16>
    %cst = arith.constant dense<0.000000e+00> : vector<512x128xf32>
    %3 = tpu.matmul %1, %2, %cst {dimension_numbers = #tpu.dot_dimension_numbers<[1], [0], [0], [1], [0, 0, 1, 1], [], []>} : vector<512x784xbf16>, vector<784x128xbf16>, vector<512x128xf32> -> vector<512x128xf32>
    %c0_3 = arith.constant 0 : index
    %c0_4 = arith.constant 0 : index
    %4 = vector.load %arg3[%c0_3, %c0_4] : memref<1x128xf32, #tpu.memory_space<vmem>>, vector<1x128xf32>
    %5 = vector.broadcast %4 : vector<1x128xf32> to vector<512x128xf32>
    %6 = arith.addf %3, %5 : vector<512x128xf32>
    %7 = arith.negf %6 : vector<512x128xf32>
    %8 = math.exp %7 : vector<512x128xf32>
    %cst_5 = arith.constant 1.000000e+00 : f32
    %9 = vector.broadcast %cst_5 : f32 to vector<512x128xf32>
    %10 = arith.addf %9, %8 : vector<512x128xf32>
    %11 = arith.divf %9, %10 : vector<512x128xf32>
    %12 = arith.truncf %11 : vector<512x128xf32> to vector<512x128xbf16>
    %c0_6 = arith.constant 0 : index
    %c0_7 = arith.constant 0 : index
    %13 = vector.load %arg4[%c0_6, %c0_7] : memref<128x128xbf16, #tpu.memory_space<vmem>>, vector<128x128xbf16>
    %cst_8 = arith.constant dense<0.000000e+00> : vector<512x128xf32>
    %14 = tpu.matmul %12, %13, %cst_8 {dimension_numbers = #tpu.dot_dimension_numbers<[1], [0], [0], [1], [0, 0, 1, 1], [], []>} : vector<512x128xbf16>, vector<128x128xbf16>, vector<512x128xf32> -> vector<512x128xf32>
    %c0_9 = arith.constant 0 : index
    %c0_10 = arith.constant 0 : index
    %15 = vector.load %arg5[%c0_9, %c0_10] : memref<1x128xf32, #tpu.memory_space<vmem>>, vector<1x128xf32>
    %16 = vector.broadcast %15 : vector<1x128xf32> to vector<512x128xf32>
    %17 = arith.addf %14, %16 : vector<512x128xf32>
    %c0_11 = arith.constant 0 : index
    %c0_12 = arith.constant 0 : index
    %18 = vector.load %arg6[%c0_11, %c0_12] : memref<512x128xf32, #tpu.memory_space<vmem>>, vector<512x128xf32>
    tpu.vector_store %arg6[%c0_11, %c0_12], %17 {strides = array<i32>} : memref<512x128xf32, #tpu.memory_space<vmem>>, vector<512x128xf32>,
    return
  }
  func.func @transform_0(%arg0: i32) -> (i32, i32) {
    %c0_i32 = arith.constant 0 : i32
    %c0_i32_0 = arith.constant 0 : i32
    return %arg0, %c0_i32 : i32, i32
  }
  func.func @transform_1(%arg0: i32) -> (i32, i32) {
    %c0_i32 = arith.constant 0 : i32
    %c0_i32_0 = arith.constant 0 : i32
    %c0_i32_1 = arith.constant 0 : i32
    return %c0_i32, %c0_i32_0 : i32, i32
  }
  func.func @transform_2(%arg0: i32) -> (i32, i32) {
    %c0_i32 = arith.constant 0 : i32
    %c0_i32_0 = arith.constant 0 : i32
    %c0_i32_1 = arith.constant 0 : i32
    return %c0_i32, %c0_i32_0 : i32, i32
  }
  func.func @transform_3(%arg0: i32) -> (i32, i32) {
    %c0_i32 = arith.constant 0 : i32
    %c0_i32_0 = arith.constant 0 : i32
    %c0_i32_1 = arith.constant 0 : i32
    return %c0_i32, %c0_i32_0 : i32, i32
  }
  func.func @transform_4(%arg0: i32) -> (i32, i32) {
    %c0_i32 = arith.constant 0 : i32
    %c0_i32_0 = arith.constant 0 : i32
    %c0_i32_1 = arith.constant 0 : i32
    return %c0_i32, %c0_i32_0 : i32, i32
  }
  func.func @transform_5(%arg0: i32) -> (i32, i32) {
    %c0_i32 = arith.constant 0 : i32
    %c0_i32_0 = arith.constant 0 : i32
    return %arg0, %c0_i32 : i32, i32
  }
}

</mosaic_0001>

<llo_original>
// kernel: tpu_custom_call.1
$region0: #{tpu_custom_call.1}
  #allocation0 [shape = 'u32[]', space=smem, size = 0x4, offset = 0x4, fixed_abs, tag = 'smem constant byte address 0x4 - core index']
  #allocation1 [shape = 'u32[144,128]{1,0:T(1,128)}', space=vmem, size = 0x12000, scoped, tag = 'internal scratch']
  %s0 = inlined_call_operand.vmem [shape: f32[512,784], index: 0, kind: input, shape index: {}]
  %s1 = inlined_call_operand.vmem [shape: bf16[784,128], index: 1, kind: input, shape index: {}]
  %s2 = inlined_call_operand.vmem [shape: f32[1,128], index: 2, kind: input, shape index: {}]
  %s3 = inlined_call_operand.vmem [shape: bf16[128,128], index: 3, kind: input, shape index: {}]
  %s4 = inlined_call_operand.vmem [shape: f32[1,128], index: 4, kind: input, shape index: {}]
  %s5 = inlined_call_operand.hbm [shape: f32[512,128], index: 5, kind: output, shape index: {}]
  %s6 = sld [smem:[#allocation0]]
  $region30: #{tpu_custom_call.1} parent=0
    _
  %s8 = ssub.s32 1, %s6
  %s9 = scalar_select 0, %s8, %s6
  $region1: #{tpu_custom_call.1} parent=0
    #allocation2 [shape = 'u8[262144]{0}', space=vmem, size = 0x40000, scoped, tag = 'output window, operand 0, single buffered']
    #allocation3 [shape = 's32[1]{0}', space=sflag, size = 0x4, scoped, tag = 'scoped memory for tpu_custom_call.1']
    %10 = vsyncpa [#allocation3], 0
    // Predicated region
    $region2: #{tpu_custom_call.1} parent=1 // pred_check
      _
    $region3: #{tpu_custom_call.1} parent=1 // pred_check_branch
      %12 = sbr.rel (0) target = $region5
    $region4: #{tpu_custom_call.1} parent=1 // pred_region
      _
    $region5: #{tpu_custom_call.1} parent=1 // pred_fallthru
      _
    // Predicated region
    $region6: #{tpu_custom_call.1} parent=1 // pred_check
      _
    $region7: #{tpu_custom_call.1} parent=1 // pred_check_branch
      %14 = sbr.rel (0) target = $region9
    $region8: #{tpu_custom_call.1} parent=1 // pred_region
      _
    $region9: #{tpu_custom_call.1} parent=1 // pred_fallthru
      _
    // Predicated region
    $region10: #{tpu_custom_call.1} parent=1 // pred_check
      _
    $region11: #{tpu_custom_call.1} parent=1 // pred_check_branch
      %16 = sbr.rel (0) target = $region13
    $region12: #{tpu_custom_call.1} parent=1 // pred_region
      _
    $region13: #{tpu_custom_call.1} parent=1 // pred_fallthru
      _
    // Predicated region
    $region14: #{tpu_custom_call.1} parent=1 // pred_check
      _
    $region15: #{tpu_custom_call.1} parent=1 // pred_check_branch
      %18 = sbr.rel (0) target = $region17
    $region16: #{tpu_custom_call.1} parent=1 // pred_region
      _
    $region17: #{tpu_custom_call.1} parent=1 // pred_fallthru
      _
    // Predicated region
    $region18: #{tpu_custom_call.1} parent=1 // pred_check
      _
    $region19: #{tpu_custom_call.1} parent=1 // pred_check_branch
      %20 = sbr.rel (0) target = $region21
    $region20: #{tpu_custom_call.1} parent=1 // pred_region
      _
    $region21: #{tpu_custom_call.1} parent=1 // pred_fallthru
      _
    %v22 = vld [vmem:[%s0] sm:$0xff]
    %v23 = vld [vmem:[%s0 + $0x8] sm:$0xff]
    %v24 = vld [vmem:[%s0 + $0x10] sm:$0xff]
    %v25 = vld [vmem:[%s0 + $0x18] sm:$0xff]
    %v26 = vld [vmem:[%s0 + $0x20] sm:$0xff]
    %v27 = vld [vmem:[%s0 + $0x28] sm:$0xff]
    %v28 = vld [vmem:[%s0 + $0x30] sm:$0xff]
    %v29 = vld [vmem:[%s0 + $0x38] sm:$0xff]
    %v30 = vld [vmem:[%s0 + $0x40] sm:$0xff]
    %v31 = vld [vmem:[%s0 + $0x48] sm:$0xff]
    %v32 = vld [vmem:[%s0 + $0x50] sm:$0xff]
    %v33 = vld [vmem:[%s0 + $0x58] sm:$0xff]
    %v34 = vld [vmem:[%s0 + $0x60] sm:$0xff]
    %v35 = vld [vmem:[%s0 + $0x68] sm:$0xff]
    %v36 = vld [vmem:[%s0 + $0x70] sm:$0xff]
    %v37 = vld [vmem:[%s0 + $0x78] sm:$0xff]
    %v38 = vld [vmem:[%s0 + $0x80] sm:$0xff]
    %v39 = vld [vmem:[%s0 + $0x88] sm:$0xff]
    %v40 = vld [vmem:[%s0 + $0x90] sm:$0xff]
    %v41 = vld [vmem:[%s0 + $0x98] sm:$0xff]
    %v42 = vld [vmem:[%s0 + $0xa0] sm:$0xff]
    %v43 = vld [vmem:[%s0 + $0xa8] sm:$0xff]
    %v44 = vld [vmem:[%s0 + $0xb0] sm:$0xff]
    %v45 = vld [vmem:[%s0 + $0xb8] sm:$0xff]
    %v46 = vld [vmem:[%s0 + $0xc0] sm:$0xff]
    %v47 = vld [vmem:[%s0 + $0xc8] sm:$0xff]
    %v48 = vld [vmem:[%s0 + $0xd0] sm:$0xff]
    %v49 = vld [vmem:[%s0 + $0xd8] sm:$0xff]
    %v50 = vld [vmem:[%s0 + $0xe0] sm:$0xff]
    %v51 = vld [vmem:[%s0 + $0xe8] sm:$0xff]
    %v52 = vld [vmem:[%s0 + $0xf0] sm:$0xff]
    %v53 = vld [vmem:[%s0 + $0xf8] sm:$0xff]
    %v54 = vld [vmem:[%s0 + $0x100] sm:$0xff]
    %v55 = vld [vmem:[%s0 + $0x108] sm:$0xff]
    %v56 = vld [vmem:[%s0 + $0x110] sm:$0xff]
    %v57 = vld [vmem:[%s0 + $0x118] sm:$0xff]
    %v58 = vld [vmem:[%s0 + $0x120] sm:$0xff]
    %v59 = vld [vmem:[%s0 + $0x128] sm:$0xff]
    %v60 = vld [vmem:[%s0 + $0x130] sm:$0xff]
    %v61 = vld [vmem:[%s0 + $0x138] sm:$0xff]
    %v62 = vld [vmem:[%s0 + $0x140] sm:$0xff]
    %v63 = vld [vmem:[%s0 + $0x148] sm:$0xff]
    %v64 = vld [vmem:[%s0 + $0x150] sm:$0xff]
    %v65 = vld [vmem:[%s0 + $0x158] sm:$0xff]
    %v66 = vld [vmem:[%s0 + $0x160] sm:$0xff]
    %v67 = vld [vmem:[%s0 + $0x168] sm:$0xff]
    %v68 = vld [vmem:[%s0 + $0x170] sm:$0xff]
    %v69 = vld [vmem:[%s0 + $0x178] sm:$0xff]
    %v70 = vld [vmem:[%s0 + $0x180] sm:$0xff]
    %v71 = vld [vmem:[%s0 + $0x188] sm:$0xff]
    %v72 = vld [vmem:[%s0 + $0x190] sm:$0xff]
    %v73 = vld [vmem:[%s0 + $0x198] sm:$0xff]
    %v74 = vld [vmem:[%s0 + $0x1a0] sm:$0xff]
    %v75 = vld [vmem:[%s0 + $0x1a8] sm:$0xff]
    %v76 = vld [vmem:[%s0 + $0x1b0] sm:$0xff]
    %v77 = vld [vmem:[%s0 + $0x1b8] sm:$0xff]
    %v78 = vld [vmem:[%s0 + $0x1c0] sm:$0xff]
    %v79 = vld [vmem:[%s0 + $0x1c8] sm:$0xff]
    %v80 = vld [vmem:[%s0 + $0x1d0] sm:$0xff]
    %v81 = vld [vmem:[%s0 + $0x1d8] sm:$0xff]
    %v82 = vld [vmem:[%s0 + $0x1e0] sm:$0xff]
    %v83 = vld [vmem:[%s0 + $0x1e8] sm:$0xff]
    %v84 = vld [vmem:[%s0 + $0x1f0] sm:$0xff]
    %v85 = vld [vmem:[%s0 + $0x1f8] sm:$0xff]
    %v86 = vld [vmem:[%s0 + $0x200] sm:$0xff]
    %v87 = vld [vmem:[%s0 + $0x208] sm:$0xff]
    %v88 = vld [vmem:[%s0 + $0x210] sm:$0xff]
    %v89 = vld [vmem:[%s0 + $0x218] sm:$0xff]
    %v90 = vld [vmem:[%s0 + $0x220] sm:$0xff]
    %v91 = vld [vmem:[%s0 + $0x228] sm:$0xff]
    %v92 = vld [vmem:[%s0 + $0x230] sm:$0xff]
    %v93 = vld [vmem:[%s0 + $0x238] sm:$0xff]
    %v94 = vld [vmem:[%s0 + $0x240] sm:$0xff]
    %v95 = vld [vmem:[%s0 + $0x248] sm:$0xff]
    %v96 = vld [vmem:[%s0 + $0x250] sm:$0xff]
    %v97 = vld [vmem:[%s0 + $0x258] sm:$0xff]
    %v98 = vld [vmem:[%s0 + $0x260] sm:$0xff]
    %v99 = vld [vmem:[%s0 + $0x268] sm:$0xff]
    %v100 = vld [vmem:[%s0 + $0x270] sm:$0xff]
    %v101 = vld [vmem:[%s0 + $0x278] sm:$0xff]
    %v102 = vld [vmem:[%s0 + $0x280] sm:$0xff]
    %v103 = vld [vmem:[%s0 + $0x288] sm:$0xff]
    %v104 = vld [vmem:[%s0 + $0x290] sm:$0xff]
    %v105 = vld [vmem:[%s0 + $0x298] sm:$0xff]
    %v106 = vld [vmem:[%s0 + $0x2a0] sm:$0xff]
    %v107 = vld [vmem:[%s0 + $0x2a8] sm:$0xff]
    %v108 = vld [vmem:[%s0 + $0x2b0] sm:$0xff]
    %v109 = vld [vmem:[%s0 + $0x2b8] sm:$0xff]
    %v110 = vld [vmem:[%s0 + $0x2c0] sm:$0xff]
    %v111 = vld [vmem:[%s0 + $0x2c8] sm:$0xff]
    %v112 = vld [vmem:[%s0 + $0x2d0] sm:$0xff]
    %v113 = vld [vmem:[%s0 + $0x2d8] sm:$0xff]
    %v114 = vld [vmem:[%s0 + $0x2e0] sm:$0xff]
    %v115 = vld [vmem:[%s0 + $0x2e8] sm:$0xff]
    %v116 = vld [vmem:[%s0 + $0x2f0] sm:$0xff]
    %v117 = vld [vmem:[%s0 + $0x2f8] sm:$0xff]
    %v118 = vld [vmem:[%s0 + $0x300] sm:$0xff]
    %v119 = vld [vmem:[%s0 + $0x308] sm:$0xff]
    %v120 = vld [vmem:[%s0 + $0x310] sm:$0xff]
    %v121 = vld [vmem:[%s0 + $0x318] sm:$0xff]
    %v122 = vld [vmem:[%s0 + $0x320] sm:$0xff]
    %v123 = vld [vmem:[%s0 + $0x328] sm:$0xff]
    %v124 = vld [vmem:[%s0 + $0x330] sm:$0xff]
    %v125 = vld [vmem:[%s0 + $0x338] sm:$0xff]
    %v126 = vld [vmem:[%s0 + $0x340] sm:$0xff]
    %v127 = vld [vmem:[%s0 + $0x348] sm:$0xff]
    %v128 = vld [vmem:[%s0 + $0x350] sm:$0xff]
    %v129 = vld [vmem:[%s0 + $0x358] sm:$0xff]
    %v130 = vld [vmem:[%s0 + $0x360] sm:$0xff]
    %v131 = vld [vmem:[%s0 + $0x368] sm:$0xff]
    %v132 = vld [vmem:[%s0 + $0x370] sm:$0xff]
    %v133 = vld [vmem:[%s0 + $0x378] sm:$0xff]
    %v134 = vld [vmem:[%s0 + $0x380] sm:$0xff]
    %v135 = vld [vmem:[%s0 + $0x388] sm:$0xff]
    %v136 = vld [vmem:[%s0 + $0x390] sm:$0xff]
    %v137 = vld [vmem:[%s0 + $0x398] sm:$0xff]
    %v138 = vld [vmem:[%s0 + $0x3a0] sm:$0xff]
    %v139 = vld [vmem:[%s0 + $0x3a8] sm:$0xff]
    %v140 = vld [vmem:[%s0 + $0x3b0] sm:$0xff]
    %v141 = vld [vmem:[%s0 + $0x3b8] sm:$0xff]
    %v142 = vld [vmem:[%s0 + $0x3c0] sm:$0xff]
    %v143 = vld [vmem:[%s0 + $0x3c8] sm:$0xff]
    %v144 = vld [vmem:[%s0 + $0x3d0] sm:$0xff]
    %v145 = vld [vmem:[%s0 + $0x3d8] sm:$0xff]
    %v146 = vld [vmem:[%s0 + $0x3e0] sm:$0xff]
    %v147 = vld [vmem:[%s0 + $0x3e8] sm:$0xff]
    %v148 = vld [vmem:[%s0 + $0x3f0] sm:$0xff]
    %v149 = vld [vmem:[%s0 + $0x3f8] sm:$0xff]
    %v150 = vld [vmem:[%s0 + $0x400] sm:$0xff]
    %v151 = vld [vmem:[%s0 + $0x408] sm:$0xff]
    %v152 = vld [vmem:[%s0 + $0x410] sm:$0xff]
    %v153 = vld [vmem:[%s0 + $0x418] sm:$0xff]
    %v154 = vld [vmem:[%s0 + $0x420] sm:$0xff]
    %v155 = vld [vmem:[%s0 + $0x428] sm:$0xff]
    %v156 = vld [vmem:[%s0 + $0x430] sm:$0xff]
    %v157 = vld [vmem:[%s0 + $0x438] sm:$0xff]
    %v158 = vld [vmem:[%s0 + $0x440] sm:$0xff]
    %v159 = vld [vmem:[%s0 + $0x448] sm:$0xff]
    %v160 = vld [vmem:[%s0 + $0x450] sm:$0xff]
    %v161 = vld [vmem:[%s0 + $0x458] sm:$0xff]
    %v162 = vld [vmem:[%s0 + $0x460] sm:$0xff]
    %v163 = vld [vmem:[%s0 + $0x468] sm:$0xff]
    %v164 = vld [vmem:[%s0 + $0x470] sm:$0xff]
    %v165 = vld [vmem:[%s0 + $0x478] sm:$0xff]
    %v166 = vld [vmem:[%s0 + $0x480] sm:$0xff]
    %v167 = vld [vmem:[%s0 + $0x488] sm:$0xff]
    %v168 = vld [vmem:[%s0 + $0x490] sm:$0xff]
    %v169 = vld [vmem:[%s0 + $0x498] sm:$0xff]
    %v170 = vld [vmem:[%s0 + $0x4a0] sm:$0xff]
    %v171 = vld [vmem:[%s0 + $0x4a8] sm:$0xff]
    %v172 = vld [vmem:[%s0 + $0x4b0] sm:$0xff]
    %v173 = vld [vmem:[%s0 + $0x4b8] sm:$0xff]
    %v174 = vld [vmem:[%s0 + $0x4c0] sm:$0xff]
    %v175 = vld [vmem:[%s0 + $0x4c8] sm:$0xff]
    %v176 = vld [vmem:[%s0 + $0x4d0] sm:$0xff]
    %v177 = vld [vmem:[%s0 + $0x4d8] sm:$0xff]
    %v178 = vld [vmem:[%s0 + $0x4e0] sm:$0xff]
    %v179 = vld [vmem:[%s0 + $0x4e8] sm:$0xff]
    %v180 = vld [vmem:[%s0 + $0x4f0] sm:$0xff]
    %v181 = vld [vmem:[%s0 + $0x4f8] sm:$0xff]
    %v182 = vld [vmem:[%s0 + $0x500] sm:$0xff]
    %v183 = vld [vmem:[%s0 + $0x508] sm:$0xff]
    %v184 = vld [vmem:[%s0 + $0x510] sm:$0xff]
    %v185 = vld [vmem:[%s0 + $0x518] sm:$0xff]
    %v186 = vld [vmem:[%s0 + $0x520] sm:$0xff]
    %v187 = vld [vmem:[%s0 + $0x528] sm:$0xff]
    %v188 = vld [vmem:[%s0 + $0x530] sm:$0xff]
    %v189 = vld [vmem:[%s0 + $0x538] sm:$0xff]
    %v190 = vld [vmem:[%s0 + $0x540] sm:$0xff]
    %v191 = vld [vmem:[%s0 + $0x548] sm:$0xff]
    %v192 = vld [vmem:[%s0 + $0x550] sm:$0xff]
    %v193 = vld [vmem:[%s0 + $0x558] sm:$0xff]
    %v194 = vld [vmem:[%s0 + $0x560] sm:$0xff]
    %v195 = vld [vmem:[%s0 + $0x568] sm:$0xff]
    %v196 = vld [vmem:[%s0 + $0x570] sm:$0xff]
    %v197 = vld [vmem:[%s0 + $0x578] sm:$0xff]
    %v198 = vld [vmem:[%s0 + $0x580] sm:$0xff]
    %v199 = vld [vmem:[%s0 + $0x588] sm:$0xff]
    %v200 = vld [vmem:[%s0 + $0x590] sm:$0xff]
    %v201 = vld [vmem:[%s0 + $0x598] sm:$0xff]
    %v202 = vld [vmem:[%s0 + $0x5a0] sm:$0xff]
    %v203 = vld [vmem:[%s0 + $0x5a8] sm:$0xff]
    %v204 = vld [vmem:[%s0 + $0x5b0] sm:$0xff]
    %v205 = vld [vmem:[%s0 + $0x5b8] sm:$0xff]
    %v206 = vld [vmem:[%s0 + $0x5c0] sm:$0xff]
    %v207 = vld [vmem:[%s0 + $0x5c8] sm:$0xff]
    %v208 = vld [vmem:[%s0 + $0x5d0] sm:$0xff]
    %v209 = vld [vmem:[%s0 + $0x5d8] sm:$0xff]
    %v210 = vld [vmem:[%s0 + $0x5e0] sm:$0xff]
    %v211 = vld [vmem:[%s0 + $0x5e8] sm:$0xff]
    %v212 = vld [vmem:[%s0 + $0x5f0] sm:$0xff]
    %v213 = vld [vmem:[%s0 + $0x5f8] sm:$0xff]
    %v214 = vld [vmem:[%s0 + $0x600] sm:$0xff]
    %v215 = vld [vmem:[%s0 + $0x608] sm:$0xff]
    %v216 = vld [vmem:[%s0 + $0x610] sm:$0xff]
    %v217 = vld [vmem:[%s0 + $0x618] sm:$0xff]
    %v218 = vld [vmem:[%s0 + $0x620] sm:$0xff]
    %v219 = vld [vmem:[%s0 + $0x628] sm:$0xff]
    %v220 = vld [vmem:[%s0 + $0x630] sm:$0xff]
    %v221 = vld [vmem:[%s0 + $0x638] sm:$0xff]
    %v222 = vld [vmem:[%s0 + $0x640] sm:$0xff]
    %v223 = vld [vmem:[%s0 + $0x648] sm:$0xff]
    %v224 = vld [vmem:[%s0 + $0x650] sm:$0xff]
    %v225 = vld [vmem:[%s0 + $0x658] sm:$0xff]
    %v226 = vld [vmem:[%s0 + $0x660] sm:$0xff]
    %v227 = vld [vmem:[%s0 + $0x668] sm:$0xff]
    %v228 = vld [vmem:[%s0 + $0x670] sm:$0xff]
    %v229 = vld [vmem:[%s0 + $0x678] sm:$0xff]
    %v230 = vld [vmem:[%s0 + $0x680] sm:$0xff]
    %v231 = vld [vmem:[%s0 + $0x688] sm:$0xff]
    %v232 = vld [vmem:[%s0 + $0x690] sm:$0xff]
    %v233 = vld [vmem:[%s0 + $0x698] sm:$0xff]
    %v234 = vld [vmem:[%s0 + $0x6a0] sm:$0xff]
    %v235 = vld [vmem:[%s0 + $0x6a8] sm:$0xff]
    %v236 = vld [vmem:[%s0 + $0x6b0] sm:$0xff]
    %v237 = vld [vmem:[%s0 + $0x6b8] sm:$0xff]
    %v238 = vld [vmem:[%s0 + $0x6c0] sm:$0xff]
    %v239 = vld [vmem:[%s0 + $0x6c8] sm:$0xff]
    %v240 = vld [vmem:[%s0 + $0x6d0] sm:$0xff]
    %v241 = vld [vmem:[%s0 + $0x6d8] sm:$0xff]
    %v242 = vld [vmem:[%s0 + $0x6e0] sm:$0xff]
    %v243 = vld [vmem:[%s0 + $0x6e8] sm:$0xff]
    %v244 = vld [vmem:[%s0 + $0x6f0] sm:$0xff]
    %v245 = vld [vmem:[%s0 + $0x6f8] sm:$0xff]
    %v246 = vld [vmem:[%s0 + $0x700] sm:$0xff]
    %v247 = vld [vmem:[%s0 + $0x708] sm:$0xff]
    %v248 = vld [vmem:[%s0 + $0x710] sm:$0xff]
    %v249 = vld [vmem:[%s0 + $0x718] sm:$0xff]
    %v250 = vld [vmem:[%s0 + $0x720] sm:$0xff]
    %v251 = vld [vmem:[%s0 + $0x728] sm:$0xff]
    %v252 = vld [vmem:[%s0 + $0x730] sm:$0xff]
    %v253 = vld [vmem:[%s0 + $0x738] sm:$0xff]
    %v254 = vld [vmem:[%s0 + $0x740] sm:$0xff]
    %v255 = vld [vmem:[%s0 + $0x748] sm:$0xff]
    %v256 = vld [vmem:[%s0 + $0x750] sm:$0xff]
    %v257 = vld [vmem:[%s0 + $0x758] sm:$0xff]
    %v258 = vld [vmem:[%s0 + $0x760] sm:$0xff]
    %v259 = vld [vmem:[%s0 + $0x768] sm:$0xff]
    %v260 = vld [vmem:[%s0 + $0x770] sm:$0xff]
    %v261 = vld [vmem:[%s0 + $0x778] sm:$0xff]
    %v262 = vld [vmem:[%s0 + $0x780] sm:$0xff]
    %v263 = vld [vmem:[%s0 + $0x788] sm:$0xff]
    %v264 = vld [vmem:[%s0 + $0x790] sm:$0xff]
    %v265 = vld [vmem:[%s0 + $0x798] sm:$0xff]
    %v266 = vld [vmem:[%s0 + $0x7a0] sm:$0xff]
    %v267 = vld [vmem:[%s0 + $0x7a8] sm:$0xff]
    %v268 = vld [vmem:[%s0 + $0x7b0] sm:$0xff]
    %v269 = vld [vmem:[%s0 + $0x7b8] sm:$0xff]
    %v270 = vld [vmem:[%s0 + $0x7c0] sm:$0xff]
    %v271 = vld [vmem:[%s0 + $0x7c8] sm:$0xff]
    %v272 = vld [vmem:[%s0 + $0x7d0] sm:$0xff]
    %v273 = vld [vmem:[%s0 + $0x7d8] sm:$0xff]
    %v274 = vld [vmem:[%s0 + $0x7e0] sm:$0xff]
    %v275 = vld [vmem:[%s0 + $0x7e8] sm:$0xff]
    %v276 = vld [vmem:[%s0 + $0x7f0] sm:$0xff]
    %v277 = vld [vmem:[%s0 + $0x7f8] sm:$0xff]
    %v278 = vld [vmem:[%s0 + $0x800] sm:$0xff]
    %v279 = vld [vmem:[%s0 + $0x808] sm:$0xff]
    %v280 = vld [vmem:[%s0 + $0x810] sm:$0xff]
    %v281 = vld [vmem:[%s0 + $0x818] sm:$0xff]
    %v282 = vld [vmem:[%s0 + $0x820] sm:$0xff]
    %v283 = vld [vmem:[%s0 + $0x828] sm:$0xff]
    %v284 = vld [vmem:[%s0 + $0x830] sm:$0xff]
    %v285 = vld [vmem:[%s0 + $0x838] sm:$0xff]
    %v286 = vld [vmem:[%s0 + $0x840] sm:$0xff]
    %v287 = vld [vmem:[%s0 + $0x848] sm:$0xff]
    %v288 = vld [vmem:[%s0 + $0x850] sm:$0xff]
    %v289 = vld [vmem:[%s0 + $0x858] sm:$0xff]
    %v290 = vld [vmem:[%s0 + $0x860] sm:$0xff]
    %v291 = vld [vmem:[%s0 + $0x868] sm:$0xff]
    %v292 = vld [vmem:[%s0 + $0x870] sm:$0xff]
    %v293 = vld [vmem:[%s0 + $0x878] sm:$0xff]
    %v294 = vld [vmem:[%s0 + $0x880] sm:$0xff]
    %v295 = vld [vmem:[%s0 + $0x888] sm:$0xff]
    %v296 = vld [vmem:[%s0 + $0x890] sm:$0xff]
    %v297 = vld [vmem:[%s0 + $0x898] sm:$0xff]
    %v298 = vld [vmem:[%s0 + $0x8a0] sm:$0xff]
    %v299 = vld [vmem:[%s0 + $0x8a8] sm:$0xff]
    %v300 = vld [vmem:[%s0 + $0x8b0] sm:$0xff]
    %v301 = vld [vmem:[%s0 + $0x8b8] sm:$0xff]
    %v302 = vld [vmem:[%s0 + $0x8c0] sm:$0xff]
    %v303 = vld [vmem:[%s0 + $0x8c8] sm:$0xff]
    %v304 = vld [vmem:[%s0 + $0x8d0] sm:$0xff]
    %v305 = vld [vmem:[%s0 + $0x8d8] sm:$0xff]
    %v306 = vld [vmem:[%s0 + $0x8e0] sm:$0xff]
    %v307 = vld [vmem:[%s0 + $0x8e8] sm:$0xff]
    %v308 = vld [vmem:[%s0 + $0x8f0] sm:$0xff]
    %v309 = vld [vmem:[%s0 + $0x8f8] sm:$0xff]
    %v310 = vld [vmem:[%s0 + $0x900] sm:$0xff]
    %v311 = vld [vmem:[%s0 + $0x908] sm:$0xff]
    %v312 = vld [vmem:[%s0 + $0x910] sm:$0xff]
    %v313 = vld [vmem:[%s0 + $0x918] sm:$0xff]
    %v314 = vld [vmem:[%s0 + $0x920] sm:$0xff]
    %v315 = vld [vmem:[%s0 + $0x928] sm:$0xff]
    %v316 = vld [vmem:[%s0 + $0x930] sm:$0xff]
    %v317 = vld [vmem:[%s0 + $0x938] sm:$0xff]
    %v318 = vld [vmem:[%s0 + $0x940] sm:$0xff]
    %v319 = vld [vmem:[%s0 + $0x948] sm:$0xff]
    %v320 = vld [vmem:[%s0 + $0x950] sm:$0xff]
    %v321 = vld [vmem:[%s0 + $0x958] sm:$0xff]
    %v322 = vld [vmem:[%s0 + $0x960] sm:$0xff]
    %v323 = vld [vmem:[%s0 + $0x968] sm:$0xff]
    %v324 = vld [vmem:[%s0 + $0x970] sm:$0xff]
    %v325 = vld [vmem:[%s0 + $0x978] sm:$0xff]
    %v326 = vld [vmem:[%s0 + $0x980] sm:$0xff]
    %v327 = vld [vmem:[%s0 + $0x988] sm:$0xff]
    %v328 = vld [vmem:[%s0 + $0x990] sm:$0xff]
    %v329 = vld [vmem:[%s0 + $0x998] sm:$0xff]
    %v330 = vld [vmem:[%s0 + $0x9a0] sm:$0xff]
    %v331 = vld [vmem:[%s0 + $0x9a8] sm:$0xff]
    %v332 = vld [vmem:[%s0 + $0x9b0] sm:$0xff]
    %v333 = vld [vmem:[%s0 + $0x9b8] sm:$0xff]
    %v334 = vld [vmem:[%s0 + $0x9c0] sm:$0xff]
    %v335 = vld [vmem:[%s0 + $0x9c8] sm:$0xff]
    %v336 = vld [vmem:[%s0 + $0x9d0] sm:$0xff]
    %v337 = vld [vmem:[%s0 + $0x9d8] sm:$0xff]
    %v338 = vld [vmem:[%s0 + $0x9e0] sm:$0xff]
    %v339 = vld [vmem:[%s0 + $0x9e8] sm:$0xff]
    %v340 = vld [vmem:[%s0 + $0x9f0] sm:$0xff]
    %v341 = vld [vmem:[%s0 + $0x9f8] sm:$0xff]
    %v342 = vld [vmem:[%s0 + $0xa00] sm:$0xff]
    %v343 = vld [vmem:[%s0 + $0xa08] sm:$0xff]
    %v344 = vld [vmem:[%s0 + $0xa10] sm:$0xff]
    %v345 = vld [vmem:[%s0 + $0xa18] sm:$0xff]
    %v346 = vld [vmem:[%s0 + $0xa20] sm:$0xff]
    %v347 = vld [vmem:[%s0 + $0xa28] sm:$0xff]
    %v348 = vld [vmem:[%s0 + $0xa30] sm:$0xff]
    %v349 = vld [vmem:[%s0 + $0xa38] sm:$0xff]
    %v350 = vld [vmem:[%s0 + $0xa40] sm:$0xff]
    %v351 = vld [vmem:[%s0 + $0xa48] sm:$0xff]
    %v352 = vld [vmem:[%s0 + $0xa50] sm:$0xff]
    %v353 = vld [vmem:[%s0 + $0xa58] sm:$0xff]
    %v354 = vld [vmem:[%s0 + $0xa60] sm:$0xff]
    %v355 = vld [vmem:[%s0 + $0xa68] sm:$0xff]
    %v356 = vld [vmem:[%s0 + $0xa70] sm:$0xff]
    %v357 = vld [vmem:[%s0 + $0xa78] sm:$0xff]
    %v358 = vld [vmem:[%s0 + $0xa80] sm:$0xff]
    %v359 = vld [vmem:[%s0 + $0xa88] sm:$0xff]
    %v360 = vld [vmem:[%s0 + $0xa90] sm:$0xff]
    %v361 = vld [vmem:[%s0 + $0xa98] sm:$0xff]
    %v362 = vld [vmem:[%s0 + $0xaa0] sm:$0xff]
    %v363 = vld [vmem:[%s0 + $0xaa8] sm:$0xff]
    %v364 = vld [vmem:[%s0 + $0xab0] sm:$0xff]
    %v365 = vld [vmem:[%s0 + $0xab8] sm:$0xff]
    %v366 = vld [vmem:[%s0 + $0xac0] sm:$0xff]
    %v367 = vld [vmem:[%s0 + $0xac8] sm:$0xff]
    %v368 = vld [vmem:[%s0 + $0xad0] sm:$0xff]
    %v369 = vld [vmem:[%s0 + $0xad8] sm:$0xff]
    %v370 = vld [vmem:[%s0 + $0xae0] sm:$0xff]
    %v371 = vld [vmem:[%s0 + $0xae8] sm:$0xff]
    %v372 = vld [vmem:[%s0 + $0xaf0] sm:$0xff]
    %v373 = vld [vmem:[%s0 + $0xaf8] sm:$0xff]
    %v374 = vld [vmem:[%s0 + $0xb00] sm:$0xff]
    %v375 = vld [vmem:[%s0 + $0xb08] sm:$0xff]
    %v376 = vld [vmem:[%s0 + $0xb10] sm:$0xff]
    %v377 = vld [vmem:[%s0 + $0xb18] sm:$0xff]
    %v378 = vld [vmem:[%s0 + $0xb20] sm:$0xff]
    %v379 = vld [vmem:[%s0 + $0xb28] sm:$0xff]
    %v380 = vld [vmem:[%s0 + $0xb30] sm:$0xff]
    %v381 = vld [vmem:[%s0 + $0xb38] sm:$0xff]
    %v382 = vld [vmem:[%s0 + $0xb40] sm:$0xff]
    %v383 = vld [vmem:[%s0 + $0xb48] sm:$0xff]
    %v384 = vld [vmem:[%s0 + $0xb50] sm:$0xff]
    %v385 = vld [vmem:[%s0 + $0xb58] sm:$0xff]
    %v386 = vld [vmem:[%s0 + $0xb60] sm:$0xff]
    %v387 = vld [vmem:[%s0 + $0xb68] sm:$0xff]
    %v388 = vld [vmem:[%s0 + $0xb70] sm:$0xff]
    %v389 = vld [vmem:[%s0 + $0xb78] sm:$0xff]
    %v390 = vld [vmem:[%s0 + $0xb80] sm:$0xff]
    %v391 = vld [vmem:[%s0 + $0xb88] sm:$0xff]
    %v392 = vld [vmem:[%s0 + $0xb90] sm:$0xff]
    %v393 = vld [vmem:[%s0 + $0xb98] sm:$0xff]
    %v394 = vld [vmem:[%s0 + $0xba0] sm:$0xff]
    %v395 = vld [vmem:[%s0 + $0xba8] sm:$0xff]
    %v396 = vld [vmem:[%s0 + $0xbb0] sm:$0xff]
    %v397 = vld [vmem:[%s0 + $0xbb8] sm:$0xff]
    %v398 = vld [vmem:[%s0 + $0xbc0] sm:$0xff]
    %v399 = vld [vmem:[%s0 + $0xbc8] sm:$0xff]
    %v400 = vld [vmem:[%s0 + $0xbd0] sm:$0xff]
    %v401 = vld [vmem:[%s0 + $0xbd8] sm:$0xff]
    %v402 = vld [vmem:[%s0 + $0xbe0] sm:$0xff]
    %v403 = vld [vmem:[%s0 + $0xbe8] sm:$0xff]
    %v404 = vld [vmem:[%s0 + $0xbf0] sm:$0xff]
    %v405 = vld [vmem:[%s0 + $0xbf8] sm:$0xff]
    %v406 = vld [vmem:[%s0 + $0xc00] sm:$0xff]
    %v407 = vld [vmem:[%s0 + $0xc08] sm:$0xff]
    %v408 = vld [vmem:[%s0 + $0xc10] sm:$0xff]
    %v409 = vld [vmem:[%s0 + $0xc18] sm:$0xff]
    %v410 = vld [vmem:[%s0 + $0xc20] sm:$0xff]
    %v411 = vld [vmem:[%s0 + $0xc28] sm:$0xff]
    %v412 = vld [vmem:[%s0 + $0xc30] sm:$0xff]
    %v413 = vld [vmem:[%s0 + $0xc38] sm:$0xff]
    %v414 = vld [vmem:[%s0 + $0xc40] sm:$0xff]
    %v415 = vld [vmem:[%s0 + $0xc48] sm:$0xff]
    %v416 = vld [vmem:[%s0 + $0xc50] sm:$0xff]
    %v417 = vld [vmem:[%s0 + $0xc58] sm:$0xff]
    %v418 = vld [vmem:[%s0 + $0xc60] sm:$0xff]
    %v419 = vld [vmem:[%s0 + $0xc68] sm:$0xff]
    %v420 = vld [vmem:[%s0 + $0xc70] sm:$0xff]
    %v421 = vld [vmem:[%s0 + $0xc78] sm:$0xff]
    %v422 = vld [vmem:[%s0 + $0xc80] sm:$0xff]
    %v423 = vld [vmem:[%s0 + $0xc88] sm:$0xff]
    %v424 = vld [vmem:[%s0 + $0xc90] sm:$0xff]
    %v425 = vld [vmem:[%s0 + $0xc98] sm:$0xff]
    %v426 = vld [vmem:[%s0 + $0xca0] sm:$0xff]
    %v427 = vld [vmem:[%s0 + $0xca8] sm:$0xff]
    %v428 = vld [vmem:[%s0 + $0xcb0] sm:$0xff]
    %v429 = vld [vmem:[%s0 + $0xcb8] sm:$0xff]
    %v430 = vld [vmem:[%s0 + $0xcc0] sm:$0xff]
    %v431 = vld [vmem:[%s0 + $0xcc8] sm:$0xff]
    %v432 = vld [vmem:[%s0 + $0xcd0] sm:$0xff]
    %v433 = vld [vmem:[%s0 + $0xcd8] sm:$0xff]
    %v434 = vld [vmem:[%s0 + $0xce0] sm:$0xff]
    %v435 = vld [vmem:[%s0 + $0xce8] sm:$0xff]
    %v436 = vld [vmem:[%s0 + $0xcf0] sm:$0xff]
    %v437 = vld [vmem:[%s0 + $0xcf8] sm:$0xff]
    %v438 = vld [vmem:[%s0 + $0xd00] sm:$0xff]
    %v439 = vld [vmem:[%s0 + $0xd08] sm:$0xff]
    %v440 = vld [vmem:[%s0 + $0xd10] sm:$0xff]
    %v441 = vld [vmem:[%s0 + $0xd18] sm:$0xff]
    %v442 = vld [vmem:[%s0 + $0xd20] sm:$0xff]
    %v443 = vld [vmem:[%s0 + $0xd28] sm:$0xff]
    %v444 = vld [vmem:[%s0 + $0xd30] sm:$0xff]
    %v445 = vld [vmem:[%s0 + $0xd38] sm:$0xff]
    %v446 = vld [vmem:[%s0 + $0xd40] sm:$0xff]
    %v447 = vld [vmem:[%s0 + $0xd48] sm:$0xff]
    %v448 = vld [vmem:[%s0 + $0xd50] sm:$0xff]
    %v449 = vld [vmem:[%s0 + $0xd58] sm:$0xff]
    %v450 = vld [vmem:[%s0 + $0xd60] sm:$0xff]
    %v451 = vld [vmem:[%s0 + $0xd68] sm:$0xff]
    %v452 = vld [vmem:[%s0 + $0xd70] sm:$0xff]
    %v453 = vld [vmem:[%s0 + $0xd78] sm:$0xff]
    %v454 = vld [vmem:[%s0 + $0xd80] sm:$0xff]
    %v455 = vld [vmem:[%s0 + $0xd88] sm:$0xff]
    %v456 = vld [vmem:[%s0 + $0xd90] sm:$0xff]
    %v457 = vld [vmem:[%s0 + $0xd98] sm:$0xff]
    %v458 = vld [vmem:[%s0 + $0xda0] sm:$0xff]
    %v459 = vld [vmem:[%s0 + $0xda8] sm:$0xff]
    %v460 = vld [vmem:[%s0 + $0xdb0] sm:$0xff]
    %v461 = vld [vmem:[%s0 + $0xdb8] sm:$0xff]
    %v462 = vld [vmem:[%s0 + $0xdc0] sm:$0xff]
    %v463 = vld [vmem:[%s0 + $0xdc8] sm:$0xff]
    %v464 = vld [vmem:[%s0 + $0xdd0] sm:$0xff]
    %v465 = vld [vmem:[%s0 + $0xdd8] sm:$0xff]
    %v466 = vld [vmem:[%s0 + $0xde0] sm:$0xff]
    %v467 = vld [vmem:[%s0 + $0xde8] sm:$0xff]
    %v468 = vld [vmem:[%s0 + $0xdf0] sm:$0xff]
    %v469 = vld [vmem:[%s0 + $0xdf8] sm:$0xff]
    %v470 = vpack.c.bf16 %v29, %v22
    %v471 = vpack.c.bf16 %v30, %v23
    %v472 = vpack.c.bf16 %v31, %v24
    %v473 = vpack.c.bf16 %v32, %v25
    %v474 = vpack.c.bf16 %v33, %v26
    %v475 = vpack.c.bf16 %v34, %v27
    %v476 = vpack.c.bf16 %v35, %v28
    %v477 = vpack.c.bf16 %v43, %v36
    %v478 = vpack.c.bf16 %v44, %v37
    %v479 = vpack.c.bf16 %v45, %v38
    %v480 = vpack.c.bf16 %v46, %v39
    %v481 = vpack.c.bf16 %v47, %v40
    %v482 = vpack.c.bf16 %v48, %v41
    %v483 = vpack.c.bf16 %v49, %v42
    %v484 = vpack.c.bf16 %v57, %v50
    %v485 = vpack.c.bf16 %v58, %v51
    %v486 = vpack.c.bf16 %v59, %v52
    %v487 = vpack.c.bf16 %v60, %v53
    %v488 = vpack.c.bf16 %v61, %v54
    %v489 = vpack.c.bf16 %v62, %v55
    %v490 = vpack.c.bf16 %v63, %v56
    %v491 = vpack.c.bf16 %v71, %v64
    %v492 = vpack.c.bf16 %v72, %v65
    %v493 = vpack.c.bf16 %v73, %v66
    %v494 = vpack.c.bf16 %v74, %v67
    %v495 = vpack.c.bf16 %v75, %v68
    %v496 = vpack.c.bf16 %v76, %v69
    %v497 = vpack.c.bf16 %v77, %v70
    %v498 = vpack.c.bf16 %v85, %v78
    %v499 = vpack.c.bf16 %v86, %v79
    %v500 = vpack.c.bf16 %v87, %v80
    %v501 = vpack.c.bf16 %v88, %v81
    %v502 = vpack.c.bf16 %v89, %v82
    %v503 = vpack.c.bf16 %v90, %v83
    %v504 = vpack.c.bf16 %v91, %v84
    %v505 = vpack.c.bf16 %v99, %v92
    %v506 = vpack.c.bf16 %v100, %v93
    %v507 = vpack.c.bf16 %v101, %v94
    %v508 = vpack.c.bf16 %v102, %v95
    %v509 = vpack.c.bf16 %v103, %v96
    %v510 = vpack.c.bf16 %v104, %v97
    %v511 = vpack.c.bf16 %v105, %v98
    %v512 = vpack.c.bf16 %v113, %v106
    %v513 = vpack.c.bf16 %v114, %v107
    %v514 = vpack.c.bf16 %v115, %v108
    %v515 = vpack.c.bf16 %v116, %v109
    %v516 = vpack.c.bf16 %v117, %v110
    %v517 = vpack.c.bf16 %v118, %v111
    %v518 = vpack.c.bf16 %v119, %v112
    %v519 = vpack.c.bf16 %v127, %v120
    %v520 = vpack.c.bf16 %v128, %v121
    %v521 = vpack.c.bf16 %v129, %v122
    %v522 = vpack.c.bf16 %v130, %v123
    %v523 = vpack.c.bf16 %v131, %v124
    %v524 = vpack.c.bf16 %v132, %v125
    %v525 = vpack.c.bf16 %v133, %v126
    %v526 = vpack.c.bf16 %v141, %v134
    %v527 = vpack.c.bf16 %v142, %v135
    %v528 = vpack.c.bf16 %v143, %v136
    %v529 = vpack.c.bf16 %v144, %v137
    %v530 = vpack.c.bf16 %v145, %v138
    %v531 = vpack.c.bf16 %v146, %v139
    %v532 = vpack.c.bf16 %v147, %v140
    %v533 = vpack.c.bf16 %v155, %v148
    %v534 = vpack.c.bf16 %v156, %v149
    %v535 = vpack.c.bf16 %v157, %v150
    %v536 = vpack.c.bf16 %v158, %v151
    %v537 = vpack.c.bf16 %v159, %v152
    %v538 = vpack.c.bf16 %v160, %v153
    %v539 = vpack.c.bf16 %v161, %v154
    %v540 = vpack.c.bf16 %v169, %v162
    %v541 = vpack.c.bf16 %v170, %v163
    %v542 = vpack.c.bf16 %v171, %v164
    %v543 = vpack.c.bf16 %v172, %v165
    %v544 = vpack.c.bf16 %v173, %v166
    %v545 = vpack.c.bf16 %v174, %v167
    %v546 = vpack.c.bf16 %v175, %v168
    %v547 = vpack.c.bf16 %v183, %v176
    %v548 = vpack.c.bf16 %v184, %v177
    %v549 = vpack.c.bf16 %v185, %v178
    %v550 = vpack.c.bf16 %v186, %v179
    %v551 = vpack.c.bf16 %v187, %v180
    %v552 = vpack.c.bf16 %v188, %v181
    %v553 = vpack.c.bf16 %v189, %v182
    %v554 = vpack.c.bf16 %v197, %v190
    %v555 = vpack.c.bf16 %v198, %v191
    %v556 = vpack.c.bf16 %v199, %v192
    %v557 = vpack.c.bf16 %v200, %v193
    %v558 = vpack.c.bf16 %v201, %v194
    %v559 = vpack.c.bf16 %v202, %v195
    %v560 = vpack.c.bf16 %v203, %v196
    %v561 = vpack.c.bf16 %v211, %v204
    %v562 = vpack.c.bf16 %v212, %v205
    %v563 = vpack.c.bf16 %v213, %v206
    %v564 = vpack.c.bf16 %v214, %v207
    %v565 = vpack.c.bf16 %v215, %v208
    %v566 = vpack.c.bf16 %v216, %v209
    %v567 = vpack.c.bf16 %v217, %v210
    %v568 = vpack.c.bf16 %v225, %v218
    %v569 = vpack.c.bf16 %v226, %v219
    %v570 = vpack.c.bf16 %v227, %v220
    %v571 = vpack.c.bf16 %v228, %v221
    %v572 = vpack.c.bf16 %v229, %v222
    %v573 = vpack.c.bf16 %v230, %v223
    %v574 = vpack.c.bf16 %v231, %v224
    %v575 = vpack.c.bf16 %v239, %v232
    %v576 = vpack.c.bf16 %v240, %v233
    %v577 = vpack.c.bf16 %v241, %v234
    %v578 = vpack.c.bf16 %v242, %v235
    %v579 = vpack.c.bf16 %v243, %v236
    %v580 = vpack.c.bf16 %v244, %v237
    %v581 = vpack.c.bf16 %v245, %v238
    %v582 = vpack.c.bf16 %v253, %v246
    %v583 = vpack.c.bf16 %v254, %v247
    %v584 = vpack.c.bf16 %v255, %v248
    %v585 = vpack.c.bf16 %v256, %v249
    %v586 = vpack.c.bf16 %v257, %v250
    %v587 = vpack.c.bf16 %v258, %v251
    %v588 = vpack.c.bf16 %v259, %v252
    %v589 = vpack.c.bf16 %v267, %v260
    %v590 = vpack.c.bf16 %v268, %v261
    %v591 = vpack.c.bf16 %v269, %v262
    %v592 = vpack.c.bf16 %v270, %v263
    %v593 = vpack.c.bf16 %v271, %v264
    %v594 = vpack.c.bf16 %v272, %v265
    %v595 = vpack.c.bf16 %v273, %v266
    %v596 = vpack.c.bf16 %v281, %v274
    %v597 = vpack.c.bf16 %v282, %v275
    %v598 = vpack.c.bf16 %v283, %v276
    %v599 = vpack.c.bf16 %v284, %v277
    %v600 = vpack.c.bf16 %v285, %v278
    %v601 = vpack.c.bf16 %v286, %v279
    %v602 = vpack.c.bf16 %v287, %v280
    %v603 = vpack.c.bf16 %v295, %v288
    %v604 = vpack.c.bf16 %v296, %v289
    %v605 = vpack.c.bf16 %v297, %v290
    %v606 = vpack.c.bf16 %v298, %v291
    %v607 = vpack.c.bf16 %v299, %v292
    %v608 = vpack.c.bf16 %v300, %v293
    %v609 = vpack.c.bf16 %v301, %v294
    %v610 = vpack.c.bf16 %v309, %v302
    %v611 = vpack.c.bf16 %v310, %v303
    %v612 = vpack.c.bf16 %v311, %v304
    %v613 = vpack.c.bf16 %v312, %v305
    %v614 = vpack.c.bf16 %v313, %v306
    %v615 = vpack.c.bf16 %v314, %v307
    %v616 = vpack.c.bf16 %v315, %v308
    %v617 = vpack.c.bf16 %v323, %v316
    %v618 = vpack.c.bf16 %v324, %v317
    %v619 = vpack.c.bf16 %v325, %v318
    %v620 = vpack.c.bf16 %v326, %v319
    %v621 = vpack.c.bf16 %v327, %v320
    %v622 = vpack.c.bf16 %v328, %v321
    %v623 = vpack.c.bf16 %v329, %v322
    %v624 = vpack.c.bf16 %v337, %v330
    %v625 = vpack.c.bf16 %v338, %v331
    %v626 = vpack.c.bf16 %v339, %v332
    %v627 = vpack.c.bf16 %v340, %v333
    %v628 = vpack.c.bf16 %v341, %v334
    %v629 = vpack.c.bf16 %v342, %v335
    %v630 = vpack.c.bf16 %v343, %v336
    %v631 = vpack.c.bf16 %v351, %v344
    %v632 = vpack.c.bf16 %v352, %v345
    %v633 = vpack.c.bf16 %v353, %v346
    %v634 = vpack.c.bf16 %v354, %v347
    %v635 = vpack.c.bf16 %v355, %v348
    %v636 = vpack.c.bf16 %v356, %v349
    %v637 = vpack.c.bf16 %v357, %v350
    %v638 = vpack.c.bf16 %v365, %v358
    %v639 = vpack.c.bf16 %v366, %v359
    %v640 = vpack.c.bf16 %v367, %v360
    %v641 = vpack.c.bf16 %v368, %v361
    %v642 = vpack.c.bf16 %v369, %v362
    %v643 = vpack.c.bf16 %v370, %v363
    %v644 = vpack.c.bf16 %v371, %v364
    %v645 = vpack.c.bf16 %v379, %v372
    %v646 = vpack.c.bf16 %v380, %v373
    %v647 = vpack.c.bf16 %v381, %v374
    %v648 = vpack.c.bf16 %v382, %v375
    %v649 = vpack.c.bf16 %v383, %v376
    %v650 = vpack.c.bf16 %v384, %v377
    %v651 = vpack.c.bf16 %v385, %v378
    %v652 = vpack.c.bf16 %v393, %v386
    %v653 = vpack.c.bf16 %v394, %v387
    %v654 = vpack.c.bf16 %v395, %v388
    %v655 = vpack.c.bf16 %v396, %v389
    %v656 = vpack.c.bf16 %v397, %v390
    %v657 = vpack.c.bf16 %v398, %v391
    %v658 = vpack.c.bf16 %v399, %v392
    %v659 = vpack.c.bf16 %v407, %v400
    %v660 = vpack.c.bf16 %v408, %v401
    %v661 = vpack.c.bf16 %v409, %v402
    %v662 = vpack.c.bf16 %v410, %v403
    %v663 = vpack.c.bf16 %v411, %v404
    %v664 = vpack.c.bf16 %v412, %v405
    %v665 = vpack.c.bf16 %v413, %v406
    %v666 = vpack.c.bf16 %v421, %v414
    %v667 = vpack.c.bf16 %v422, %v415
    %v668 = vpack.c.bf16 %v423, %v416
    %v669 = vpack.c.bf16 %v424, %v417
    %v670 = vpack.c.bf16 %v425, %v418
    %v671 = vpack.c.bf16 %v426, %v419
    %v672 = vpack.c.bf16 %v427, %v420
    %v673 = vpack.c.bf16 %v435, %v428
    %v674 = vpack.c.bf16 %v436, %v429
    %v675 = vpack.c.bf16 %v437, %v430
    %v676 = vpack.c.bf16 %v438, %v431
    %v677 = vpack.c.bf16 %v439, %v432
    %v678 = vpack.c.bf16 %v440, %v433
    %v679 = vpack.c.bf16 %v441, %v434
    %v680 = vpack.c.bf16 %v449, %v442
    %v681 = vpack.c.bf16 %v450, %v443
    %v682 = vpack.c.bf16 %v451, %v444
    %v683 = vpack.c.bf16 %v452, %v445
    %v684 = vpack.c.bf16 %v453, %v446
    %v685 = vpack.c.bf16 %v454, %v447
    %v686 = vpack.c.bf16 %v455, %v448
    %v687 = vpack.c.bf16 %v463, %v456
    %v688 = vpack.c.bf16 %v464, %v457
    %v689 = vpack.c.bf16 %v465, %v458
    %v690 = vpack.c.bf16 %v466, %v459
    %v691 = vpack.c.bf16 %v467, %v460
    %v692 = vpack.c.bf16 %v468, %v461
    %v693 = vpack.c.bf16 %v469, %v462
    %v694 = vld [vmem:[%s1] sm:$0xf]
    %v695 = vld [vmem:[%s1 + $0x4] sm:$0xf]
    %v696 = vld [vmem:[%s1 + $0x8] sm:$0xf]
    %v697 = vld [vmem:[%s1 + $0xc] sm:$0xf]
    %v698 = vld [vmem:[%s1 + $0x10] sm:$0xf]
    %v699 = vld [vmem:[%s1 + $0x14] sm:$0xf]
    %v700 = vld [vmem:[%s1 + $0x18] sm:$0xf]
    %v701 = vld [vmem:[%s1 + $0x1c] sm:$0xf]
    %v702 = vld [vmem:[%s1 + $0x20] sm:$0xf]
    %v703 = vld [vmem:[%s1 + $0x24] sm:$0xf]
    %v704 = vld [vmem:[%s1 + $0x28] sm:$0xf]
    %v705 = vld [vmem:[%s1 + $0x2c] sm:$0xf]
    %v706 = vld [vmem:[%s1 + $0x30] sm:$0xf]
    %v707 = vld [vmem:[%s1 + $0x34] sm:$0xf]
    %v708 = vld [vmem:[%s1 + $0x38] sm:$0xf]
    %v709 = vld [vmem:[%s1 + $0x3c] sm:$0xf]
    %v710 = vld [vmem:[%s1 + $0x40] sm:$0xf]
    %v711 = vld [vmem:[%s1 + $0x44] sm:$0xf]
    %v712 = vld [vmem:[%s1 + $0x48] sm:$0xf]
    %v713 = vld [vmem:[%s1 + $0x4c] sm:$0xf]
    %v714 = vld [vmem:[%s1 + $0x50] sm:$0xf]
    %v715 = vld [vmem:[%s1 + $0x54] sm:$0xf]
    %v716 = vld [vmem:[%s1 + $0x58] sm:$0xf]
    %v717 = vld [vmem:[%s1 + $0x5c] sm:$0xf]
    %v718 = vld [vmem:[%s1 + $0x60] sm:$0xf]
    %v719 = vld [vmem:[%s1 + $0x64] sm:$0xf]
    %v720 = vld [vmem:[%s1 + $0x68] sm:$0xf]
    %v721 = vld [vmem:[%s1 + $0x6c] sm:$0xf]
    %v722 = vld [vmem:[%s1 + $0x70] sm:$0xf]
    %v723 = vld [vmem:[%s1 + $0x74] sm:$0xf]
    %v724 = vld [vmem:[%s1 + $0x78] sm:$0xf]
    %v725 = vld [vmem:[%s1 + $0x7c] sm:$0xf]
    %v726 = vld [vmem:[%s1 + $0x80] sm:$0xf]
    %v727 = vld [vmem:[%s1 + $0x84] sm:$0xf]
    %v728 = vld [vmem:[%s1 + $0x88] sm:$0xf]
    %v729 = vld [vmem:[%s1 + $0x8c] sm:$0xf]
    %v730 = vld [vmem:[%s1 + $0x90] sm:$0xf]
    %v731 = vld [vmem:[%s1 + $0x94] sm:$0xf]
    %v732 = vld [vmem:[%s1 + $0x98] sm:$0xf]
    %v733 = vld [vmem:[%s1 + $0x9c] sm:$0xf]
    %v734 = vld [vmem:[%s1 + $0xa0] sm:$0xf]
    %v735 = vld [vmem:[%s1 + $0xa4] sm:$0xf]
    %v736 = vld [vmem:[%s1 + $0xa8] sm:$0xf]
    %v737 = vld [vmem:[%s1 + $0xac] sm:$0xf]
    %v738 = vld [vmem:[%s1 + $0xb0] sm:$0xf]
    %v739 = vld [vmem:[%s1 + $0xb4] sm:$0xf]
    %v740 = vld [vmem:[%s1 + $0xb8] sm:$0xf]
    %v741 = vld [vmem:[%s1 + $0xbc] sm:$0xf]
    %v742 = vld [vmem:[%s1 + $0xc0] sm:$0xf]
    %v743 = vld [vmem:[%s1 + $0xc4] sm:$0xf]
    %v744 = vld [vmem:[%s1 + $0xc8] sm:$0xf]
    %v745 = vld [vmem:[%s1 + $0xcc] sm:$0xf]
    %v746 = vld [vmem:[%s1 + $0xd0] sm:$0xf]
    %v747 = vld [vmem:[%s1 + $0xd4] sm:$0xf]
    %v748 = vld [vmem:[%s1 + $0xd8] sm:$0xf]
    %v749 = vld [vmem:[%s1 + $0xdc] sm:$0xf]
    %v750 = vld [vmem:[%s1 + $0xe0] sm:$0xf]
    %v751 = vld [vmem:[%s1 + $0xe4] sm:$0xf]
    %v752 = vld [vmem:[%s1 + $0xe8] sm:$0xf]
    %v753 = vld [vmem:[%s1 + $0xec] sm:$0xf]
    %v754 = vld [vmem:[%s1 + $0xf0] sm:$0xf]
    %v755 = vld [vmem:[%s1 + $0xf4] sm:$0xf]
    %v756 = vld [vmem:[%s1 + $0xf8] sm:$0xf]
    %v757 = vld [vmem:[%s1 + $0xfc] sm:$0xf]
    %v758 = vld [vmem:[%s1 + $0x100] sm:$0xf]
    %v759 = vld [vmem:[%s1 + $0x104] sm:$0xf]
    %v760 = vld [vmem:[%s1 + $0x108] sm:$0xf]
    %v761 = vld [vmem:[%s1 + $0x10c] sm:$0xf]
    %v762 = vld [vmem:[%s1 + $0x110] sm:$0xf]
    %v763 = vld [vmem:[%s1 + $0x114] sm:$0xf]
    %v764 = vld [vmem:[%s1 + $0x118] sm:$0xf]
    %v765 = vld [vmem:[%s1 + $0x11c] sm:$0xf]
    %v766 = vld [vmem:[%s1 + $0x120] sm:$0xf]
    %v767 = vld [vmem:[%s1 + $0x124] sm:$0xf]
    %v768 = vld [vmem:[%s1 + $0x128] sm:$0xf]
    %v769 = vld [vmem:[%s1 + $0x12c] sm:$0xf]
    %v770 = vld [vmem:[%s1 + $0x130] sm:$0xf]
    %v771 = vld [vmem:[%s1 + $0x134] sm:$0xf]
    %v772 = vld [vmem:[%s1 + $0x138] sm:$0xf]
    %v773 = vld [vmem:[%s1 + $0x13c] sm:$0xf]
    %v774 = vld [vmem:[%s1 + $0x140] sm:$0xf]
    %v775 = vld [vmem:[%s1 + $0x144] sm:$0xf]
    %v776 = vld [vmem:[%s1 + $0x148] sm:$0xf]
    %v777 = vld [vmem:[%s1 + $0x14c] sm:$0xf]
    %v778 = vld [vmem:[%s1 + $0x150] sm:$0xf]
    %v779 = vld [vmem:[%s1 + $0x154] sm:$0xf]
    %v780 = vld [vmem:[%s1 + $0x158] sm:$0xf]
    %v781 = vld [vmem:[%s1 + $0x15c] sm:$0xf]
    %v782 = vld [vmem:[%s1 + $0x160] sm:$0xf]
    %v783 = vld [vmem:[%s1 + $0x164] sm:$0xf]
    %v784 = vld [vmem:[%s1 + $0x168] sm:$0xf]
    %v785 = vld [vmem:[%s1 + $0x16c] sm:$0xf]
    %v786 = vld [vmem:[%s1 + $0x170] sm:$0xf]
    %v787 = vld [vmem:[%s1 + $0x174] sm:$0xf]
    %v788 = vld [vmem:[%s1 + $0x178] sm:$0xf]
    %v789 = vld [vmem:[%s1 + $0x17c] sm:$0xf]
    %v790 = vld [vmem:[%s1 + $0x180] sm:$0xf]
    %v791 = vld [vmem:[%s1 + $0x184] sm:$0xf]
    %v792 = vld [vmem:[%s2] sm:$0x1]
    %v794 = vlaneseq
    %v795 = vshrl.u32 %v794, 7
    %v796 = vsub.s32 0, %v795
    %v797 = vrot.slane %v792, %v796
    %v897 = vunpack.c.l.b16 %v694
    %v898 = vunpack.c.l.b16 %v695
    %v899 = vunpack.c.l.b16 %v696
    %v900 = vunpack.c.l.b16 %v697
    %v901 = vunpack.c.l.b16 %v698
    %v902 = vunpack.c.l.b16 %v699
    %v903 = vunpack.c.l.b16 %v700
    %v904 = vunpack.c.l.b16 %v701
    %v905 = vunpack.c.l.b16 %v702
    %v906 = vunpack.c.l.b16 %v703
    %v907 = vunpack.c.l.b16 %v704
    %v908 = vunpack.c.l.b16 %v705
    %v909 = vunpack.c.l.b16 %v706
    %v910 = vunpack.c.l.b16 %v707
    %v911 = vunpack.c.l.b16 %v708
    %v912 = vunpack.c.l.b16 %v709
    %v913 = vunpack.c.l.b16 %v710
    %v914 = vunpack.c.l.b16 %v711
    %v915 = vunpack.c.l.b16 %v712
    %v916 = vunpack.c.l.b16 %v713
    %v917 = vunpack.c.l.b16 %v714
    %v918 = vunpack.c.l.b16 %v715
    %v919 = vunpack.c.l.b16 %v716
    %v920 = vunpack.c.l.b16 %v717
    %v921 = vunpack.c.l.b16 %v718
    %v922 = vunpack.c.l.b16 %v719
    %v923 = vunpack.c.l.b16 %v720
    %v924 = vunpack.c.l.b16 %v721
    %v925 = vunpack.c.l.b16 %v722
    %v926 = vunpack.c.l.b16 %v723
    %v927 = vunpack.c.l.b16 %v724
    %v928 = vunpack.c.l.b16 %v725
    %v929 = vunpack.c.l.b16 %v726
    %v930 = vunpack.c.l.b16 %v727
    %v931 = vunpack.c.l.b16 %v728
    %v932 = vunpack.c.l.b16 %v729
    %v933 = vunpack.c.l.b16 %v730
    %v934 = vunpack.c.l.b16 %v731
    %v935 = vunpack.c.l.b16 %v732
    %v936 = vunpack.c.l.b16 %v733
    %v937 = vunpack.c.l.b16 %v734
    %v938 = vunpack.c.l.b16 %v735
    %v939 = vunpack.c.l.b16 %v736
    %v940 = vunpack.c.l.b16 %v737
    %v941 = vunpack.c.l.b16 %v738
    %v942 = vunpack.c.l.b16 %v739
    %v943 = vunpack.c.l.b16 %v740
    %v944 = vunpack.c.l.b16 %v741
    %v945 = vunpack.c.l.b16 %v742
    %v946 = vunpack.c.l.b16 %v743
    %v947 = vunpack.c.l.b16 %v744
    %v948 = vunpack.c.l.b16 %v745
    %v949 = vunpack.c.l.b16 %v746
    %v950 = vunpack.c.l.b16 %v747
    %v951 = vunpack.c.l.b16 %v748
    %v952 = vunpack.c.l.b16 %v749
    %v953 = vunpack.c.l.b16 %v750
    %v954 = vunpack.c.l.b16 %v751
    %v955 = vunpack.c.l.b16 %v752
    %v956 = vunpack.c.l.b16 %v753
    %v957 = vunpack.c.l.b16 %v754
    %v958 = vunpack.c.l.b16 %v755
    %v959 = vunpack.c.l.b16 %v756
    %v960 = vunpack.c.l.b16 %v757
    %v961 = vunpack.c.l.b16 %v758
    %v962 = vunpack.c.l.b16 %v759
    %v963 = vunpack.c.l.b16 %v760
    %v964 = vunpack.c.l.b16 %v761
    %v965 = vunpack.c.l.b16 %v762
    %v966 = vunpack.c.l.b16 %v763
    %v967 = vunpack.c.l.b16 %v764
    %v968 = vunpack.c.l.b16 %v765
    %v969 = vunpack.c.l.b16 %v766
    %v970 = vunpack.c.l.b16 %v767
    %v971 = vunpack.c.l.b16 %v768
    %v972 = vunpack.c.l.b16 %v769
    %v973 = vunpack.c.l.b16 %v770
    %v974 = vunpack.c.l.b16 %v771
    %v975 = vunpack.c.l.b16 %v772
    %v976 = vunpack.c.l.b16 %v773
    %v977 = vunpack.c.l.b16 %v774
    %v978 = vunpack.c.l.b16 %v775
    %v979 = vunpack.c.l.b16 %v776
    %v980 = vunpack.c.l.b16 %v777
    %v981 = vunpack.c.l.b16 %v778
    %v982 = vunpack.c.l.b16 %v779
    %v983 = vunpack.c.l.b16 %v780
    %v984 = vunpack.c.l.b16 %v781
    %v985 = vunpack.c.l.b16 %v782
    %v986 = vunpack.c.l.b16 %v783
    %v987 = vunpack.c.l.b16 %v784
    %v988 = vunpack.c.l.b16 %v785
    %v989 = vunpack.c.l.b16 %v786
    %v990 = vunpack.c.l.b16 %v787
    %v991 = vunpack.c.l.b16 %v788
    %v992 = vunpack.c.l.b16 %v789
    %v993 = vunpack.c.l.b16 %v790
    %v994 = vunpack.c.l.b16 %v791
    %v995 = vpack.c.b16 %v898, %v897
    %v996 = vpack.c.b16 %v900, %v899
    %v997 = vpack.c.b16 %v902, %v901
    %v998 = vpack.c.b16 %v904, %v903
    %v999 = vpack.c.b16 %v906, %v905
    %v1000 = vpack.c.b16 %v908, %v907
    %v1001 = vpack.c.b16 %v910, %v909
    %v1002 = vpack.c.b16 %v912, %v911
    %v1003 = vpack.c.b16 %v914, %v913
    %v1004 = vpack.c.b16 %v916, %v915
    %v1005 = vpack.c.b16 %v918, %v917
    %v1006 = vpack.c.b16 %v920, %v919
    %v1007 = vpack.c.b16 %v922, %v921
    %v1008 = vpack.c.b16 %v924, %v923
    %v1009 = vpack.c.b16 %v926, %v925
    %v1010 = vpack.c.b16 %v928, %v927
    %v1011 = vpack.c.b16 %v930, %v929
    %v1012 = vpack.c.b16 %v932, %v931
    %v1013 = vpack.c.b16 %v934, %v933
    %v1014 = vpack.c.b16 %v936, %v935
    %v1015 = vpack.c.b16 %v938, %v937
    %v1016 = vpack.c.b16 %v940, %v939
    %v1017 = vpack.c.b16 %v942, %v941
    %v1018 = vpack.c.b16 %v944, %v943
    %v1019 = vpack.c.b16 %v946, %v945
    %v1020 = vpack.c.b16 %v948, %v947
    %v1021 = vpack.c.b16 %v950, %v949
    %v1022 = vpack.c.b16 %v952, %v951
    %v1023 = vpack.c.b16 %v954, %v953
    %v1024 = vpack.c.b16 %v956, %v955
    %v1025 = vpack.c.b16 %v958, %v957
    %v1026 = vpack.c.b16 %v960, %v959
    %v1027 = vpack.c.b16 %v962, %v961
    %v1028 = vpack.c.b16 %v964, %v963
    %v1029 = vpack.c.b16 %v966, %v965
    %v1030 = vpack.c.b16 %v968, %v967
    %v1031 = vpack.c.b16 %v970, %v969
    %v1032 = vpack.c.b16 %v972, %v971
    %v1033 = vpack.c.b16 %v974, %v973
    %v1034 = vpack.c.b16 %v976, %v975
    %v1035 = vpack.c.b16 %v978, %v977
    %v1036 = vpack.c.b16 %v980, %v979
    %v1037 = vpack.c.b16 %v982, %v981
    %v1038 = vpack.c.b16 %v984, %v983
    %v1039 = vpack.c.b16 %v986, %v985
    %v1040 = vpack.c.b16 %v988, %v987
    %v1041 = vpack.c.b16 %v990, %v989
    %v1042 = vpack.c.b16 %v992, %v991
    %v1043 = vpack.c.b16 %v994, %v993
    %vm1093 = vcmask 130048
    %v1095 = vsel %vm1093, %v476, 0
    %v1098 = vsel %vm1093, %v483, 0
    %v1101 = vsel %vm1093, %v490, 0
    %v1104 = vsel %vm1093, %v497, 0
    %v1107 = vsel %vm1093, %v504, 0
    %v1110 = vsel %vm1093, %v511, 0
    %v1113 = vsel %vm1093, %v518, 0
    %v1116 = vsel %vm1093, %v525, 0
    %v1119 = vsel %vm1093, %v532, 0
    %v1122 = vsel %vm1093, %v539, 0
    %v1125 = vsel %vm1093, %v546, 0
    %v1128 = vsel %vm1093, %v553, 0
    %v1131 = vsel %vm1093, %v560, 0
    %v1134 = vsel %vm1093, %v567, 0
    %v1137 = vsel %vm1093, %v574, 0
    %v1140 = vsel %vm1093, %v581, 0
    %v1143 = vsel %vm1093, %v588, 0
    %v1146 = vsel %vm1093, %v595, 0
    %v1149 = vsel %vm1093, %v602, 0
    %v1152 = vsel %vm1093, %v609, 0
    %v1155 = vsel %vm1093, %v616, 0
    %v1158 = vsel %vm1093, %v623, 0
    %v1161 = vsel %vm1093, %v630, 0
    %v1164 = vsel %vm1093, %v637, 0
    %v1167 = vsel %vm1093, %v644, 0
    %v1170 = vsel %vm1093, %v651, 0
    %v1173 = vsel %vm1093, %v658, 0
    %v1176 = vsel %vm1093, %v665, 0
    %v1179 = vsel %vm1093, %v672, 0
    %v1182 = vsel %vm1093, %v679, 0
    %v1185 = vsel %vm1093, %v686, 0
    %v1188 = vsel %vm1093, %v693, 0
    %1190 = vmatprep.subr.bf16.mxu0 0
    %1191 = vmatpush1.bf16.msra.mxu0 %v1002
    %1192 = vmatprep.subr.bf16.mxu0 0
    %1193 = vmatpush1.bf16.msra.mxu0 %v1001
    %1194 = vmatprep.subr.bf16.mxu0 0
    %1195 = vmatpush1.bf16.msra.mxu0 %v1000
    %1196 = vmatprep.subr.bf16.mxu0 0
    %1197 = vmatpush1.bf16.msra.mxu0 %v999
    %1198 = vmatprep.subr.bf16.mxu0 0
    %1199 = vmatpush1.bf16.msra.mxu0 %v998
    %1200 = vmatprep.subr.bf16.mxu0 0
    %1201 = vmatpush1.bf16.msra.mxu0 %v997
    %1202 = vmatprep.subr.bf16.mxu0 0
    %1203 = vmatpush1.bf16.msra.mxu0 %v996
    %1204 = vmatprep.subr.bf16.mxu0 0
    %1205 = vmatpush1.bf16.msra.mxu0 %v995
    %1206 = vmatprep.subr.bf16.mxu0 0
    %1207 = vmatpush2.bf16.msra.mxu0 %v1010
    %1208 = vmatprep.subr.bf16.mxu0 0
    %1209 = vmatpush2.bf16.msra.mxu0 %v1009
    %1210 = vmatprep.subr.bf16.mxu0 0
    %1211 = vmatpush2.bf16.msra.mxu0 %v1008
    %1212 = vmatprep.subr.bf16.mxu0 0
    %1213 = vmatpush2.bf16.msra.mxu0 %v1007
    %1214 = vmatprep.subr.bf16.mxu0 0
    %1215 = vmatpush2.bf16.msra.mxu0 %v1006
    %1216 = vmatprep.subr.bf16.mxu0 0
    %1217 = vmatpush2.bf16.msra.mxu0 %v1005
    %1218 = vmatprep.subr.bf16.mxu0 0
    %1219 = vmatpush2.bf16.msra.mxu0 %v1004
    %1220 = vmatprep.subr.bf16.mxu0 0
    %1221 = vmatpush2.bf16.msra.mxu0 %v1003
    %1222 = vmatprep.mubr.bf16.mxu0 %v471
    %1223 = vmatmul.mubr.bf16.gmra.mxu0 %v470
    %v1224 = vpop.f32.mrf.mxu0
    %v1225 = vadd.f32 %v797, %v1224
    %v1226 = vpop.f32.mrf.mxu0
    %v1227 = vpop.f32.mrf.mxu0
    %v1228 = vadd.f32 %v797, %v1227
    %v1229 = vpop.f32.mrf.mxu0
    %1230 = vmatprep.mubr.bf16.mxu0 %v478
    %1231 = vmatmul.mubr.bf16.gmra.mxu0 %v477
    %v1232 = vpop.f32.mrf.mxu0
    %v1233 = vadd.f32 %v797, %v1232
    %v1234 = vpop.f32.mrf.mxu0
    %v1235 = vpop.f32.mrf.mxu0
    %v1236 = vadd.f32 %v797, %v1235
    %v1237 = vpop.f32.mrf.mxu0
    %1238 = vmatprep.mubr.bf16.mxu0 %v485
    %1239 = vmatmul.mubr.bf16.gmra.mxu0 %v484
    %v1240 = vpop.f32.mrf.mxu0
    %v1241 = vadd.f32 %v797, %v1240
    %v1242 = vpop.f32.mrf.mxu0
    %v1243 = vpop.f32.mrf.mxu0
    %v1244 = vadd.f32 %v797, %v1243
    %v1245 = vpop.f32.mrf.mxu0
    %1246 = vmatprep.mubr.bf16.mxu0 %v492
    %1247 = vmatmul.mubr.bf16.gmra.mxu0 %v491
    %v1248 = vpop.f32.mrf.mxu0
    %v1249 = vadd.f32 %v797, %v1248
    %v1250 = vpop.f32.mrf.mxu0
    %v1251 = vpop.f32.mrf.mxu0
    %v1252 = vadd.f32 %v797, %v1251
    %v1253 = vpop.f32.mrf.mxu0
    %1254 = vmatprep.mubr.bf16.mxu0 %v499
    %1255 = vmatmul.mubr.bf16.gmra.mxu0 %v498
    %v1256 = vpop.f32.mrf.mxu0
    %v1257 = vadd.f32 %v797, %v1256
    %v1258 = vpop.f32.mrf.mxu0
    %v1259 = vpop.f32.mrf.mxu0
    %v1260 = vadd.f32 %v797, %v1259
    %v1261 = vpop.f32.mrf.mxu0
    %1262 = vmatprep.mubr.bf16.mxu0 %v506
    %1263 = vmatmul.mubr.bf16.gmra.mxu0 %v505
    %v1264 = vpop.f32.mrf.mxu0
    %v1265 = vadd.f32 %v797, %v1264
    %v1266 = vpop.f32.mrf.mxu0
    %v1267 = vpop.f32.mrf.mxu0
    %v1268 = vadd.f32 %v797, %v1267
    %v1269 = vpop.f32.mrf.mxu0
    %1270 = vmatprep.mubr.bf16.mxu0 %v513
    %1271 = vmatmul.mubr.bf16.gmra.mxu0 %v512
    %v1272 = vpop.f32.mrf.mxu0
    %v1273 = vadd.f32 %v797, %v1272
    %v1274 = vpop.f32.mrf.mxu0
    %v1275 = vpop.f32.mrf.mxu0
    %v1276 = vadd.f32 %v797, %v1275
    %v1277 = vpop.f32.mrf.mxu0
    %1278 = vmatprep.mubr.bf16.mxu0 %v520
    %1279 = vmatmul.mubr.bf16.gmra.mxu0 %v519
    %v1280 = vpop.f32.mrf.mxu0
    %v1281 = vadd.f32 %v797, %v1280
    %v1282 = vpop.f32.mrf.mxu0
    %v1283 = vpop.f32.mrf.mxu0
    %v1284 = vadd.f32 %v797, %v1283
    %v1285 = vpop.f32.mrf.mxu0
    %1286 = vmatprep.mubr.bf16.mxu0 %v527
    %1287 = vmatmul.mubr.bf16.gmra.mxu0 %v526
    %v1288 = vpop.f32.mrf.mxu0
    %v1289 = vadd.f32 %v797, %v1288
    %v1290 = vpop.f32.mrf.mxu0
    %v1291 = vpop.f32.mrf.mxu0
    %v1292 = vadd.f32 %v797, %v1291
    %v1293 = vpop.f32.mrf.mxu0
    %1294 = vmatprep.mubr.bf16.mxu0 %v534
    %1295 = vmatmul.mubr.bf16.gmra.mxu0 %v533
    %v1296 = vpop.f32.mrf.mxu0
    %v1297 = vadd.f32 %v797, %v1296
    %v1298 = vpop.f32.mrf.mxu0
    %v1299 = vpop.f32.mrf.mxu0
    %v1300 = vadd.f32 %v797, %v1299
    %v1301 = vpop.f32.mrf.mxu0
    %1302 = vmatprep.mubr.bf16.mxu0 %v541
    %1303 = vmatmul.mubr.bf16.gmra.mxu0 %v540
    %v1304 = vpop.f32.mrf.mxu0
    %v1305 = vadd.f32 %v797, %v1304
    %v1306 = vpop.f32.mrf.mxu0
    %v1307 = vpop.f32.mrf.mxu0
    %v1308 = vadd.f32 %v797, %v1307
    %v1309 = vpop.f32.mrf.mxu0
    %1310 = vmatprep.mubr.bf16.mxu0 %v548
    %1311 = vmatmul.mubr.bf16.gmra.mxu0 %v547
    %v1312 = vpop.f32.mrf.mxu0
    %v1313 = vadd.f32 %v797, %v1312
    %v1314 = vpop.f32.mrf.mxu0
    %v1315 = vpop.f32.mrf.mxu0
    %v1316 = vadd.f32 %v797, %v1315
    %v1317 = vpop.f32.mrf.mxu0
    %1318 = vmatprep.mubr.bf16.mxu0 %v555
    %1319 = vmatmul.mubr.bf16.gmra.mxu0 %v554
    %v1320 = vpop.f32.mrf.mxu0
    %v1321 = vadd.f32 %v797, %v1320
    %v1322 = vpop.f32.mrf.mxu0
    %v1323 = vpop.f32.mrf.mxu0
    %v1324 = vadd.f32 %v797, %v1323
    %v1325 = vpop.f32.mrf.mxu0
    %1326 = vmatprep.mubr.bf16.mxu0 %v562
    %1327 = vmatmul.mubr.bf16.gmra.mxu0 %v561
    %v1328 = vpop.f32.mrf.mxu0
    %v1329 = vadd.f32 %v797, %v1328
    %v1330 = vpop.f32.mrf.mxu0
    %v1331 = vpop.f32.mrf.mxu0
    %v1332 = vadd.f32 %v797, %v1331
    %v1333 = vpop.f32.mrf.mxu0
    %1334 = vmatprep.mubr.bf16.mxu0 %v569
    %1335 = vmatmul.mubr.bf16.gmra.mxu0 %v568
    %v1336 = vpop.f32.mrf.mxu0
    %v1337 = vadd.f32 %v797, %v1336
    %v1338 = vpop.f32.mrf.mxu0
    %v1339 = vpop.f32.mrf.mxu0
    %v1340 = vadd.f32 %v797, %v1339
    %v1341 = vpop.f32.mrf.mxu0
    %1342 = vmatprep.mubr.bf16.mxu0 %v576
    %1343 = vmatmul.mubr.bf16.gmra.mxu0 %v575
    %v1344 = vpop.f32.mrf.mxu0
    %v1345 = vadd.f32 %v797, %v1344
    %v1346 = vpop.f32.mrf.mxu0
    %v1347 = vpop.f32.mrf.mxu0
    %v1348 = vadd.f32 %v797, %v1347
    %v1349 = vpop.f32.mrf.mxu0
    %1350 = vmatprep.mubr.bf16.mxu0 %v583
    %1351 = vmatmul.mubr.bf16.gmra.mxu0 %v582
    %v1352 = vpop.f32.mrf.mxu0
    %v1353 = vadd.f32 %v797, %v1352
    %v1354 = vpop.f32.mrf.mxu0
    %v1355 = vpop.f32.mrf.mxu0
    %v1356 = vadd.f32 %v797, %v1355
    %v1357 = vpop.f32.mrf.mxu0
    %1358 = vmatprep.mubr.bf16.mxu0 %v590
    %1359 = vmatmul.mubr.bf16.gmra.mxu0 %v589
    %v1360 = vpop.f32.mrf.mxu0
    %v1361 = vadd.f32 %v797, %v1360
    %v1362 = vpop.f32.mrf.mxu0
    %v1363 = vpop.f32.mrf.mxu0
    %v1364 = vadd.f32 %v797, %v1363
    %v1365 = vpop.f32.mrf.mxu0
    %1366 = vmatprep.mubr.bf16.mxu0 %v597
    %1367 = vmatmul.mubr.bf16.gmra.mxu0 %v596
    %v1368 = vpop.f32.mrf.mxu0
    %v1369 = vadd.f32 %v797, %v1368
    %v1370 = vpop.f32.mrf.mxu0
    %v1371 = vpop.f32.mrf.mxu0
    %v1372 = vadd.f32 %v797, %v1371
    %v1373 = vpop.f32.mrf.mxu0
    %1374 = vmatprep.mubr.bf16.mxu0 %v604
    %1375 = vmatmul.mubr.bf16.gmra.mxu0 %v603
    %v1376 = vpop.f32.mrf.mxu0
    %v1377 = vadd.f32 %v797, %v1376
    %v1378 = vpop.f32.mrf.mxu0
    %v1379 = vpop.f32.mrf.mxu0
    %v1380 = vadd.f32 %v797, %v1379
    %v1381 = vpop.f32.mrf.mxu0
    %1382 = vmatprep.mubr.bf16.mxu0 %v611
    %1383 = vmatmul.mubr.bf16.gmra.mxu0 %v610
    %v1384 = vpop.f32.mrf.mxu0
    %v1385 = vadd.f32 %v797, %v1384
    %v1386 = vpop.f32.mrf.mxu0
    %v1387 = vpop.f32.mrf.mxu0
    %v1388 = vadd.f32 %v797, %v1387
    %v1389 = vpop.f32.mrf.mxu0
    %1390 = vmatprep.mubr.bf16.mxu0 %v618
    %1391 = vmatmul.mubr.bf16.gmra.mxu0 %v617
    %v1392 = vpop.f32.mrf.mxu0
    %v1393 = vadd.f32 %v797, %v1392
    %v1394 = vpop.f32.mrf.mxu0
    %v1395 = vpop.f32.mrf.mxu0
    %v1396 = vadd.f32 %v797, %v1395
    %v1397 = vpop.f32.mrf.mxu0
    %1398 = vmatprep.mubr.bf16.mxu0 %v625
    %1399 = vmatmul.mubr.bf16.gmra.mxu0 %v624
    %v1400 = vpop.f32.mrf.mxu0
    %v1401 = vadd.f32 %v797, %v1400
    %v1402 = vpop.f32.mrf.mxu0
    %v1403 = vpop.f32.mrf.mxu0
    %v1404 = vadd.f32 %v797, %v1403
    %v1405 = vpop.f32.mrf.mxu0
    %1406 = vmatprep.mubr.bf16.mxu0 %v632
    %1407 = vmatmul.mubr.bf16.gmra.mxu0 %v631
    %v1408 = vpop.f32.mrf.mxu0
    %v1409 = vadd.f32 %v797, %v1408
    %v1410 = vpop.f32.mrf.mxu0
    %v1411 = vpop.f32.mrf.mxu0
    %v1412 = vadd.f32 %v797, %v1411
    %v1413 = vpop.f32.mrf.mxu0
    %1414 = vmatprep.mubr.bf16.mxu0 %v639
    %1415 = vmatmul.mubr.bf16.gmra.mxu0 %v638
    %v1416 = vpop.f32.mrf.mxu0
    %v1417 = vadd.f32 %v797, %v1416
    %v1418 = vpop.f32.mrf.mxu0
    %v1419 = vpop.f32.mrf.mxu0
    %v1420 = vadd.f32 %v797, %v1419
    %v1421 = vpop.f32.mrf.mxu0
    %1422 = vmatprep.mubr.bf16.mxu0 %v646
    %1423 = vmatmul.mubr.bf16.gmra.mxu0 %v645
    %v1424 = vpop.f32.mrf.mxu0
    %v1425 = vadd.f32 %v797, %v1424
    %v1426 = vpop.f32.mrf.mxu0
    %v1427 = vpop.f32.mrf.mxu0
    %v1428 = vadd.f32 %v797, %v1427
    %v1429 = vpop.f32.mrf.mxu0
    %1430 = vmatprep.mubr.bf16.mxu0 %v653
    %1431 = vmatmul.mubr.bf16.gmra.mxu0 %v652
    %v1432 = vpop.f32.mrf.mxu0
    %v1433 = vadd.f32 %v797, %v1432
    %v1434 = vpop.f32.mrf.mxu0
    %v1435 = vpop.f32.mrf.mxu0
    %v1436 = vadd.f32 %v797, %v1435
    %v1437 = vpop.f32.mrf.mxu0
    %1438 = vmatprep.mubr.bf16.mxu0 %v660
    %1439 = vmatmul.mubr.bf16.gmra.mxu0 %v659
    %v1440 = vpop.f32.mrf.mxu0
    %v1441 = vadd.f32 %v797, %v1440
    %v1442 = vpop.f32.mrf.mxu0
    %v1443 = vpop.f32.mrf.mxu0
    %v1444 = vadd.f32 %v797, %v1443
    %v1445 = vpop.f32.mrf.mxu0
    %1446 = vmatprep.mubr.bf16.mxu0 %v667
    %1447 = vmatmul.mubr.bf16.gmra.mxu0 %v666
    %v1448 = vpop.f32.mrf.mxu0
    %v1449 = vadd.f32 %v797, %v1448
    %v1450 = vpop.f32.mrf.mxu0
    %v1451 = vpop.f32.mrf.mxu0
    %v1452 = vadd.f32 %v797, %v1451
    %v1453 = vpop.f32.mrf.mxu0
    %1454 = vmatprep.mubr.bf16.mxu0 %v674
    %1455 = vmatmul.mubr.bf16.gmra.mxu0 %v673
    %v1456 = vpop.f32.mrf.mxu0
    %v1457 = vadd.f32 %v797, %v1456
    %v1458 = vpop.f32.mrf.mxu0
    %v1459 = vpop.f32.mrf.mxu0
    %v1460 = vadd.f32 %v797, %v1459
    %v1461 = vpop.f32.mrf.mxu0
    %1462 = vmatprep.mubr.bf16.mxu0 %v681
    %1463 = vmatmul.mubr.bf16.gmra.mxu0 %v680
    %v1464 = vpop.f32.mrf.mxu0
    %v1465 = vadd.f32 %v797, %v1464
    %v1466 = vpop.f32.mrf.mxu0
    %v1467 = vpop.f32.mrf.mxu0
    %v1468 = vadd.f32 %v797, %v1467
    %v1469 = vpop.f32.mrf.mxu0
    %1470 = vmatprep.mubr.bf16.mxu0 %v688
    %1471 = vmatmul.mubr.bf16.gmra.mxu0 %v687
    %v1472 = vpop.f32.mrf.mxu0
    %v1473 = vadd.f32 %v797, %v1472
    %v1474 = vpop.f32.mrf.mxu0
    %v1475 = vpop.f32.mrf.mxu0
    %v1476 = vadd.f32 %v797, %v1475
    %v1477 = vpop.f32.mrf.mxu0
    %1478 = vdwg.mxu0
    %1479 = vmatprep.subr.bf16.mxu0 0
    %1480 = vmatpush1.bf16.msra.mxu0 %v1018
    %1481 = vmatprep.subr.bf16.mxu0 0
    %1482 = vmatpush1.bf16.msra.mxu0 %v1017
    %1483 = vmatprep.subr.bf16.mxu0 0
    %1484 = vmatpush1.bf16.msra.mxu0 %v1016
    %1485 = vmatprep.subr.bf16.mxu0 0
    %1486 = vmatpush1.bf16.msra.mxu0 %v1015
    %1487 = vmatprep.subr.bf16.mxu0 0
    %1488 = vmatpush1.bf16.msra.mxu0 %v1014
    %1489 = vmatprep.subr.bf16.mxu0 0
    %1490 = vmatpush1.bf16.msra.mxu0 %v1013
    %1491 = vmatprep.subr.bf16.mxu0 0
    %1492 = vmatpush1.bf16.msra.mxu0 %v1012
    %1493 = vmatprep.subr.bf16.mxu0 0
    %1494 = vmatpush1.bf16.msra.mxu0 %v1011
    %1495 = vmatprep.subr.bf16.mxu0 0
    %1496 = vmatpush2.bf16.msra.mxu0 %v1026
    %1497 = vmatprep.subr.bf16.mxu0 0
    %1498 = vmatpush2.bf16.msra.mxu0 %v1025
    %1499 = vmatprep.subr.bf16.mxu0 0
    %1500 = vmatpush2.bf16.msra.mxu0 %v1024
    %1501 = vmatprep.subr.bf16.mxu0 0
    %1502 = vmatpush2.bf16.msra.mxu0 %v1023
    %1503 = vmatprep.subr.bf16.mxu0 0
    %1504 = vmatpush2.bf16.msra.mxu0 %v1022
    %1505 = vmatprep.subr.bf16.mxu0 0
    %1506 = vmatpush2.bf16.msra.mxu0 %v1021
    %1507 = vmatprep.subr.bf16.mxu0 0
    %1508 = vmatpush2.bf16.msra.mxu0 %v1020
    %1509 = vmatprep.subr.bf16.mxu0 0
    %1510 = vmatpush2.bf16.msra.mxu0 %v1019
    %1511 = vmatprep.mubr.bf16.mxu0 %v473
    %1512 = vmatmul.mubr.bf16.gmra.mxu0 %v472
    %v1513 = vpop.f32.mrf.mxu0
    %v1514 = vadd.f32 %v1225, %v1513
    %v1515 = vpop.f32.mrf.mxu0
    %v1516 = vpop.f32.mrf.mxu0
    %v1517 = vadd.f32 %v1228, %v1516
    %v1518 = vpop.f32.mrf.mxu0
    %1519 = vmatprep.mubr.bf16.mxu0 %v480
    %1520 = vmatmul.mubr.bf16.gmra.mxu0 %v479
    %v1521 = vpop.f32.mrf.mxu0
    %v1522 = vadd.f32 %v1233, %v1521
    %v1523 = vpop.f32.mrf.mxu0
    %v1524 = vpop.f32.mrf.mxu0
    %v1525 = vadd.f32 %v1236, %v1524
    %v1526 = vpop.f32.mrf.mxu0
    %1527 = vmatprep.mubr.bf16.mxu0 %v487
    %1528 = vmatmul.mubr.bf16.gmra.mxu0 %v486
    %v1529 = vpop.f32.mrf.mxu0
    %v1530 = vadd.f32 %v1241, %v1529
    %v1531 = vpop.f32.mrf.mxu0
    %v1532 = vpop.f32.mrf.mxu0
    %v1533 = vadd.f32 %v1244, %v1532
    %v1534 = vpop.f32.mrf.mxu0
    %1535 = vmatprep.mubr.bf16.mxu0 %v494
    %1536 = vmatmul.mubr.bf16.gmra.mxu0 %v493
    %v1537 = vpop.f32.mrf.mxu0
    %v1538 = vadd.f32 %v1249, %v1537
    %v1539 = vpop.f32.mrf.mxu0
    %v1540 = vpop.f32.mrf.mxu0
    %v1541 = vadd.f32 %v1252, %v1540
    %v1542 = vpop.f32.mrf.mxu0
    %1543 = vmatprep.mubr.bf16.mxu0 %v501
    %1544 = vmatmul.mubr.bf16.gmra.mxu0 %v500
    %v1545 = vpop.f32.mrf.mxu0
    %v1546 = vadd.f32 %v1257, %v1545
    %v1547 = vpop.f32.mrf.mxu0
    %v1548 = vpop.f32.mrf.mxu0
    %v1549 = vadd.f32 %v1260, %v1548
    %v1550 = vpop.f32.mrf.mxu0
    %1551 = vmatprep.mubr.bf16.mxu0 %v508
    %1552 = vmatmul.mubr.bf16.gmra.mxu0 %v507
    %v1553 = vpop.f32.mrf.mxu0
    %v1554 = vadd.f32 %v1265, %v1553
    %v1555 = vpop.f32.mrf.mxu0
    %v1556 = vpop.f32.mrf.mxu0
    %v1557 = vadd.f32 %v1268, %v1556
    %v1558 = vpop.f32.mrf.mxu0
    %1559 = vmatprep.mubr.bf16.mxu0 %v515
    %1560 = vmatmul.mubr.bf16.gmra.mxu0 %v514
    %v1561 = vpop.f32.mrf.mxu0
    %v1562 = vadd.f32 %v1273, %v1561
    %v1563 = vpop.f32.mrf.mxu0
    %v1564 = vpop.f32.mrf.mxu0
    %v1565 = vadd.f32 %v1276, %v1564
    %v1566 = vpop.f32.mrf.mxu0
    %1567 = vmatprep.mubr.bf16.mxu0 %v522
    %1568 = vmatmul.mubr.bf16.gmra.mxu0 %v521
    %v1569 = vpop.f32.mrf.mxu0
    %v1570 = vadd.f32 %v1281, %v1569
    %v1571 = vpop.f32.mrf.mxu0
    %v1572 = vpop.f32.mrf.mxu0
    %v1573 = vadd.f32 %v1284, %v1572
    %v1574 = vpop.f32.mrf.mxu0
    %1575 = vmatprep.mubr.bf16.mxu0 %v529
    %1576 = vmatmul.mubr.bf16.gmra.mxu0 %v528
    %v1577 = vpop.f32.mrf.mxu0
    %v1578 = vadd.f32 %v1289, %v1577
    %v1579 = vpop.f32.mrf.mxu0
    %v1580 = vpop.f32.mrf.mxu0
    %v1581 = vadd.f32 %v1292, %v1580
    %v1582 = vpop.f32.mrf.mxu0
    %1583 = vmatprep.mubr.bf16.mxu0 %v536
    %1584 = vmatmul.mubr.bf16.gmra.mxu0 %v535
    %v1585 = vpop.f32.mrf.mxu0
    %v1586 = vadd.f32 %v1297, %v1585
    %v1587 = vpop.f32.mrf.mxu0
    %v1588 = vpop.f32.mrf.mxu0
    %v1589 = vadd.f32 %v1300, %v1588
    %v1590 = vpop.f32.mrf.mxu0
    %1591 = vmatprep.mubr.bf16.mxu0 %v543
    %1592 = vmatmul.mubr.bf16.gmra.mxu0 %v542
    %v1593 = vpop.f32.mrf.mxu0
    %v1594 = vadd.f32 %v1305, %v1593
    %v1595 = vpop.f32.mrf.mxu0
    %v1596 = vpop.f32.mrf.mxu0
    %v1597 = vadd.f32 %v1308, %v1596
    %v1598 = vpop.f32.mrf.mxu0
    %1599 = vmatprep.mubr.bf16.mxu0 %v550
    %1600 = vmatmul.mubr.bf16.gmra.mxu0 %v549
    %v1601 = vpop.f32.mrf.mxu0
    %v1602 = vadd.f32 %v1313, %v1601
    %v1603 = vpop.f32.mrf.mxu0
    %v1604 = vpop.f32.mrf.mxu0
    %v1605 = vadd.f32 %v1316, %v1604
    %v1606 = vpop.f32.mrf.mxu0
    %1607 = vmatprep.mubr.bf16.mxu0 %v557
    %1608 = vmatmul.mubr.bf16.gmra.mxu0 %v556
    %v1609 = vpop.f32.mrf.mxu0
    %v1610 = vadd.f32 %v1321, %v1609
    %v1611 = vpop.f32.mrf.mxu0
    %v1612 = vpop.f32.mrf.mxu0
    %v1613 = vadd.f32 %v1324, %v1612
    %v1614 = vpop.f32.mrf.mxu0
    %1615 = vmatprep.mubr.bf16.mxu0 %v564
    %1616 = vmatmul.mubr.bf16.gmra.mxu0 %v563
    %v1617 = vpop.f32.mrf.mxu0
    %v1618 = vadd.f32 %v1329, %v1617
    %v1619 = vpop.f32.mrf.mxu0
    %v1620 = vpop.f32.mrf.mxu0
    %v1621 = vadd.f32 %v1332, %v1620
    %v1622 = vpop.f32.mrf.mxu0
    %1623 = vmatprep.mubr.bf16.mxu0 %v571
    %1624 = vmatmul.mubr.bf16.gmra.mxu0 %v570
    %v1625 = vpop.f32.mrf.mxu0
    %v1626 = vadd.f32 %v1337, %v1625
    %v1627 = vpop.f32.mrf.mxu0
    %v1628 = vpop.f32.mrf.mxu0
    %v1629 = vadd.f32 %v1340, %v1628
    %v1630 = vpop.f32.mrf.mxu0
    %1631 = vmatprep.mubr.bf16.mxu0 %v578
    %1632 = vmatmul.mubr.bf16.gmra.mxu0 %v577
    %v1633 = vpop.f32.mrf.mxu0
    %v1634 = vadd.f32 %v1345, %v1633
    %v1635 = vpop.f32.mrf.mxu0
    %v1636 = vpop.f32.mrf.mxu0
    %v1637 = vadd.f32 %v1348, %v1636
    %v1638 = vpop.f32.mrf.mxu0
    %1639 = vmatprep.mubr.bf16.mxu0 %v585
    %1640 = vmatmul.mubr.bf16.gmra.mxu0 %v584
    %v1641 = vpop.f32.mrf.mxu0
    %v1642 = vadd.f32 %v1353, %v1641
    %v1643 = vpop.f32.mrf.mxu0
    %v1644 = vpop.f32.mrf.mxu0
    %v1645 = vadd.f32 %v1356, %v1644
    %v1646 = vpop.f32.mrf.mxu0
    %1647 = vmatprep.mubr.bf16.mxu0 %v592
    %1648 = vmatmul.mubr.bf16.gmra.mxu0 %v591
    %v1649 = vpop.f32.mrf.mxu0
    %v1650 = vadd.f32 %v1361, %v1649
    %v1651 = vpop.f32.mrf.mxu0
    %v1652 = vpop.f32.mrf.mxu0
    %v1653 = vadd.f32 %v1364, %v1652
    %v1654 = vpop.f32.mrf.mxu0
    %1655 = vmatprep.mubr.bf16.mxu0 %v599
    %1656 = vmatmul.mubr.bf16.gmra.mxu0 %v598
    %v1657 = vpop.f32.mrf.mxu0
    %v1658 = vadd.f32 %v1369, %v1657
    %v1659 = vpop.f32.mrf.mxu0
    %v1660 = vpop.f32.mrf.mxu0
    %v1661 = vadd.f32 %v1372, %v1660
    %v1662 = vpop.f32.mrf.mxu0
    %1663 = vmatprep.mubr.bf16.mxu0 %v606
    %1664 = vmatmul.mubr.bf16.gmra.mxu0 %v605
    %v1665 = vpop.f32.mrf.mxu0
    %v1666 = vadd.f32 %v1377, %v1665
    %v1667 = vpop.f32.mrf.mxu0
    %v1668 = vpop.f32.mrf.mxu0
    %v1669 = vadd.f32 %v1380, %v1668
    %v1670 = vpop.f32.mrf.mxu0
    %1671 = vmatprep.mubr.bf16.mxu0 %v613
    %1672 = vmatmul.mubr.bf16.gmra.mxu0 %v612
    %v1673 = vpop.f32.mrf.mxu0
    %v1674 = vadd.f32 %v1385, %v1673
    %v1675 = vpop.f32.mrf.mxu0
    %v1676 = vpop.f32.mrf.mxu0
    %v1677 = vadd.f32 %v1388, %v1676
    %v1678 = vpop.f32.mrf.mxu0
    %1679 = vmatprep.mubr.bf16.mxu0 %v620
    %1680 = vmatmul.mubr.bf16.gmra.mxu0 %v619
    %v1681 = vpop.f32.mrf.mxu0
    %v1682 = vadd.f32 %v1393, %v1681
    %v1683 = vpop.f32.mrf.mxu0
    %v1684 = vpop.f32.mrf.mxu0
    %v1685 = vadd.f32 %v1396, %v1684
    %v1686 = vpop.f32.mrf.mxu0
    %1687 = vmatprep.mubr.bf16.mxu0 %v627
    %1688 = vmatmul.mubr.bf16.gmra.mxu0 %v626
    %v1689 = vpop.f32.mrf.mxu0
    %v1690 = vadd.f32 %v1401, %v1689
    %v1691 = vpop.f32.mrf.mxu0
    %v1692 = vpop.f32.mrf.mxu0
    %v1693 = vadd.f32 %v1404, %v1692
    %v1694 = vpop.f32.mrf.mxu0
    %1695 = vmatprep.mubr.bf16.mxu0 %v634
    %1696 = vmatmul.mubr.bf16.gmra.mxu0 %v633
    %v1697 = vpop.f32.mrf.mxu0
    %v1698 = vadd.f32 %v1409, %v1697
    %v1699 = vpop.f32.mrf.mxu0
    %v1700 = vpop.f32.mrf.mxu0
    %v1701 = vadd.f32 %v1412, %v1700
    %v1702 = vpop.f32.mrf.mxu0
    %1703 = vmatprep.mubr.bf16.mxu0 %v641
    %1704 = vmatmul.mubr.bf16.gmra.mxu0 %v640
    %v1705 = vpop.f32.mrf.mxu0
    %v1706 = vadd.f32 %v1417, %v1705
    %v1707 = vpop.f32.mrf.mxu0
    %v1708 = vpop.f32.mrf.mxu0
    %v1709 = vadd.f32 %v1420, %v1708
    %v1710 = vpop.f32.mrf.mxu0
    %1711 = vmatprep.mubr.bf16.mxu0 %v648
    %1712 = vmatmul.mubr.bf16.gmra.mxu0 %v647
    %v1713 = vpop.f32.mrf.mxu0
    %v1714 = vadd.f32 %v1425, %v1713
    %v1715 = vpop.f32.mrf.mxu0
    %v1716 = vpop.f32.mrf.mxu0
    %v1717 = vadd.f32 %v1428, %v1716
    %v1718 = vpop.f32.mrf.mxu0
    %1719 = vmatprep.mubr.bf16.mxu0 %v655
    %1720 = vmatmul.mubr.bf16.gmra.mxu0 %v654
    %v1721 = vpop.f32.mrf.mxu0
    %v1722 = vadd.f32 %v1433, %v1721
    %v1723 = vpop.f32.mrf.mxu0
    %v1724 = vpop.f32.mrf.mxu0
    %v1725 = vadd.f32 %v1436, %v1724
    %v1726 = vpop.f32.mrf.mxu0
    %1727 = vmatprep.mubr.bf16.mxu0 %v662
    %1728 = vmatmul.mubr.bf16.gmra.mxu0 %v661
    %v1729 = vpop.f32.mrf.mxu0
    %v1730 = vadd.f32 %v1441, %v1729
    %v1731 = vpop.f32.mrf.mxu0
    %v1732 = vpop.f32.mrf.mxu0
    %v1733 = vadd.f32 %v1444, %v1732
    %v1734 = vpop.f32.mrf.mxu0
    %1735 = vmatprep.mubr.bf16.mxu0 %v669
    %1736 = vmatmul.mubr.bf16.gmra.mxu0 %v668
    %v1737 = vpop.f32.mrf.mxu0
    %v1738 = vadd.f32 %v1449, %v1737
    %v1739 = vpop.f32.mrf.mxu0
    %v1740 = vpop.f32.mrf.mxu0
    %v1741 = vadd.f32 %v1452, %v1740
    %v1742 = vpop.f32.mrf.mxu0
    %1743 = vmatprep.mubr.bf16.mxu0 %v676
    %1744 = vmatmul.mubr.bf16.gmra.mxu0 %v675
    %v1745 = vpop.f32.mrf.mxu0
    %v1746 = vadd.f32 %v1457, %v1745
    %v1747 = vpop.f32.mrf.mxu0
    %v1748 = vpop.f32.mrf.mxu0
    %v1749 = vadd.f32 %v1460, %v1748
    %v1750 = vpop.f32.mrf.mxu0
    %1751 = vmatprep.mubr.bf16.mxu0 %v683
    %1752 = vmatmul.mubr.bf16.gmra.mxu0 %v682
    %v1753 = vpop.f32.mrf.mxu0
    %v1754 = vadd.f32 %v1465, %v1753
    %v1755 = vpop.f32.mrf.mxu0
    %v1756 = vpop.f32.mrf.mxu0
    %v1757 = vadd.f32 %v1468, %v1756
    %v1758 = vpop.f32.mrf.mxu0
    %1759 = vmatprep.mubr.bf16.mxu0 %v690
    %1760 = vmatmul.mubr.bf16.gmra.mxu0 %v689
    %v1761 = vpop.f32.mrf.mxu0
    %v1762 = vadd.f32 %v1473, %v1761
    %v1763 = vpop.f32.mrf.mxu0
    %v1764 = vpop.f32.mrf.mxu0
    %v1765 = vadd.f32 %v1476, %v1764
    %v1766 = vpop.f32.mrf.mxu0
    %1767 = vdwg.mxu0
    %1768 = vmatprep.subr.bf16.mxu0 0
    %1769 = vmatpush1.bf16.msra.mxu0 %v1034
    %1770 = vmatprep.subr.bf16.mxu0 0
    %1771 = vmatpush1.bf16.msra.mxu0 %v1033
    %1772 = vmatprep.subr.bf16.mxu0 0
    %1773 = vmatpush1.bf16.msra.mxu0 %v1032
    %1774 = vmatprep.subr.bf16.mxu0 0
    %1775 = vmatpush1.bf16.msra.mxu0 %v1031
    %1776 = vmatprep.subr.bf16.mxu0 0
    %1777 = vmatpush1.bf16.msra.mxu0 %v1030
    %1778 = vmatprep.subr.bf16.mxu0 0
    %1779 = vmatpush1.bf16.msra.mxu0 %v1029
    %1780 = vmatprep.subr.bf16.mxu0 0
    %1781 = vmatpush1.bf16.msra.mxu0 %v1028
    %1782 = vmatprep.subr.bf16.mxu0 0
    %1783 = vmatpush1.bf16.msra.mxu0 %v1027
    %1784 = vmatprep.subr.bf16.mxu0 0
    %1785 = vmatpush2.bf16.msra.mxu0 %v1042
    %1786 = vmatprep.subr.bf16.mxu0 0
    %1787 = vmatpush2.bf16.msra.mxu0 %v1041
    %1788 = vmatprep.subr.bf16.mxu0 0
    %1789 = vmatpush2.bf16.msra.mxu0 %v1040
    %1790 = vmatprep.subr.bf16.mxu0 0
    %1791 = vmatpush2.bf16.msra.mxu0 %v1039
    %1792 = vmatprep.subr.bf16.mxu0 0
    %1793 = vmatpush2.bf16.msra.mxu0 %v1038
    %1794 = vmatprep.subr.bf16.mxu0 0
    %1795 = vmatpush2.bf16.msra.mxu0 %v1037
    %1796 = vmatprep.subr.bf16.mxu0 0
    %1797 = vmatpush2.bf16.msra.mxu0 %v1036
    %1798 = vmatprep.subr.bf16.mxu0 0
    %1799 = vmatpush2.bf16.msra.mxu0 %v1035
    %1800 = vmatprep.mubr.bf16.mxu0 %v475
    %1801 = vmatmul.mubr.bf16.gmra.mxu0 %v474
    %v1802 = vpop.f32.mrf.mxu0
    %v1803 = vadd.f32 %v1514, %v1802
    %v1804 = vpop.f32.mrf.mxu0
    %v1805 = vpop.f32.mrf.mxu0
    %v1806 = vadd.f32 %v1517, %v1805
    %v1807 = vpop.f32.mrf.mxu0
    %1808 = vmatprep.mubr.bf16.mxu0 %v482
    %1809 = vmatmul.mubr.bf16.gmra.mxu0 %v481
    %v1810 = vpop.f32.mrf.mxu0
    %v1811 = vadd.f32 %v1522, %v1810
    %v1812 = vpop.f32.mrf.mxu0
    %v1813 = vpop.f32.mrf.mxu0
    %v1814 = vadd.f32 %v1525, %v1813
    %v1815 = vpop.f32.mrf.mxu0
    %1816 = vmatprep.mubr.bf16.mxu0 %v489
    %1817 = vmatmul.mubr.bf16.gmra.mxu0 %v488
    %v1818 = vpop.f32.mrf.mxu0
    %v1819 = vadd.f32 %v1530, %v1818
    %v1820 = vpop.f32.mrf.mxu0
    %v1821 = vpop.f32.mrf.mxu0
    %v1822 = vadd.f32 %v1533, %v1821
    %v1823 = vpop.f32.mrf.mxu0
    %1824 = vmatprep.mubr.bf16.mxu0 %v496
    %1825 = vmatmul.mubr.bf16.gmra.mxu0 %v495
    %v1826 = vpop.f32.mrf.mxu0
    %v1827 = vadd.f32 %v1538, %v1826
    %v1828 = vpop.f32.mrf.mxu0
    %v1829 = vpop.f32.mrf.mxu0
    %v1830 = vadd.f32 %v1541, %v1829
    %v1831 = vpop.f32.mrf.mxu0
    %1832 = vmatprep.mubr.bf16.mxu0 %v503
    %1833 = vmatmul.mubr.bf16.gmra.mxu0 %v502
    %v1834 = vpop.f32.mrf.mxu0
    %v1835 = vadd.f32 %v1546, %v1834
    %v1836 = vpop.f32.mrf.mxu0
    %v1837 = vpop.f32.mrf.mxu0
    %v1838 = vadd.f32 %v1549, %v1837
    %v1839 = vpop.f32.mrf.mxu0
    %1840 = vmatprep.mubr.bf16.mxu0 %v510
    %1841 = vmatmul.mubr.bf16.gmra.mxu0 %v509
    %v1842 = vpop.f32.mrf.mxu0
    %v1843 = vadd.f32 %v1554, %v1842
    %v1844 = vpop.f32.mrf.mxu0
    %v1845 = vpop.f32.mrf.mxu0
    %v1846 = vadd.f32 %v1557, %v1845
    %v1847 = vpop.f32.mrf.mxu0
    %1848 = vmatprep.mubr.bf16.mxu0 %v517
    %1849 = vmatmul.mubr.bf16.gmra.mxu0 %v516
    %v1850 = vpop.f32.mrf.mxu0
    %v1851 = vadd.f32 %v1562, %v1850
    %v1852 = vpop.f32.mrf.mxu0
    %v1853 = vpop.f32.mrf.mxu0
    %v1854 = vadd.f32 %v1565, %v1853
    %v1855 = vpop.f32.mrf.mxu0
    %1856 = vmatprep.mubr.bf16.mxu0 %v524
    %1857 = vmatmul.mubr.bf16.gmra.mxu0 %v523
    %v1858 = vpop.f32.mrf.mxu0
    %v1859 = vadd.f32 %v1570, %v1858
    %v1860 = vpop.f32.mrf.mxu0
    %v1861 = vpop.f32.mrf.mxu0
    %v1862 = vadd.f32 %v1573, %v1861
    %v1863 = vpop.f32.mrf.mxu0
    %1864 = vmatprep.mubr.bf16.mxu0 %v531
    %1865 = vmatmul.mubr.bf16.gmra.mxu0 %v530
    %v1866 = vpop.f32.mrf.mxu0
    %v1867 = vadd.f32 %v1578, %v1866
    %v1868 = vpop.f32.mrf.mxu0
    %v1869 = vpop.f32.mrf.mxu0
    %v1870 = vadd.f32 %v1581, %v1869
    %v1871 = vpop.f32.mrf.mxu0
    %1872 = vmatprep.mubr.bf16.mxu0 %v538
    %1873 = vmatmul.mubr.bf16.gmra.mxu0 %v537
    %v1874 = vpop.f32.mrf.mxu0
    %v1875 = vadd.f32 %v1586, %v1874
    %v1876 = vpop.f32.mrf.mxu0
    %v1877 = vpop.f32.mrf.mxu0
    %v1878 = vadd.f32 %v1589, %v1877
    %v1879 = vpop.f32.mrf.mxu0
    %1880 = vmatprep.mubr.bf16.mxu0 %v545
    %1881 = vmatmul.mubr.bf16.gmra.mxu0 %v544
    %v1882 = vpop.f32.mrf.mxu0
    %v1883 = vadd.f32 %v1594, %v1882
    %v1884 = vpop.f32.mrf.mxu0
    %v1885 = vpop.f32.mrf.mxu0
    %v1886 = vadd.f32 %v1597, %v1885
    %v1887 = vpop.f32.mrf.mxu0
    %1888 = vmatprep.mubr.bf16.mxu0 %v552
    %1889 = vmatmul.mubr.bf16.gmra.mxu0 %v551
    %v1890 = vpop.f32.mrf.mxu0
    %v1891 = vadd.f32 %v1602, %v1890
    %v1892 = vpop.f32.mrf.mxu0
    %v1893 = vpop.f32.mrf.mxu0
    %v1894 = vadd.f32 %v1605, %v1893
    %v1895 = vpop.f32.mrf.mxu0
    %1896 = vmatprep.mubr.bf16.mxu0 %v559
    %1897 = vmatmul.mubr.bf16.gmra.mxu0 %v558
    %v1898 = vpop.f32.mrf.mxu0
    %v1899 = vadd.f32 %v1610, %v1898
    %v1900 = vpop.f32.mrf.mxu0
    %v1901 = vpop.f32.mrf.mxu0
    %v1902 = vadd.f32 %v1613, %v1901
    %v1903 = vpop.f32.mrf.mxu0
    %1904 = vmatprep.mubr.bf16.mxu0 %v566
    %1905 = vmatmul.mubr.bf16.gmra.mxu0 %v565
    %v1906 = vpop.f32.mrf.mxu0
    %v1907 = vadd.f32 %v1618, %v1906
    %v1908 = vpop.f32.mrf.mxu0
    %v1909 = vpop.f32.mrf.mxu0
    %v1910 = vadd.f32 %v1621, %v1909
    %v1911 = vpop.f32.mrf.mxu0
    %1912 = vmatprep.mubr.bf16.mxu0 %v573
    %1913 = vmatmul.mubr.bf16.gmra.mxu0 %v572
    %v1914 = vpop.f32.mrf.mxu0
    %v1915 = vadd.f32 %v1626, %v1914
    %v1916 = vpop.f32.mrf.mxu0
    %v1917 = vpop.f32.mrf.mxu0
    %v1918 = vadd.f32 %v1629, %v1917
    %v1919 = vpop.f32.mrf.mxu0
    %1920 = vmatprep.mubr.bf16.mxu0 %v580
    %1921 = vmatmul.mubr.bf16.gmra.mxu0 %v579
    %v1922 = vpop.f32.mrf.mxu0
    %v1923 = vadd.f32 %v1634, %v1922
    %v1924 = vpop.f32.mrf.mxu0
    %v1925 = vpop.f32.mrf.mxu0
    %v1926 = vadd.f32 %v1637, %v1925
    %v1927 = vpop.f32.mrf.mxu0
    %1928 = vmatprep.mubr.bf16.mxu0 %v587
    %1929 = vmatmul.mubr.bf16.gmra.mxu0 %v586
    %v1930 = vpop.f32.mrf.mxu0
    %v1931 = vadd.f32 %v1642, %v1930
    %v1932 = vpop.f32.mrf.mxu0
    %v1933 = vpop.f32.mrf.mxu0
    %v1934 = vadd.f32 %v1645, %v1933
    %v1935 = vpop.f32.mrf.mxu0
    %1936 = vmatprep.mubr.bf16.mxu0 %v594
    %1937 = vmatmul.mubr.bf16.gmra.mxu0 %v593
    %v1938 = vpop.f32.mrf.mxu0
    %v1939 = vadd.f32 %v1650, %v1938
    %v1940 = vpop.f32.mrf.mxu0
    %v1941 = vpop.f32.mrf.mxu0
    %v1942 = vadd.f32 %v1653, %v1941
    %v1943 = vpop.f32.mrf.mxu0
    %1944 = vmatprep.mubr.bf16.mxu0 %v601
    %1945 = vmatmul.mubr.bf16.gmra.mxu0 %v600
    %v1946 = vpop.f32.mrf.mxu0
    %v1947 = vadd.f32 %v1658, %v1946
    %v1948 = vpop.f32.mrf.mxu0
    %v1949 = vpop.f32.mrf.mxu0
    %v1950 = vadd.f32 %v1661, %v1949
    %v1951 = vpop.f32.mrf.mxu0
    %1952 = vmatprep.mubr.bf16.mxu0 %v608
    %1953 = vmatmul.mubr.bf16.gmra.mxu0 %v607
    %v1954 = vpop.f32.mrf.mxu0
    %v1955 = vadd.f32 %v1666, %v1954
    %v1956 = vpop.f32.mrf.mxu0
    %v1957 = vpop.f32.mrf.mxu0
    %v1958 = vadd.f32 %v1669, %v1957
    %v1959 = vpop.f32.mrf.mxu0
    %1960 = vmatprep.mubr.bf16.mxu0 %v615
    %1961 = vmatmul.mubr.bf16.gmra.mxu0 %v614
    %v1962 = vpop.f32.mrf.mxu0
    %v1963 = vadd.f32 %v1674, %v1962
    %v1964 = vpop.f32.mrf.mxu0
    %v1965 = vpop.f32.mrf.mxu0
    %v1966 = vadd.f32 %v1677, %v1965
    %v1967 = vpop.f32.mrf.mxu0
    %1968 = vmatprep.mubr.bf16.mxu0 %v622
    %1969 = vmatmul.mubr.bf16.gmra.mxu0 %v621
    %v1970 = vpop.f32.mrf.mxu0
    %v1971 = vadd.f32 %v1682, %v1970
    %v1972 = vpop.f32.mrf.mxu0
    %v1973 = vpop.f32.mrf.mxu0
    %v1974 = vadd.f32 %v1685, %v1973
    %v1975 = vpop.f32.mrf.mxu0
    %1976 = vmatprep.mubr.bf16.mxu0 %v629
    %1977 = vmatmul.mubr.bf16.gmra.mxu0 %v628
    %v1978 = vpop.f32.mrf.mxu0
    %v1979 = vadd.f32 %v1690, %v1978
    %v1980 = vpop.f32.mrf.mxu0
    %v1981 = vpop.f32.mrf.mxu0
    %v1982 = vadd.f32 %v1693, %v1981
    %v1983 = vpop.f32.mrf.mxu0
    %1984 = vmatprep.mubr.bf16.mxu0 %v636
    %1985 = vmatmul.mubr.bf16.gmra.mxu0 %v635
    %v1986 = vpop.f32.mrf.mxu0
    %v1987 = vadd.f32 %v1698, %v1986
    %v1988 = vpop.f32.mrf.mxu0
    %v1989 = vpop.f32.mrf.mxu0
    %v1990 = vadd.f32 %v1701, %v1989
    %v1991 = vpop.f32.mrf.mxu0
    %1992 = vmatprep.mubr.bf16.mxu0 %v643
    %1993 = vmatmul.mubr.bf16.gmra.mxu0 %v642
    %v1994 = vpop.f32.mrf.mxu0
    %v1995 = vadd.f32 %v1706, %v1994
    %v1996 = vpop.f32.mrf.mxu0
    %v1997 = vpop.f32.mrf.mxu0
    %v1998 = vadd.f32 %v1709, %v1997
    %v1999 = vpop.f32.mrf.mxu0
    %2000 = vmatprep.mubr.bf16.mxu0 %v650
    %2001 = vmatmul.mubr.bf16.gmra.mxu0 %v649
    %v2002 = vpop.f32.mrf.mxu0
    %v2003 = vadd.f32 %v1714, %v2002
    %v2004 = vpop.f32.mrf.mxu0
    %v2005 = vpop.f32.mrf.mxu0
    %v2006 = vadd.f32 %v1717, %v2005
    %v2007 = vpop.f32.mrf.mxu0
    %2008 = vmatprep.mubr.bf16.mxu0 %v657
    %2009 = vmatmul.mubr.bf16.gmra.mxu0 %v656
    %v2010 = vpop.f32.mrf.mxu0
    %v2011 = vadd.f32 %v1722, %v2010
    %v2012 = vpop.f32.mrf.mxu0
    %v2013 = vpop.f32.mrf.mxu0
    %v2014 = vadd.f32 %v1725, %v2013
    %v2015 = vpop.f32.mrf.mxu0
    %2016 = vmatprep.mubr.bf16.mxu0 %v664
    %2017 = vmatmul.mubr.bf16.gmra.mxu0 %v663
    %v2018 = vpop.f32.mrf.mxu0
    %v2019 = vadd.f32 %v1730, %v2018
    %v2020 = vpop.f32.mrf.mxu0
    %v2021 = vpop.f32.mrf.mxu0
    %v2022 = vadd.f32 %v1733, %v2021
    %v2023 = vpop.f32.mrf.mxu0
    %2024 = vmatprep.mubr.bf16.mxu0 %v671
    %2025 = vmatmul.mubr.bf16.gmra.mxu0 %v670
    %v2026 = vpop.f32.mrf.mxu0
    %v2027 = vadd.f32 %v1738, %v2026
    %v2028 = vpop.f32.mrf.mxu0
    %v2029 = vpop.f32.mrf.mxu0
    %v2030 = vadd.f32 %v1741, %v2029
    %v2031 = vpop.f32.mrf.mxu0
    %2032 = vmatprep.mubr.bf16.mxu0 %v678
    %2033 = vmatmul.mubr.bf16.gmra.mxu0 %v677
    %v2034 = vpop.f32.mrf.mxu0
    %v2035 = vadd.f32 %v1746, %v2034
    %v2036 = vpop.f32.mrf.mxu0
    %v2037 = vpop.f32.mrf.mxu0
    %v2038 = vadd.f32 %v1749, %v2037
    %v2039 = vpop.f32.mrf.mxu0
    %2040 = vmatprep.mubr.bf16.mxu0 %v685
    %2041 = vmatmul.mubr.bf16.gmra.mxu0 %v684
    %v2042 = vpop.f32.mrf.mxu0
    %v2043 = vadd.f32 %v1754, %v2042
    %v2044 = vpop.f32.mrf.mxu0
    %v2045 = vpop.f32.mrf.mxu0
    %v2046 = vadd.f32 %v1757, %v2045
    %v2047 = vpop.f32.mrf.mxu0
    %2048 = vmatprep.mubr.bf16.mxu0 %v692
    %2049 = vmatmul.mubr.bf16.gmra.mxu0 %v691
    %v2050 = vpop.f32.mrf.mxu0
    %v2051 = vadd.f32 %v1762, %v2050
    %v2052 = vpop.f32.mrf.mxu0
    %v2053 = vpop.f32.mrf.mxu0
    %v2054 = vadd.f32 %v1765, %v2053
    %v2055 = vpop.f32.mrf.mxu0
    %2056 = vdwg.mxu0
    %2057 = vmatprep.subr.bf16.mxu0 0
    %2058 = vmatpush1.bf16.msra.mxu0 0
    %2059 = vmatprep.subr.bf16.mxu0 0
    %2060 = vmatpush1.bf16.msra.mxu0 0
    %2061 = vmatprep.subr.bf16.mxu0 0
    %2062 = vmatpush1.bf16.msra.mxu0 0
    %2063 = vmatprep.subr.bf16.mxu0 0
    %2064 = vmatpush1.bf16.msra.mxu0 0
    %2065 = vmatprep.subr.bf16.mxu0 0
    %2066 = vmatpush1.bf16.msra.mxu0 0
    %2067 = vmatprep.subr.bf16.mxu0 0
    %2068 = vmatpush1.bf16.msra.mxu0 0
    %2069 = vmatprep.subr.bf16.mxu0 0
    %2070 = vmatpush1.bf16.msra.mxu0 0
    %2071 = vmatprep.subr.bf16.mxu0 0
    %2072 = vmatpush1.bf16.msra.mxu0 %v1043
    %2073 = vmatprep.subr.bf16.mxu0 0
    %2074 = vmatpush2.bf16.msra.mxu0 0
    %2075 = vmatprep.subr.bf16.mxu0 0
    %2076 = vmatpush2.bf16.msra.mxu0 0
    %2077 = vmatprep.subr.bf16.mxu0 0
    %2078 = vmatpush2.bf16.msra.mxu0 0
    %2079 = vmatprep.subr.bf16.mxu0 0
    %2080 = vmatpush2.bf16.msra.mxu0 0
    %2081 = vmatprep.subr.bf16.mxu0 0
    %2082 = vmatpush2.bf16.msra.mxu0 0
    %2083 = vmatprep.subr.bf16.mxu0 0
    %2084 = vmatpush2.bf16.msra.mxu0 0
    %2085 = vmatprep.subr.bf16.mxu0 0
    %2086 = vmatpush2.bf16.msra.mxu0 0
    %2087 = vmatprep.subr.bf16.mxu0 0
    %2088 = vmatpush2.bf16.msra.mxu0 0
    %2089 = vmatprep.mubr.bf16.mxu0 0
    %2090 = vmatmul.mubr.bf16.gmra.mxu0 %v1095
    %v2091 = vpop.f32.mrf.mxu0
    %v2092 = vadd.f32 %v1803, %v2091
    %v2093 = vpop.f32.mrf.mxu0
    %v2094 = vpop.f32.mrf.mxu0
    %v2095 = vadd.f32 %v1806, %v2094
    %v2096 = vpop.f32.mrf.mxu0
    %2097 = vmatprep.mubr.bf16.mxu0 0
    %2098 = vmatmul.mubr.bf16.gmra.mxu0 %v1098
    %v2099 = vpop.f32.mrf.mxu0
    %v2100 = vadd.f32 %v1811, %v2099
    %v2101 = vpop.f32.mrf.mxu0
    %v2102 = vpop.f32.mrf.mxu0
    %v2103 = vadd.f32 %v1814, %v2102
    %v2104 = vpop.f32.mrf.mxu0
    %2105 = vmatprep.mubr.bf16.mxu0 0
    %2106 = vmatmul.mubr.bf16.gmra.mxu0 %v1101
    %v2107 = vpop.f32.mrf.mxu0
    %v2108 = vadd.f32 %v1819, %v2107
    %v2109 = vpop.f32.mrf.mxu0
    %v2110 = vpop.f32.mrf.mxu0
    %v2111 = vadd.f32 %v1822, %v2110
    %v2112 = vpop.f32.mrf.mxu0
    %2113 = vmatprep.mubr.bf16.mxu0 0
    %2114 = vmatmul.mubr.bf16.gmra.mxu0 %v1104
    %v2115 = vpop.f32.mrf.mxu0
    %v2116 = vadd.f32 %v1827, %v2115
    %v2117 = vpop.f32.mrf.mxu0
    %v2118 = vpop.f32.mrf.mxu0
    %v2119 = vadd.f32 %v1830, %v2118
    %v2120 = vpop.f32.mrf.mxu0
    %2121 = vmatprep.mubr.bf16.mxu0 0
    %2122 = vmatmul.mubr.bf16.gmra.mxu0 %v1107
    %v2123 = vpop.f32.mrf.mxu0
    %v2124 = vadd.f32 %v1835, %v2123
    %v2125 = vpop.f32.mrf.mxu0
    %v2126 = vpop.f32.mrf.mxu0
    %v2127 = vadd.f32 %v1838, %v2126
    %v2128 = vpop.f32.mrf.mxu0
    %2129 = vmatprep.mubr.bf16.mxu0 0
    %2130 = vmatmul.mubr.bf16.gmra.mxu0 %v1110
    %v2131 = vpop.f32.mrf.mxu0
    %v2132 = vadd.f32 %v1843, %v2131
    %v2133 = vpop.f32.mrf.mxu0
    %v2134 = vpop.f32.mrf.mxu0
    %v2135 = vadd.f32 %v1846, %v2134
    %v2136 = vpop.f32.mrf.mxu0
    %2137 = vmatprep.mubr.bf16.mxu0 0
    %2138 = vmatmul.mubr.bf16.gmra.mxu0 %v1113
    %v2139 = vpop.f32.mrf.mxu0
    %v2140 = vadd.f32 %v1851, %v2139
    %v2141 = vpop.f32.mrf.mxu0
    %v2142 = vpop.f32.mrf.mxu0
    %v2143 = vadd.f32 %v1854, %v2142
    %v2144 = vpop.f32.mrf.mxu0
    %2145 = vmatprep.mubr.bf16.mxu0 0
    %2146 = vmatmul.mubr.bf16.gmra.mxu0 %v1116
    %v2147 = vpop.f32.mrf.mxu0
    %v2148 = vadd.f32 %v1859, %v2147
    %v2149 = vpop.f32.mrf.mxu0
    %v2150 = vpop.f32.mrf.mxu0
    %v2151 = vadd.f32 %v1862, %v2150
    %v2152 = vpop.f32.mrf.mxu0
    %2153 = vmatprep.mubr.bf16.mxu0 0
    %2154 = vmatmul.mubr.bf16.gmra.mxu0 %v1119
    %v2155 = vpop.f32.mrf.mxu0
    %v2156 = vadd.f32 %v1867, %v2155
    %v2157 = vpop.f32.mrf.mxu0
    %v2158 = vpop.f32.mrf.mxu0
    %v2159 = vadd.f32 %v1870, %v2158
    %v2160 = vpop.f32.mrf.mxu0
    %2161 = vmatprep.mubr.bf16.mxu0 0
    %2162 = vmatmul.mubr.bf16.gmra.mxu0 %v1122
    %v2163 = vpop.f32.mrf.mxu0
    %v2164 = vadd.f32 %v1875, %v2163
    %v2165 = vpop.f32.mrf.mxu0
    %v2166 = vpop.f32.mrf.mxu0
    %v2167 = vadd.f32 %v1878, %v2166
    %v2168 = vpop.f32.mrf.mxu0
    %2169 = vmatprep.mubr.bf16.mxu0 0
    %2170 = vmatmul.mubr.bf16.gmra.mxu0 %v1125
    %v2171 = vpop.f32.mrf.mxu0
    %v2172 = vadd.f32 %v1883, %v2171
    %v2173 = vpop.f32.mrf.mxu0
    %v2174 = vpop.f32.mrf.mxu0
    %v2175 = vadd.f32 %v1886, %v2174
    %v2176 = vpop.f32.mrf.mxu0
    %2177 = vmatprep.mubr.bf16.mxu0 0
    %2178 = vmatmul.mubr.bf16.gmra.mxu0 %v1128
    %v2179 = vpop.f32.mrf.mxu0
    %v2180 = vadd.f32 %v1891, %v2179
    %v2181 = vpop.f32.mrf.mxu0
    %v2182 = vpop.f32.mrf.mxu0
    %v2183 = vadd.f32 %v1894, %v2182
    %v2184 = vpop.f32.mrf.mxu0
    %2185 = vmatprep.mubr.bf16.mxu0 0
    %2186 = vmatmul.mubr.bf16.gmra.mxu0 %v1131
    %v2187 = vpop.f32.mrf.mxu0
    %v2188 = vadd.f32 %v1899, %v2187
    %v2189 = vpop.f32.mrf.mxu0
    %v2190 = vpop.f32.mrf.mxu0
    %v2191 = vadd.f32 %v1902, %v2190
    %v2192 = vpop.f32.mrf.mxu0
    %2193 = vmatprep.mubr.bf16.mxu0 0
    %2194 = vmatmul.mubr.bf16.gmra.mxu0 %v1134
    %v2195 = vpop.f32.mrf.mxu0
    %v2196 = vadd.f32 %v1907, %v2195
    %v2197 = vpop.f32.mrf.mxu0
    %v2198 = vpop.f32.mrf.mxu0
    %v2199 = vadd.f32 %v1910, %v2198
    %v2200 = vpop.f32.mrf.mxu0
    %2201 = vmatprep.mubr.bf16.mxu0 0
    %2202 = vmatmul.mubr.bf16.gmra.mxu0 %v1137
    %v2203 = vpop.f32.mrf.mxu0
    %v2204 = vadd.f32 %v1915, %v2203
    %v2205 = vpop.f32.mrf.mxu0
    %v2206 = vpop.f32.mrf.mxu0
    %v2207 = vadd.f32 %v1918, %v2206
    %v2208 = vpop.f32.mrf.mxu0
    %2209 = vmatprep.mubr.bf16.mxu0 0
    %2210 = vmatmul.mubr.bf16.gmra.mxu0 %v1140
    %v2211 = vpop.f32.mrf.mxu0
    %v2212 = vadd.f32 %v1923, %v2211
    %v2213 = vpop.f32.mrf.mxu0
    %v2214 = vpop.f32.mrf.mxu0
    %v2215 = vadd.f32 %v1926, %v2214
    %v2216 = vpop.f32.mrf.mxu0
    %2217 = vmatprep.mubr.bf16.mxu0 0
    %2218 = vmatmul.mubr.bf16.gmra.mxu0 %v1143
    %v2219 = vpop.f32.mrf.mxu0
    %v2220 = vadd.f32 %v1931, %v2219
    %v2221 = vpop.f32.mrf.mxu0
    %v2222 = vpop.f32.mrf.mxu0
    %v2223 = vadd.f32 %v1934, %v2222
    %v2224 = vpop.f32.mrf.mxu0
    %2225 = vmatprep.mubr.bf16.mxu0 0
    %2226 = vmatmul.mubr.bf16.gmra.mxu0 %v1146
    %v2227 = vpop.f32.mrf.mxu0
    %v2228 = vadd.f32 %v1939, %v2227
    %v2229 = vpop.f32.mrf.mxu0
    %v2230 = vpop.f32.mrf.mxu0
    %v2231 = vadd.f32 %v1942, %v2230
    %v2232 = vpop.f32.mrf.mxu0
    %2233 = vmatprep.mubr.bf16.mxu0 0
    %2234 = vmatmul.mubr.bf16.gmra.mxu0 %v1149
    %v2235 = vpop.f32.mrf.mxu0
    %v2236 = vadd.f32 %v1947, %v2235
    %v2237 = vpop.f32.mrf.mxu0
    %v2238 = vpop.f32.mrf.mxu0
    %v2239 = vadd.f32 %v1950, %v2238
    %v2240 = vpop.f32.mrf.mxu0
    %2241 = vmatprep.mubr.bf16.mxu0 0
    %2242 = vmatmul.mubr.bf16.gmra.mxu0 %v1152
    %v2243 = vpop.f32.mrf.mxu0
    %v2244 = vadd.f32 %v1955, %v2243
    %v2245 = vpop.f32.mrf.mxu0
    %v2246 = vpop.f32.mrf.mxu0
    %v2247 = vadd.f32 %v1958, %v2246
    %v2248 = vpop.f32.mrf.mxu0
    %2249 = vmatprep.mubr.bf16.mxu0 0
    %2250 = vmatmul.mubr.bf16.gmra.mxu0 %v1155
    %v2251 = vpop.f32.mrf.mxu0
    %v2252 = vadd.f32 %v1963, %v2251
    %v2253 = vpop.f32.mrf.mxu0
    %v2254 = vpop.f32.mrf.mxu0
    %v2255 = vadd.f32 %v1966, %v2254
    %v2256 = vpop.f32.mrf.mxu0
    %2257 = vmatprep.mubr.bf16.mxu0 0
    %2258 = vmatmul.mubr.bf16.gmra.mxu0 %v1158
    %v2259 = vpop.f32.mrf.mxu0
    %v2260 = vadd.f32 %v1971, %v2259
    %v2261 = vpop.f32.mrf.mxu0
    %v2262 = vpop.f32.mrf.mxu0
    %v2263 = vadd.f32 %v1974, %v2262
    %v2264 = vpop.f32.mrf.mxu0
    %2265 = vmatprep.mubr.bf16.mxu0 0
    %2266 = vmatmul.mubr.bf16.gmra.mxu0 %v1161
    %v2267 = vpop.f32.mrf.mxu0
    %v2268 = vadd.f32 %v1979, %v2267
    %v2269 = vpop.f32.mrf.mxu0
    %v2270 = vpop.f32.mrf.mxu0
    %v2271 = vadd.f32 %v1982, %v2270
    %v2272 = vpop.f32.mrf.mxu0
    %2273 = vmatprep.mubr.bf16.mxu0 0
    %2274 = vmatmul.mubr.bf16.gmra.mxu0 %v1164
    %v2275 = vpop.f32.mrf.mxu0
    %v2276 = vadd.f32 %v1987, %v2275
    %v2277 = vpop.f32.mrf.mxu0
    %v2278 = vpop.f32.mrf.mxu0
    %v2279 = vadd.f32 %v1990, %v2278
    %v2280 = vpop.f32.mrf.mxu0
    %2281 = vmatprep.mubr.bf16.mxu0 0
    %2282 = vmatmul.mubr.bf16.gmra.mxu0 %v1167
    %v2283 = vpop.f32.mrf.mxu0
    %v2284 = vadd.f32 %v1995, %v2283
    %v2285 = vpop.f32.mrf.mxu0
    %v2286 = vpop.f32.mrf.mxu0
    %v2287 = vadd.f32 %v1998, %v2286
    %v2288 = vpop.f32.mrf.mxu0
    %2289 = vmatprep.mubr.bf16.mxu0 0
    %2290 = vmatmul.mubr.bf16.gmra.mxu0 %v1170
    %v2291 = vpop.f32.mrf.mxu0
    %v2292 = vadd.f32 %v2003, %v2291
    %v2293 = vpop.f32.mrf.mxu0
    %v2294 = vpop.f32.mrf.mxu0
    %v2295 = vadd.f32 %v2006, %v2294
    %v2296 = vpop.f32.mrf.mxu0
    %2297 = vmatprep.mubr.bf16.mxu0 0
    %2298 = vmatmul.mubr.bf16.gmra.mxu0 %v1173
    %v2299 = vpop.f32.mrf.mxu0
    %v2300 = vadd.f32 %v2011, %v2299
    %v2301 = vpop.f32.mrf.mxu0
    %v2302 = vpop.f32.mrf.mxu0
    %v2303 = vadd.f32 %v2014, %v2302
    %v2304 = vpop.f32.mrf.mxu0
    %2305 = vmatprep.mubr.bf16.mxu0 0
    %2306 = vmatmul.mubr.bf16.gmra.mxu0 %v1176
    %v2307 = vpop.f32.mrf.mxu0
    %v2308 = vadd.f32 %v2019, %v2307
    %v2309 = vpop.f32.mrf.mxu0
    %v2310 = vpop.f32.mrf.mxu0
    %v2311 = vadd.f32 %v2022, %v2310
    %v2312 = vpop.f32.mrf.mxu0
    %2313 = vmatprep.mubr.bf16.mxu0 0
    %2314 = vmatmul.mubr.bf16.gmra.mxu0 %v1179
    %v2315 = vpop.f32.mrf.mxu0
    %v2316 = vadd.f32 %v2027, %v2315
    %v2317 = vpop.f32.mrf.mxu0
    %v2318 = vpop.f32.mrf.mxu0
    %v2319 = vadd.f32 %v2030, %v2318
    %v2320 = vpop.f32.mrf.mxu0
    %2321 = vmatprep.mubr.bf16.mxu0 0
    %2322 = vmatmul.mubr.bf16.gmra.mxu0 %v1182
    %v2323 = vpop.f32.mrf.mxu0
    %v2324 = vadd.f32 %v2035, %v2323
    %v2325 = vpop.f32.mrf.mxu0
    %v2326 = vpop.f32.mrf.mxu0
    %v2327 = vadd.f32 %v2038, %v2326
    %v2328 = vpop.f32.mrf.mxu0
    %2329 = vmatprep.mubr.bf16.mxu0 0
    %2330 = vmatmul.mubr.bf16.gmra.mxu0 %v1185
    %v2331 = vpop.f32.mrf.mxu0
    %v2332 = vadd.f32 %v2043, %v2331
    %v2333 = vpop.f32.mrf.mxu0
    %v2334 = vpop.f32.mrf.mxu0
    %v2335 = vadd.f32 %v2046, %v2334
    %v2336 = vpop.f32.mrf.mxu0
    %2337 = vmatprep.mubr.bf16.mxu0 0
    %2338 = vmatmul.mubr.bf16.gmra.mxu0 %v1188
    %v2339 = vpop.f32.mrf.mxu0
    %v2340 = vadd.f32 %v2051, %v2339
    %v2341 = vpop.f32.mrf.mxu0
    %v2342 = vpop.f32.mrf.mxu0
    %v2343 = vadd.f32 %v2054, %v2342
    %v2344 = vpop.f32.mrf.mxu0
    %2345 = vdwg.mxu0
    %v2346 = vxor.u32 %v2092, 2147483648
    %v2347 = vxor.u32 %v2095, 2147483648
    %v2348 = vxor.u32 %v2100, 2147483648
    %v2349 = vxor.u32 %v2103, 2147483648
    %v2350 = vxor.u32 %v2108, 2147483648
    %v2351 = vxor.u32 %v2111, 2147483648
    %v2352 = vxor.u32 %v2116, 2147483648
    %v2353 = vxor.u32 %v2119, 2147483648
    %v2354 = vxor.u32 %v2124, 2147483648
    %v2355 = vxor.u32 %v2127, 2147483648
    %v2356 = vxor.u32 %v2132, 2147483648
    %v2357 = vxor.u32 %v2135, 2147483648
    %v2358 = vxor.u32 %v2140, 2147483648
    %v2359 = vxor.u32 %v2143, 2147483648
    %v2360 = vxor.u32 %v2148, 2147483648
    %v2361 = vxor.u32 %v2151, 2147483648
    %v2362 = vxor.u32 %v2156, 2147483648
    %v2363 = vxor.u32 %v2159, 2147483648
    %v2364 = vxor.u32 %v2164, 2147483648
    %v2365 = vxor.u32 %v2167, 2147483648
    %v2366 = vxor.u32 %v2172, 2147483648
    %v2367 = vxor.u32 %v2175, 2147483648
    %v2368 = vxor.u32 %v2180, 2147483648
    %v2369 = vxor.u32 %v2183, 2147483648
    %v2370 = vxor.u32 %v2188, 2147483648
    %v2371 = vxor.u32 %v2191, 2147483648
    %v2372 = vxor.u32 %v2196, 2147483648
    %v2373 = vxor.u32 %v2199, 2147483648
    %v2374 = vxor.u32 %v2204, 2147483648
    %v2375 = vxor.u32 %v2207, 2147483648
    %v2376 = vxor.u32 %v2212, 2147483648
    %v2377 = vxor.u32 %v2215, 2147483648
    %v2378 = vxor.u32 %v2220, 2147483648
    %v2379 = vxor.u32 %v2223, 2147483648
    %v2380 = vxor.u32 %v2228, 2147483648
    %v2381 = vxor.u32 %v2231, 2147483648
    %v2382 = vxor.u32 %v2236, 2147483648
    %v2383 = vxor.u32 %v2239, 2147483648
    %v2384 = vxor.u32 %v2244, 2147483648
    %v2385 = vxor.u32 %v2247, 2147483648
    %v2386 = vxor.u32 %v2252, 2147483648
    %v2387 = vxor.u32 %v2255, 2147483648
    %v2388 = vxor.u32 %v2260, 2147483648
    %v2389 = vxor.u32 %v2263, 2147483648
    %v2390 = vxor.u32 %v2268, 2147483648
    %v2391 = vxor.u32 %v2271, 2147483648
    %v2392 = vxor.u32 %v2276, 2147483648
    %v2393 = vxor.u32 %v2279, 2147483648
    %v2394 = vxor.u32 %v2284, 2147483648
    %v2395 = vxor.u32 %v2287, 2147483648
    %v2396 = vxor.u32 %v2292, 2147483648
    %v2397 = vxor.u32 %v2295, 2147483648
    %v2398 = vxor.u32 %v2300, 2147483648
    %v2399 = vxor.u32 %v2303, 2147483648
    %v2400 = vxor.u32 %v2308, 2147483648
    %v2401 = vxor.u32 %v2311, 2147483648
    %v2402 = vxor.u32 %v2316, 2147483648
    %v2403 = vxor.u32 %v2319, 2147483648
    %v2404 = vxor.u32 %v2324, 2147483648
    %v2405 = vxor.u32 %v2327, 2147483648
    %v2406 = vxor.u32 %v2332, 2147483648
    %v2407 = vxor.u32 %v2335, 2147483648
    %v2408 = vxor.u32 %v2340, 2147483648
    %v2409 = vxor.u32 %v2343, 2147483648
    %v2410 = vmul.f32 %v2346, 1.442695
    %v2411 = vpow.pop %v2410
    %v2412 = vmul.f32 %v2347, 1.442695
    %v2413 = vpow.pop %v2412
    %v2414 = vmul.f32 %v2348, 1.442695
    %v2415 = vpow.pop %v2414
    %v2416 = vmul.f32 %v2349, 1.442695
    %v2417 = vpow.pop %v2416
    %v2418 = vmul.f32 %v2350, 1.442695
    %v2419 = vpow.pop %v2418
    %v2420 = vmul.f32 %v2351, 1.442695
    %v2421 = vpow.pop %v2420
    %v2422 = vmul.f32 %v2352, 1.442695
    %v2423 = vpow.pop %v2422
    %v2424 = vmul.f32 %v2353, 1.442695
    %v2425 = vpow.pop %v2424
    %v2426 = vmul.f32 %v2354, 1.442695
    %v2427 = vpow.pop %v2426
    %v2428 = vmul.f32 %v2355, 1.442695
    %v2429 = vpow.pop %v2428
    %v2430 = vmul.f32 %v2356, 1.442695
    %v2431 = vpow.pop %v2430
    %v2432 = vmul.f32 %v2357, 1.442695
    %v2433 = vpow.pop %v2432
    %v2434 = vmul.f32 %v2358, 1.442695
    %v2435 = vpow.pop %v2434
    %v2436 = vmul.f32 %v2359, 1.442695
    %v2437 = vpow.pop %v2436
    %v2438 = vmul.f32 %v2360, 1.442695
    %v2439 = vpow.pop %v2438
    %v2440 = vmul.f32 %v2361, 1.442695
    %v2441 = vpow.pop %v2440
    %v2442 = vmul.f32 %v2362, 1.442695
    %v2443 = vpow.pop %v2442
    %v2444 = vmul.f32 %v2363, 1.442695
    %v2445 = vpow.pop %v2444
    %v2446 = vmul.f32 %v2364, 1.442695
    %v2447 = vpow.pop %v2446
    %v2448 = vmul.f32 %v2365, 1.442695
    %v2449 = vpow.pop %v2448
    %v2450 = vmul.f32 %v2366, 1.442695
    %v2451 = vpow.pop %v2450
    %v2452 = vmul.f32 %v2367, 1.442695
    %v2453 = vpow.pop %v2452
    %v2454 = vmul.f32 %v2368, 1.442695
    %v2455 = vpow.pop %v2454
    %v2456 = vmul.f32 %v2369, 1.442695
    %v2457 = vpow.pop %v2456
    %v2458 = vmul.f32 %v2370, 1.442695
    %v2459 = vpow.pop %v2458
    %v2460 = vmul.f32 %v2371, 1.442695
    %v2461 = vpow.pop %v2460
    %v2462 = vmul.f32 %v2372, 1.442695
    %v2463 = vpow.pop %v2462
    %v2464 = vmul.f32 %v2373, 1.442695
    %v2465 = vpow.pop %v2464
    %v2466 = vmul.f32 %v2374, 1.442695
    %v2467 = vpow.pop %v2466
    %v2468 = vmul.f32 %v2375, 1.442695
    %v2469 = vpow.pop %v2468
    %v2470 = vmul.f32 %v2376, 1.442695
    %v2471 = vpow.pop %v2470
    %v2472 = vmul.f32 %v2377, 1.442695
    %v2473 = vpow.pop %v2472
    %v2474 = vmul.f32 %v2378, 1.442695
    %v2475 = vpow.pop %v2474
    %v2476 = vmul.f32 %v2379, 1.442695
    %v2477 = vpow.pop %v2476
    %v2478 = vmul.f32 %v2380, 1.442695
    %v2479 = vpow.pop %v2478
    %v2480 = vmul.f32 %v2381, 1.442695
    %v2481 = vpow.pop %v2480
    %v2482 = vmul.f32 %v2382, 1.442695
    %v2483 = vpow.pop %v2482
    %v2484 = vmul.f32 %v2383, 1.442695
    %v2485 = vpow.pop %v2484
    %v2486 = vmul.f32 %v2384, 1.442695
    %v2487 = vpow.pop %v2486
    %v2488 = vmul.f32 %v2385, 1.442695
    %v2489 = vpow.pop %v2488
    %v2490 = vmul.f32 %v2386, 1.442695
    %v2491 = vpow.pop %v2490
    %v2492 = vmul.f32 %v2387, 1.442695
    %v2493 = vpow.pop %v2492
    %v2494 = vmul.f32 %v2388, 1.442695
    %v2495 = vpow.pop %v2494
    %v2496 = vmul.f32 %v2389, 1.442695
    %v2497 = vpow.pop %v2496
    %v2498 = vmul.f32 %v2390, 1.442695
    %v2499 = vpow.pop %v2498
    %v2500 = vmul.f32 %v2391, 1.442695
    %v2501 = vpow.pop %v2500
    %v2502 = vmul.f32 %v2392, 1.442695
    %v2503 = vpow.pop %v2502
    %v2504 = vmul.f32 %v2393, 1.442695
    %v2505 = vpow.pop %v2504
    %v2506 = vmul.f32 %v2394, 1.442695
    %v2507 = vpow.pop %v2506
    %v2508 = vmul.f32 %v2395, 1.442695
    %v2509 = vpow.pop %v2508
    %v2510 = vmul.f32 %v2396, 1.442695
    %v2511 = vpow.pop %v2510
    %v2512 = vmul.f32 %v2397, 1.442695
    %v2513 = vpow.pop %v2512
    %v2514 = vmul.f32 %v2398, 1.442695
    %v2515 = vpow.pop %v2514
    %v2516 = vmul.f32 %v2399, 1.442695
    %v2517 = vpow.pop %v2516
    %v2518 = vmul.f32 %v2400, 1.442695
    %v2519 = vpow.pop %v2518
    %v2520 = vmul.f32 %v2401, 1.442695
    %v2521 = vpow.pop %v2520
    %v2522 = vmul.f32 %v2402, 1.442695
    %v2523 = vpow.pop %v2522
    %v2524 = vmul.f32 %v2403, 1.442695
    %v2525 = vpow.pop %v2524
    %v2526 = vmul.f32 %v2404, 1.442695
    %v2527 = vpow.pop %v2526
    %v2528 = vmul.f32 %v2405, 1.442695
    %v2529 = vpow.pop %v2528
    %v2530 = vmul.f32 %v2406, 1.442695
    %v2531 = vpow.pop %v2530
    %v2532 = vmul.f32 %v2407, 1.442695
    %v2533 = vpow.pop %v2532
    %v2534 = vmul.f32 %v2408, 1.442695
    %v2535 = vpow.pop %v2534
    %v2536 = vmul.f32 %v2409, 1.442695
    %v2537 = vpow.pop %v2536
    %v2538 = vadd.f32 %v2411, 1.0
    %v2539 = vadd.f32 %v2413, 1.0
    %v2540 = vadd.f32 %v2415, 1.0
    %v2541 = vadd.f32 %v2417, 1.0
    %v2542 = vadd.f32 %v2419, 1.0
    %v2543 = vadd.f32 %v2421, 1.0
    %v2544 = vadd.f32 %v2423, 1.0
    %v2545 = vadd.f32 %v2425, 1.0
    %v2546 = vadd.f32 %v2427, 1.0
    %v2547 = vadd.f32 %v2429, 1.0
    %v2548 = vadd.f32 %v2431, 1.0
    %v2549 = vadd.f32 %v2433, 1.0
    %v2550 = vadd.f32 %v2435, 1.0
    %v2551 = vadd.f32 %v2437, 1.0
    %v2552 = vadd.f32 %v2439, 1.0
    %v2553 = vadd.f32 %v2441, 1.0
    %v2554 = vadd.f32 %v2443, 1.0
    %v2555 = vadd.f32 %v2445, 1.0
    %v2556 = vadd.f32 %v2447, 1.0
    %v2557 = vadd.f32 %v2449, 1.0
    %v2558 = vadd.f32 %v2451, 1.0
    %v2559 = vadd.f32 %v2453, 1.0
    %v2560 = vadd.f32 %v2455, 1.0
    %v2561 = vadd.f32 %v2457, 1.0
    %v2562 = vadd.f32 %v2459, 1.0
    %v2563 = vadd.f32 %v2461, 1.0
    %v2564 = vadd.f32 %v2463, 1.0
    %v2565 = vadd.f32 %v2465, 1.0
    %v2566 = vadd.f32 %v2467, 1.0
    %v2567 = vadd.f32 %v2469, 1.0
    %v2568 = vadd.f32 %v2471, 1.0
    %v2569 = vadd.f32 %v2473, 1.0
    %v2570 = vadd.f32 %v2475, 1.0
    %v2571 = vadd.f32 %v2477, 1.0
    %v2572 = vadd.f32 %v2479, 1.0
    %v2573 = vadd.f32 %v2481, 1.0
    %v2574 = vadd.f32 %v2483, 1.0
    %v2575 = vadd.f32 %v2485, 1.0
    %v2576 = vadd.f32 %v2487, 1.0
    %v2577 = vadd.f32 %v2489, 1.0
    %v2578 = vadd.f32 %v2491, 1.0
    %v2579 = vadd.f32 %v2493, 1.0
    %v2580 = vadd.f32 %v2495, 1.0
    %v2581 = vadd.f32 %v2497, 1.0
    %v2582 = vadd.f32 %v2499, 1.0
    %v2583 = vadd.f32 %v2501, 1.0
    %v2584 = vadd.f32 %v2503, 1.0
    %v2585 = vadd.f32 %v2505, 1.0
    %v2586 = vadd.f32 %v2507, 1.0
    %v2587 = vadd.f32 %v2509, 1.0
    %v2588 = vadd.f32 %v2511, 1.0
    %v2589 = vadd.f32 %v2513, 1.0
    %v2590 = vadd.f32 %v2515, 1.0
    %v2591 = vadd.f32 %v2517, 1.0
    %v2592 = vadd.f32 %v2519, 1.0
    %v2593 = vadd.f32 %v2521, 1.0
    %v2594 = vadd.f32 %v2523, 1.0
    %v2595 = vadd.f32 %v2525, 1.0
    %v2596 = vadd.f32 %v2527, 1.0
    %v2597 = vadd.f32 %v2529, 1.0
    %v2598 = vadd.f32 %v2531, 1.0
    %v2599 = vadd.f32 %v2533, 1.0
    %v2600 = vadd.f32 %v2535, 1.0
    %v2601 = vadd.f32 %v2537, 1.0
    %v2602 = vrcp.pop %v2538
    %v2603 = vmul.f32 1.0, %v2602
    %v2604 = vrcp.pop %v2539
    %v2605 = vmul.f32 1.0, %v2604
    %v2606 = vrcp.pop %v2540
    %v2607 = vmul.f32 1.0, %v2606
    %v2608 = vrcp.pop %v2541
    %v2609 = vmul.f32 1.0, %v2608
    %v2610 = vrcp.pop %v2542
    %v2611 = vmul.f32 1.0, %v2610
    %v2612 = vrcp.pop %v2543
    %v2613 = vmul.f32 1.0, %v2612
    %v2614 = vrcp.pop %v2544
    %v2615 = vmul.f32 1.0, %v2614
    %v2616 = vrcp.pop %v2545
    %v2617 = vmul.f32 1.0, %v2616
    %v2618 = vrcp.pop %v2546
    %v2619 = vmul.f32 1.0, %v2618
    %v2620 = vrcp.pop %v2547
    %v2621 = vmul.f32 1.0, %v2620
    %v2622 = vrcp.pop %v2548
    %v2623 = vmul.f32 1.0, %v2622
    %v2624 = vrcp.pop %v2549
    %v2625 = vmul.f32 1.0, %v2624
    %v2626 = vrcp.pop %v2550
    %v2627 = vmul.f32 1.0, %v2626
    %v2628 = vrcp.pop %v2551
    %v2629 = vmul.f32 1.0, %v2628
    %v2630 = vrcp.pop %v2552
    %v2631 = vmul.f32 1.0, %v2630
    %v2632 = vrcp.pop %v2553
    %v2633 = vmul.f32 1.0, %v2632
    %v2634 = vrcp.pop %v2554
    %v2635 = vmul.f32 1.0, %v2634
    %v2636 = vrcp.pop %v2555
    %v2637 = vmul.f32 1.0, %v2636
    %v2638 = vrcp.pop %v2556
    %v2639 = vmul.f32 1.0, %v2638
    %v2640 = vrcp.pop %v2557
    %v2641 = vmul.f32 1.0, %v2640
    %v2642 = vrcp.pop %v2558
    %v2643 = vmul.f32 1.0, %v2642
    %v2644 = vrcp.pop %v2559
    %v2645 = vmul.f32 1.0, %v2644
    %v2646 = vrcp.pop %v2560
    %v2647 = vmul.f32 1.0, %v2646
    %v2648 = vrcp.pop %v2561
    %v2649 = vmul.f32 1.0, %v2648
    %v2650 = vrcp.pop %v2562
    %v2651 = vmul.f32 1.0, %v2650
    %v2652 = vrcp.pop %v2563
    %v2653 = vmul.f32 1.0, %v2652
    %v2654 = vrcp.pop %v2564
    %v2655 = vmul.f32 1.0, %v2654
    %v2656 = vrcp.pop %v2565
    %v2657 = vmul.f32 1.0, %v2656
    %v2658 = vrcp.pop %v2566
    %v2659 = vmul.f32 1.0, %v2658
    %v2660 = vrcp.pop %v2567
    %v2661 = vmul.f32 1.0, %v2660
    %v2662 = vrcp.pop %v2568
    %v2663 = vmul.f32 1.0, %v2662
    %v2664 = vrcp.pop %v2569
    %v2665 = vmul.f32 1.0, %v2664
    %v2666 = vrcp.pop %v2570
    %v2667 = vmul.f32 1.0, %v2666
    %v2668 = vrcp.pop %v2571
    %v2669 = vmul.f32 1.0, %v2668
    %v2670 = vrcp.pop %v2572
    %v2671 = vmul.f32 1.0, %v2670
    %v2672 = vrcp.pop %v2573
    %v2673 = vmul.f32 1.0, %v2672
    %v2674 = vrcp.pop %v2574
    %v2675 = vmul.f32 1.0, %v2674
    %v2676 = vrcp.pop %v2575
    %v2677 = vmul.f32 1.0, %v2676
    %v2678 = vrcp.pop %v2576
    %v2679 = vmul.f32 1.0, %v2678
    %v2680 = vrcp.pop %v2577
    %v2681 = vmul.f32 1.0, %v2680
    %v2682 = vrcp.pop %v2578
    %v2683 = vmul.f32 1.0, %v2682
    %v2684 = vrcp.pop %v2579
    %v2685 = vmul.f32 1.0, %v2684
    %v2686 = vrcp.pop %v2580
    %v2687 = vmul.f32 1.0, %v2686
    %v2688 = vrcp.pop %v2581
    %v2689 = vmul.f32 1.0, %v2688
    %v2690 = vrcp.pop %v2582
    %v2691 = vmul.f32 1.0, %v2690
    %v2692 = vrcp.pop %v2583
    %v2693 = vmul.f32 1.0, %v2692
    %v2694 = vrcp.pop %v2584
    %v2695 = vmul.f32 1.0, %v2694
    %v2696 = vrcp.pop %v2585
    %v2697 = vmul.f32 1.0, %v2696
    %v2698 = vrcp.pop %v2586
    %v2699 = vmul.f32 1.0, %v2698
    %v2700 = vrcp.pop %v2587
    %v2701 = vmul.f32 1.0, %v2700
    %v2702 = vrcp.pop %v2588
    %v2703 = vmul.f32 1.0, %v2702
    %v2704 = vrcp.pop %v2589
    %v2705 = vmul.f32 1.0, %v2704
    %v2706 = vrcp.pop %v2590
    %v2707 = vmul.f32 1.0, %v2706
    %v2708 = vrcp.pop %v2591
    %v2709 = vmul.f32 1.0, %v2708
    %v2710 = vrcp.pop %v2592
    %v2711 = vmul.f32 1.0, %v2710
    %v2712 = vrcp.pop %v2593
    %v2713 = vmul.f32 1.0, %v2712
    %v2714 = vrcp.pop %v2594
    %v2715 = vmul.f32 1.0, %v2714
    %v2716 = vrcp.pop %v2595
    %v2717 = vmul.f32 1.0, %v2716
    %v2718 = vrcp.pop %v2596
    %v2719 = vmul.f32 1.0, %v2718
    %v2720 = vrcp.pop %v2597
    %v2721 = vmul.f32 1.0, %v2720
    %v2722 = vrcp.pop %v2598
    %v2723 = vmul.f32 1.0, %v2722
    %v2724 = vrcp.pop %v2599
    %v2725 = vmul.f32 1.0, %v2724
    %v2726 = vrcp.pop %v2600
    %v2727 = vmul.f32 1.0, %v2726
    %v2728 = vrcp.pop %v2601
    %v2729 = vmul.f32 1.0, %v2728
    %v2730 = vpack.c.bf16 %v2605, %v2603
    %v2731 = vpack.c.bf16 %v2609, %v2607
    %v2732 = vpack.c.bf16 %v2613, %v2611
    %v2733 = vpack.c.bf16 %v2617, %v2615
    %v2734 = vpack.c.bf16 %v2621, %v2619
    %v2735 = vpack.c.bf16 %v2625, %v2623
    %v2736 = vpack.c.bf16 %v2629, %v2627
    %v2737 = vpack.c.bf16 %v2633, %v2631
    %v2738 = vpack.c.bf16 %v2637, %v2635
    %v2739 = vpack.c.bf16 %v2641, %v2639
    %v2740 = vpack.c.bf16 %v2645, %v2643
    %v2741 = vpack.c.bf16 %v2649, %v2647
    %v2742 = vpack.c.bf16 %v2653, %v2651
    %v2743 = vpack.c.bf16 %v2657, %v2655
    %v2744 = vpack.c.bf16 %v2661, %v2659
    %v2745 = vpack.c.bf16 %v2665, %v2663
    %v2746 = vpack.c.bf16 %v2669, %v2667
    %v2747 = vpack.c.bf16 %v2673, %v2671
    %v2748 = vpack.c.bf16 %v2677, %v2675
    %v2749 = vpack.c.bf16 %v2681, %v2679
    %v2750 = vpack.c.bf16 %v2685, %v2683
    %v2751 = vpack.c.bf16 %v2689, %v2687
    %v2752 = vpack.c.bf16 %v2693, %v2691
    %v2753 = vpack.c.bf16 %v2697, %v2695
    %v2754 = vpack.c.bf16 %v2701, %v2699
    %v2755 = vpack.c.bf16 %v2705, %v2703
    %v2756 = vpack.c.bf16 %v2709, %v2707
    %v2757 = vpack.c.bf16 %v2713, %v2711
    %v2758 = vpack.c.bf16 %v2717, %v2715
    %v2759 = vpack.c.bf16 %v2721, %v2719
    %v2760 = vpack.c.bf16 %v2725, %v2723
    %v2761 = vpack.c.bf16 %v2729, %v2727
    %v2762 = vld [vmem:[%s3] sm:$0xf]
    %v2763 = vld [vmem:[%s3 + $0x4] sm:$0xf]
    %v2764 = vld [vmem:[%s3 + $0x8] sm:$0xf]
    %v2765 = vld [vmem:[%s3 + $0xc] sm:$0xf]
    %v2766 = vld [vmem:[%s3 + $0x10] sm:$0xf]
    %v2767 = vld [vmem:[%s3 + $0x14] sm:$0xf]
    %v2768 = vld [vmem:[%s3 + $0x18] sm:$0xf]
    %v2769 = vld [vmem:[%s3 + $0x1c] sm:$0xf]
    %v2770 = vld [vmem:[%s3 + $0x20] sm:$0xf]
    %v2771 = vld [vmem:[%s3 + $0x24] sm:$0xf]
    %v2772 = vld [vmem:[%s3 + $0x28] sm:$0xf]
    %v2773 = vld [vmem:[%s3 + $0x2c] sm:$0xf]
    %v2774 = vld [vmem:[%s3 + $0x30] sm:$0xf]
    %v2775 = vld [vmem:[%s3 + $0x34] sm:$0xf]
    %v2776 = vld [vmem:[%s3 + $0x38] sm:$0xf]
    %v2777 = vld [vmem:[%s3 + $0x3c] sm:$0xf]
    %v2778 = vld [vmem:[%s4] sm:$0x1]
    %v2780 = vlaneseq
    %v2781 = vshrl.u32 %v2780, 7
    %v2782 = vsub.s32 0, %v2781
    %v2783 = vrot.slane %v2778, %v2782
    %v2801 = vunpack.c.l.b16 %v2762
    %v2802 = vunpack.c.l.b16 %v2763
    %v2803 = vunpack.c.l.b16 %v2764
    %v2804 = vunpack.c.l.b16 %v2765
    %v2805 = vunpack.c.l.b16 %v2766
    %v2806 = vunpack.c.l.b16 %v2767
    %v2807 = vunpack.c.l.b16 %v2768
    %v2808 = vunpack.c.l.b16 %v2769
    %v2809 = vunpack.c.l.b16 %v2770
    %v2810 = vunpack.c.l.b16 %v2771
    %v2811 = vunpack.c.l.b16 %v2772
    %v2812 = vunpack.c.l.b16 %v2773
    %v2813 = vunpack.c.l.b16 %v2774
    %v2814 = vunpack.c.l.b16 %v2775
    %v2815 = vunpack.c.l.b16 %v2776
    %v2816 = vunpack.c.l.b16 %v2777
    %v2817 = vpack.c.b16 %v2802, %v2801
    %v2818 = vpack.c.b16 %v2804, %v2803
    %v2819 = vpack.c.b16 %v2806, %v2805
    %v2820 = vpack.c.b16 %v2808, %v2807
    %v2821 = vpack.c.b16 %v2810, %v2809
    %v2822 = vpack.c.b16 %v2812, %v2811
    %v2823 = vpack.c.b16 %v2814, %v2813
    %v2824 = vpack.c.b16 %v2816, %v2815
    %2833 = vmatprep.subr.bf16.mxu0 0
    %2834 = vmatpush1.bf16.msra.mxu0 %v2824
    %2835 = vmatprep.subr.bf16.mxu0 0
    %2836 = vmatpush1.bf16.msra.mxu0 %v2823
    %2837 = vmatprep.subr.bf16.mxu0 0
    %2838 = vmatpush1.bf16.msra.mxu0 %v2822
    %2839 = vmatprep.subr.bf16.mxu0 0
    %2840 = vmatpush1.bf16.msra.mxu0 %v2821
    %2841 = vmatprep.subr.bf16.mxu0 0
    %2842 = vmatpush1.bf16.msra.mxu0 %v2820
    %2843 = vmatprep.subr.bf16.mxu0 0
    %2844 = vmatpush1.bf16.msra.mxu0 %v2819
    %2845 = vmatprep.subr.bf16.mxu0 0
    %2846 = vmatpush1.bf16.msra.mxu0 %v2818
    %2847 = vmatprep.subr.bf16.mxu0 0
    %2848 = vmatpush1.bf16.msra.mxu0 %v2817
    %2849 = vmatprep.subr.bf16.mxu0 0
    %2850 = vmatpush2.bf16.msra.mxu0 0
    %2851 = vmatprep.subr.bf16.mxu0 0
    %2852 = vmatpush2.bf16.msra.mxu0 0
    %2853 = vmatprep.subr.bf16.mxu0 0
    %2854 = vmatpush2.bf16.msra.mxu0 0
    %2855 = vmatprep.subr.bf16.mxu0 0
    %2856 = vmatpush2.bf16.msra.mxu0 0
    %2857 = vmatprep.subr.bf16.mxu0 0
    %2858 = vmatpush2.bf16.msra.mxu0 0
    %2859 = vmatprep.subr.bf16.mxu0 0
    %2860 = vmatpush2.bf16.msra.mxu0 0
    %2861 = vmatprep.subr.bf16.mxu0 0
    %2862 = vmatpush2.bf16.msra.mxu0 0
    %2863 = vmatprep.subr.bf16.mxu0 0
    %2864 = vmatpush2.bf16.msra.mxu0 0
    %2865 = vmatprep.mubr.bf16.mxu0 0
    %2866 = vmatmul.mubr.bf16.gmra.mxu0 %v2730
    %v2867 = vpop.f32.mrf.mxu0
    %v2868 = vadd.f32 %v2783, %v2867
    %v2869 = vpop.f32.mrf.mxu0
    %v2870 = vpop.f32.mrf.mxu0
    %v2871 = vadd.f32 %v2783, %v2870
    %v2872 = vpop.f32.mrf.mxu0
    %2873 = vmatprep.mubr.bf16.mxu0 0
    %2874 = vmatmul.mubr.bf16.gmra.mxu0 %v2731
    %v2875 = vpop.f32.mrf.mxu0
    %v2876 = vadd.f32 %v2783, %v2875
    %v2877 = vpop.f32.mrf.mxu0
    %v2878 = vpop.f32.mrf.mxu0
    %v2879 = vadd.f32 %v2783, %v2878
    %v2880 = vpop.f32.mrf.mxu0
    %2881 = vmatprep.mubr.bf16.mxu0 0
    %2882 = vmatmul.mubr.bf16.gmra.mxu0 %v2732
    %v2883 = vpop.f32.mrf.mxu0
    %v2884 = vadd.f32 %v2783, %v2883
    %v2885 = vpop.f32.mrf.mxu0
    %v2886 = vpop.f32.mrf.mxu0
    %v2887 = vadd.f32 %v2783, %v2886
    %v2888 = vpop.f32.mrf.mxu0
    %2889 = vmatprep.mubr.bf16.mxu0 0
    %2890 = vmatmul.mubr.bf16.gmra.mxu0 %v2733
    %v2891 = vpop.f32.mrf.mxu0
    %v2892 = vadd.f32 %v2783, %v2891
    %v2893 = vpop.f32.mrf.mxu0
    %v2894 = vpop.f32.mrf.mxu0
    %v2895 = vadd.f32 %v2783, %v2894
    %v2896 = vpop.f32.mrf.mxu0
    %2897 = vmatprep.mubr.bf16.mxu0 0
    %2898 = vmatmul.mubr.bf16.gmra.mxu0 %v2734
    %v2899 = vpop.f32.mrf.mxu0
    %v2900 = vadd.f32 %v2783, %v2899
    %v2901 = vpop.f32.mrf.mxu0
    %v2902 = vpop.f32.mrf.mxu0
    %v2903 = vadd.f32 %v2783, %v2902
    %v2904 = vpop.f32.mrf.mxu0
    %2905 = vmatprep.mubr.bf16.mxu0 0
    %2906 = vmatmul.mubr.bf16.gmra.mxu0 %v2735
    %v2907 = vpop.f32.mrf.mxu0
    %v2908 = vadd.f32 %v2783, %v2907
    %v2909 = vpop.f32.mrf.mxu0
    %v2910 = vpop.f32.mrf.mxu0
    %v2911 = vadd.f32 %v2783, %v2910
    %v2912 = vpop.f32.mrf.mxu0
    %2913 = vmatprep.mubr.bf16.mxu0 0
    %2914 = vmatmul.mubr.bf16.gmra.mxu0 %v2736
    %v2915 = vpop.f32.mrf.mxu0
    %v2916 = vadd.f32 %v2783, %v2915
    %v2917 = vpop.f32.mrf.mxu0
    %v2918 = vpop.f32.mrf.mxu0
    %v2919 = vadd.f32 %v2783, %v2918
    %v2920 = vpop.f32.mrf.mxu0
    %2921 = vmatprep.mubr.bf16.mxu0 0
    %2922 = vmatmul.mubr.bf16.gmra.mxu0 %v2737
    %v2923 = vpop.f32.mrf.mxu0
    %v2924 = vadd.f32 %v2783, %v2923
    %v2925 = vpop.f32.mrf.mxu0
    %v2926 = vpop.f32.mrf.mxu0
    %v2927 = vadd.f32 %v2783, %v2926
    %v2928 = vpop.f32.mrf.mxu0
    %2929 = vmatprep.mubr.bf16.mxu0 0
    %2930 = vmatmul.mubr.bf16.gmra.mxu0 %v2738
    %v2931 = vpop.f32.mrf.mxu0
    %v2932 = vadd.f32 %v2783, %v2931
    %v2933 = vpop.f32.mrf.mxu0
    %v2934 = vpop.f32.mrf.mxu0
    %v2935 = vadd.f32 %v2783, %v2934
    %v2936 = vpop.f32.mrf.mxu0
    %2937 = vmatprep.mubr.bf16.mxu0 0
    %2938 = vmatmul.mubr.bf16.gmra.mxu0 %v2739
    %v2939 = vpop.f32.mrf.mxu0
    %v2940 = vadd.f32 %v2783, %v2939
    %v2941 = vpop.f32.mrf.mxu0
    %v2942 = vpop.f32.mrf.mxu0
    %v2943 = vadd.f32 %v2783, %v2942
    %v2944 = vpop.f32.mrf.mxu0
    %2945 = vmatprep.mubr.bf16.mxu0 0
    %2946 = vmatmul.mubr.bf16.gmra.mxu0 %v2740
    %v2947 = vpop.f32.mrf.mxu0
    %v2948 = vadd.f32 %v2783, %v2947
    %v2949 = vpop.f32.mrf.mxu0
    %v2950 = vpop.f32.mrf.mxu0
    %v2951 = vadd.f32 %v2783, %v2950
    %v2952 = vpop.f32.mrf.mxu0
    %2953 = vmatprep.mubr.bf16.mxu0 0
    %2954 = vmatmul.mubr.bf16.gmra.mxu0 %v2741
    %v2955 = vpop.f32.mrf.mxu0
    %v2956 = vadd.f32 %v2783, %v2955
    %v2957 = vpop.f32.mrf.mxu0
    %v2958 = vpop.f32.mrf.mxu0
    %v2959 = vadd.f32 %v2783, %v2958
    %v2960 = vpop.f32.mrf.mxu0
    %2961 = vmatprep.mubr.bf16.mxu0 0
    %2962 = vmatmul.mubr.bf16.gmra.mxu0 %v2742
    %v2963 = vpop.f32.mrf.mxu0
    %v2964 = vadd.f32 %v2783, %v2963
    %v2965 = vpop.f32.mrf.mxu0
    %v2966 = vpop.f32.mrf.mxu0
    %v2967 = vadd.f32 %v2783, %v2966
    %v2968 = vpop.f32.mrf.mxu0
    %2969 = vmatprep.mubr.bf16.mxu0 0
    %2970 = vmatmul.mubr.bf16.gmra.mxu0 %v2743
    %v2971 = vpop.f32.mrf.mxu0
    %v2972 = vadd.f32 %v2783, %v2971
    %v2973 = vpop.f32.mrf.mxu0
    %v2974 = vpop.f32.mrf.mxu0
    %v2975 = vadd.f32 %v2783, %v2974
    %v2976 = vpop.f32.mrf.mxu0
    %2977 = vmatprep.mubr.bf16.mxu0 0
    %2978 = vmatmul.mubr.bf16.gmra.mxu0 %v2744
    %v2979 = vpop.f32.mrf.mxu0
    %v2980 = vadd.f32 %v2783, %v2979
    %v2981 = vpop.f32.mrf.mxu0
    %v2982 = vpop.f32.mrf.mxu0
    %v2983 = vadd.f32 %v2783, %v2982
    %v2984 = vpop.f32.mrf.mxu0
    %2985 = vmatprep.mubr.bf16.mxu0 0
    %2986 = vmatmul.mubr.bf16.gmra.mxu0 %v2745
    %v2987 = vpop.f32.mrf.mxu0
    %v2988 = vadd.f32 %v2783, %v2987
    %v2989 = vpop.f32.mrf.mxu0
    %v2990 = vpop.f32.mrf.mxu0
    %v2991 = vadd.f32 %v2783, %v2990
    %v2992 = vpop.f32.mrf.mxu0
    %2993 = vmatprep.mubr.bf16.mxu0 0
    %2994 = vmatmul.mubr.bf16.gmra.mxu0 %v2746
    %v2995 = vpop.f32.mrf.mxu0
    %v2996 = vadd.f32 %v2783, %v2995
    %v2997 = vpop.f32.mrf.mxu0
    %v2998 = vpop.f32.mrf.mxu0
    %v2999 = vadd.f32 %v2783, %v2998
    %v3000 = vpop.f32.mrf.mxu0
    %3001 = vmatprep.mubr.bf16.mxu0 0
    %3002 = vmatmul.mubr.bf16.gmra.mxu0 %v2747
    %v3003 = vpop.f32.mrf.mxu0
    %v3004 = vadd.f32 %v2783, %v3003
    %v3005 = vpop.f32.mrf.mxu0
    %v3006 = vpop.f32.mrf.mxu0
    %v3007 = vadd.f32 %v2783, %v3006
    %v3008 = vpop.f32.mrf.mxu0
    %3009 = vmatprep.mubr.bf16.mxu0 0
    %3010 = vmatmul.mubr.bf16.gmra.mxu0 %v2748
    %v3011 = vpop.f32.mrf.mxu0
    %v3012 = vadd.f32 %v2783, %v3011
    %v3013 = vpop.f32.mrf.mxu0
    %v3014 = vpop.f32.mrf.mxu0
    %v3015 = vadd.f32 %v2783, %v3014
    %v3016 = vpop.f32.mrf.mxu0
    %3017 = vmatprep.mubr.bf16.mxu0 0
    %3018 = vmatmul.mubr.bf16.gmra.mxu0 %v2749
    %v3019 = vpop.f32.mrf.mxu0
    %v3020 = vadd.f32 %v2783, %v3019
    %v3021 = vpop.f32.mrf.mxu0
    %v3022 = vpop.f32.mrf.mxu0
    %v3023 = vadd.f32 %v2783, %v3022
    %v3024 = vpop.f32.mrf.mxu0
    %3025 = vmatprep.mubr.bf16.mxu0 0
    %3026 = vmatmul.mubr.bf16.gmra.mxu0 %v2750
    %v3027 = vpop.f32.mrf.mxu0
    %v3028 = vadd.f32 %v2783, %v3027
    %v3029 = vpop.f32.mrf.mxu0
    %v3030 = vpop.f32.mrf.mxu0
    %v3031 = vadd.f32 %v2783, %v3030
    %v3032 = vpop.f32.mrf.mxu0
    %3033 = vmatprep.mubr.bf16.mxu0 0
    %3034 = vmatmul.mubr.bf16.gmra.mxu0 %v2751
    %v3035 = vpop.f32.mrf.mxu0
    %v3036 = vadd.f32 %v2783, %v3035
    %v3037 = vpop.f32.mrf.mxu0
    %v3038 = vpop.f32.mrf.mxu0
    %v3039 = vadd.f32 %v2783, %v3038
    %v3040 = vpop.f32.mrf.mxu0
    %3041 = vmatprep.mubr.bf16.mxu0 0
    %3042 = vmatmul.mubr.bf16.gmra.mxu0 %v2752
    %v3043 = vpop.f32.mrf.mxu0
    %v3044 = vadd.f32 %v2783, %v3043
    %v3045 = vpop.f32.mrf.mxu0
    %v3046 = vpop.f32.mrf.mxu0
    %v3047 = vadd.f32 %v2783, %v3046
    %v3048 = vpop.f32.mrf.mxu0
    %3049 = vmatprep.mubr.bf16.mxu0 0
    %3050 = vmatmul.mubr.bf16.gmra.mxu0 %v2753
    %v3051 = vpop.f32.mrf.mxu0
    %v3052 = vadd.f32 %v2783, %v3051
    %v3053 = vpop.f32.mrf.mxu0
    %v3054 = vpop.f32.mrf.mxu0
    %v3055 = vadd.f32 %v2783, %v3054
    %v3056 = vpop.f32.mrf.mxu0
    %3057 = vmatprep.mubr.bf16.mxu0 0
    %3058 = vmatmul.mubr.bf16.gmra.mxu0 %v2754
    %v3059 = vpop.f32.mrf.mxu0
    %v3060 = vadd.f32 %v2783, %v3059
    %v3061 = vpop.f32.mrf.mxu0
    %v3062 = vpop.f32.mrf.mxu0
    %v3063 = vadd.f32 %v2783, %v3062
    %v3064 = vpop.f32.mrf.mxu0
    %3065 = vmatprep.mubr.bf16.mxu0 0
    %3066 = vmatmul.mubr.bf16.gmra.mxu0 %v2755
    %v3067 = vpop.f32.mrf.mxu0
    %v3068 = vadd.f32 %v2783, %v3067
    %v3069 = vpop.f32.mrf.mxu0
    %v3070 = vpop.f32.mrf.mxu0
    %v3071 = vadd.f32 %v2783, %v3070
    %v3072 = vpop.f32.mrf.mxu0
    %3073 = vmatprep.mubr.bf16.mxu0 0
    %3074 = vmatmul.mubr.bf16.gmra.mxu0 %v2756
    %v3075 = vpop.f32.mrf.mxu0
    %v3076 = vadd.f32 %v2783, %v3075
    %v3077 = vpop.f32.mrf.mxu0
    %v3078 = vpop.f32.mrf.mxu0
    %v3079 = vadd.f32 %v2783, %v3078
    %v3080 = vpop.f32.mrf.mxu0
    %3081 = vmatprep.mubr.bf16.mxu0 0
    %3082 = vmatmul.mubr.bf16.gmra.mxu0 %v2757
    %v3083 = vpop.f32.mrf.mxu0
    %v3084 = vadd.f32 %v2783, %v3083
    %v3085 = vpop.f32.mrf.mxu0
    %v3086 = vpop.f32.mrf.mxu0
    %v3087 = vadd.f32 %v2783, %v3086
    %v3088 = vpop.f32.mrf.mxu0
    %3089 = vmatprep.mubr.bf16.mxu0 0
    %3090 = vmatmul.mubr.bf16.gmra.mxu0 %v2758
    %v3091 = vpop.f32.mrf.mxu0
    %v3092 = vadd.f32 %v2783, %v3091
    %v3093 = vpop.f32.mrf.mxu0
    %v3094 = vpop.f32.mrf.mxu0
    %v3095 = vadd.f32 %v2783, %v3094
    %v3096 = vpop.f32.mrf.mxu0
    %3097 = vmatprep.mubr.bf16.mxu0 0
    %3098 = vmatmul.mubr.bf16.gmra.mxu0 %v2759
    %v3099 = vpop.f32.mrf.mxu0
    %v3100 = vadd.f32 %v2783, %v3099
    %v3101 = vpop.f32.mrf.mxu0
    %v3102 = vpop.f32.mrf.mxu0
    %v3103 = vadd.f32 %v2783, %v3102
    %v3104 = vpop.f32.mrf.mxu0
    %3105 = vmatprep.mubr.bf16.mxu0 0
    %3106 = vmatmul.mubr.bf16.gmra.mxu0 %v2760
    %v3107 = vpop.f32.mrf.mxu0
    %v3108 = vadd.f32 %v2783, %v3107
    %v3109 = vpop.f32.mrf.mxu0
    %v3110 = vpop.f32.mrf.mxu0
    %v3111 = vadd.f32 %v2783, %v3110
    %v3112 = vpop.f32.mrf.mxu0
    %3113 = vmatprep.mubr.bf16.mxu0 0
    %3114 = vmatmul.mubr.bf16.gmra.mxu0 %v2761
    %v3115 = vpop.f32.mrf.mxu0
    %v3116 = vadd.f32 %v2783, %v3115
    %v3117 = vpop.f32.mrf.mxu0
    %v3118 = vpop.f32.mrf.mxu0
    %v3119 = vadd.f32 %v2783, %v3118
    %v3120 = vpop.f32.mrf.mxu0
    %3121 = vdwg.mxu0
    %3122 = vst [vmem:[#allocation2] sm:$0xff] %v2868
    %3123 = vst [vmem:[#allocation2 + $0x8] sm:$0xff] %v2871
    %3124 = vst [vmem:[#allocation2 + $0x10] sm:$0xff] %v2876
    %3125 = vst [vmem:[#allocation2 + $0x18] sm:$0xff] %v2879
    %3126 = vst [vmem:[#allocation2 + $0x20] sm:$0xff] %v2884
    %3127 = vst [vmem:[#allocation2 + $0x28] sm:$0xff] %v2887
    %3128 = vst [vmem:[#allocation2 + $0x30] sm:$0xff] %v2892
    %3129 = vst [vmem:[#allocation2 + $0x38] sm:$0xff] %v2895
    %3130 = vst [vmem:[#allocation2 + $0x40] sm:$0xff] %v2900
    %3131 = vst [vmem:[#allocation2 + $0x48] sm:$0xff] %v2903
    %3132 = vst [vmem:[#allocation2 + $0x50] sm:$0xff] %v2908
    %3133 = vst [vmem:[#allocation2 + $0x58] sm:$0xff] %v2911
    %3134 = vst [vmem:[#allocation2 + $0x60] sm:$0xff] %v2916
    %3135 = vst [vmem:[#allocation2 + $0x68] sm:$0xff] %v2919
    %3136 = vst [vmem:[#allocation2 + $0x70] sm:$0xff] %v2924
    %3137 = vst [vmem:[#allocation2 + $0x78] sm:$0xff] %v2927
    %3138 = vst [vmem:[#allocation2 + $0x80] sm:$0xff] %v2932
    %3139 = vst [vmem:[#allocation2 + $0x88] sm:$0xff] %v2935
    %3140 = vst [vmem:[#allocation2 + $0x90] sm:$0xff] %v2940
    %3141 = vst [vmem:[#allocation2 + $0x98] sm:$0xff] %v2943
    %3142 = vst [vmem:[#allocation2 + $0xa0] sm:$0xff] %v2948
    %3143 = vst [vmem:[#allocation2 + $0xa8] sm:$0xff] %v2951
    %3144 = vst [vmem:[#allocation2 + $0xb0] sm:$0xff] %v2956
    %3145 = vst [vmem:[#allocation2 + $0xb8] sm:$0xff] %v2959
    %3146 = vst [vmem:[#allocation2 + $0xc0] sm:$0xff] %v2964
    %3147 = vst [vmem:[#allocation2 + $0xc8] sm:$0xff] %v2967
    %3148 = vst [vmem:[#allocation2 + $0xd0] sm:$0xff] %v2972
    %3149 = vst [vmem:[#allocation2 + $0xd8] sm:$0xff] %v2975
    %3150 = vst [vmem:[#allocation2 + $0xe0] sm:$0xff] %v2980
    %3151 = vst [vmem:[#allocation2 + $0xe8] sm:$0xff] %v2983
    %3152 = vst [vmem:[#allocation2 + $0xf0] sm:$0xff] %v2988
    %3153 = vst [vmem:[#allocation2 + $0xf8] sm:$0xff] %v2991
    %3154 = vst [vmem:[#allocation2 + $0x100] sm:$0xff] %v2996
    %3155 = vst [vmem:[#allocation2 + $0x108] sm:$0xff] %v2999
    %3156 = vst [vmem:[#allocation2 + $0x110] sm:$0xff] %v3004
    %3157 = vst [vmem:[#allocation2 + $0x118] sm:$0xff] %v3007
    %3158 = vst [vmem:[#allocation2 + $0x120] sm:$0xff] %v3012
    %3159 = vst [vmem:[#allocation2 + $0x128] sm:$0xff] %v3015
    %3160 = vst [vmem:[#allocation2 + $0x130] sm:$0xff] %v3020
    %3161 = vst [vmem:[#allocation2 + $0x138] sm:$0xff] %v3023
    %3162 = vst [vmem:[#allocation2 + $0x140] sm:$0xff] %v3028
    %3163 = vst [vmem:[#allocation2 + $0x148] sm:$0xff] %v3031
    %3164 = vst [vmem:[#allocation2 + $0x150] sm:$0xff] %v3036
    %3165 = vst [vmem:[#allocation2 + $0x158] sm:$0xff] %v3039
    %3166 = vst [vmem:[#allocation2 + $0x160] sm:$0xff] %v3044
    %3167 = vst [vmem:[#allocation2 + $0x168] sm:$0xff] %v3047
    %3168 = vst [vmem:[#allocation2 + $0x170] sm:$0xff] %v3052
    %3169 = vst [vmem:[#allocation2 + $0x178] sm:$0xff] %v3055
    %3170 = vst [vmem:[#allocation2 + $0x180] sm:$0xff] %v3060
    %3171 = vst [vmem:[#allocation2 + $0x188] sm:$0xff] %v3063
    %3172 = vst [vmem:[#allocation2 + $0x190] sm:$0xff] %v3068
    %3173 = vst [vmem:[#allocation2 + $0x198] sm:$0xff] %v3071
    %3174 = vst [vmem:[#allocation2 + $0x1a0] sm:$0xff] %v3076
    %3175 = vst [vmem:[#allocation2 + $0x1a8] sm:$0xff] %v3079
    %3176 = vst [vmem:[#allocation2 + $0x1b0] sm:$0xff] %v3084
    %3177 = vst [vmem:[#allocation2 + $0x1b8] sm:$0xff] %v3087
    %3178 = vst [vmem:[#allocation2 + $0x1c0] sm:$0xff] %v3092
    %3179 = vst [vmem:[#allocation2 + $0x1c8] sm:$0xff] %v3095
    %3180 = vst [vmem:[#allocation2 + $0x1d0] sm:$0xff] %v3100
    %3181 = vst [vmem:[#allocation2 + $0x1d8] sm:$0xff] %v3103
    %3182 = vst [vmem:[#allocation2 + $0x1e0] sm:$0xff] %v3108
    %3183 = vst [vmem:[#allocation2 + $0x1e8] sm:$0xff] %v3111
    %3184 = vst [vmem:[#allocation2 + $0x1f0] sm:$0xff] %v3116
    %3185 = vst [vmem:[#allocation2 + $0x1f8] sm:$0xff] %v3119
    // Predicated region
    $region22: #{tpu_custom_call.1} parent=1 // pred_check
      _
    $region23: #{tpu_custom_call.1} parent=1 // pred_check_branch
      %3187 = sbr.rel (0) target = $region25
    $region24: #{tpu_custom_call.1} parent=1 // pred_region
      %s3189 = ssub.s32 8192, 8192
      %3190 = vsyncadd [#allocation3], %s3189
      %s3191 = sshll.u32 [#allocation2], 4
      %s3192 = int_to_ptr.vmem [resolvable:$true] %s3191
      %3197 = dma.vmem_to_hbm [thread:$0]  %s3192, 8192, %s5, [#allocation3], 128, 128, 8
    $region25: #{tpu_custom_call.1} parent=1 // pred_fallthru
      _
    // Predicated region
    $region26: #{tpu_custom_call.1} parent=1 // pred_check
      _
    $region27: #{tpu_custom_call.1} parent=1 // pred_check_branch
      %3199 = sbr.rel (0) target = $region29
    $region28: #{tpu_custom_call.1} parent=1 // pred_region
      %3200 = dma.done [#allocation3], 8192
    $region29: #{tpu_custom_call.1} parent=1 // pred_fallthru
      _
    %3201 = vsyncpa [#allocation3], 1

</llo_original>
